<compile_context>
chip_gen: v6e
topology: v6e:2x2x1
jax: 0.10.0
libtpu: 0.0.40
codegen_flags: <defaults>
</compile_context>

<pallas_src>
import functools

import jax
import jax.numpy as jnp
from jax.experimental import pallas as pl
from jax.experimental.pallas import tpu as pltpu


def _round_up(v, m):
    return (v + m - 1) // m * m


def encoder_lstm_layer_dims(n_features, embedding_dim, n_layers):
    """(in_dim, hidden_dim) per LSTM layer, first to last."""
    hidden_dim = 2 * embedding_dim
    dims = [(n_features, hidden_dim)]
    dims += [(hidden_dim, hidden_dim)] * (n_layers - 2)
    dims += [(hidden_dim, embedding_dim)]
    return tuple(dims)


def _make_encoder_lstm_kernel(layer_dims, seq_len, batch):
    """Whole LSTM stack in one kernel invocation.

    Input x_ref is TIME-MAJOR (T*B, n_features) so every time step is a
    contiguous row block; seq_ref is a (T*B, hidden_dim) VMEM scratch holding
    the previous layer's output sequence (time-major as well).
    """
    num_layers = len(layer_dims)

    def kernel(x_ref, w_ref, b_ref, o_ref, seq_ref):
        h = None
        for l, (din, dh) in enumerate(layer_dims):
            last = l == num_layers - 1

            # Static sub-views of the packed parameter buffers (zero runtime
            # cost, hoisted out of the time loop).
            w_ih = w_ref[2 * l, :din, :4 * dh]        # (din, 4H), cols [i,f,o,g]
            w_hh = w_ref[2 * l + 1, :dh, :4 * dh]     # (H,   4H)
            b = b_ref[l, :, :4 * dh]                  # (1,   4H)

            # Layer input sequence (time-major, (T*B, din)).
            if l == 0:
                layer_in = x_ref[...]
            else:
                layer_in = seq_ref[:, :din]

            # Hoisted input projection + bias: ONE matmul per layer, outside
            # the serial recurrence.
            pre = jnp.dot(layer_in, w_ih,
                          preferred_element_type=jnp.float32) + b   # (T*B, 4H)

            h = jnp.zeros((batch, dh), jnp.float32)
            c = jnp.zeros((batch, dh), jnp.float32)

            # Short statically-known time loop: fully unrolled (T=8 here).
            # TODO(synk): lax.fori_loop + pl.ds for long sequences.
            for t in range(seq_len):
                z = pre[t * batch:(t + 1) * batch, :] + jnp.dot(
                    h, w_hh, preferred_element_type=jnp.float32)
                # gate columns packed [i, f, o, g]:
                #   one wide sigmoid over 3H lanes, one tanh over H lanes.
                sig = jax.nn.sigmoid(z[:, :3 * dh])
                i_g = sig[:, 0 * dh:1 * dh]
                f_g = sig[:, 1 * dh:2 * dh]
                o_g = sig[:, 2 * dh:3 * dh]
                g_g = jnp.tanh(z[:, 3 * dh:4 * dh])
                c = f_g * c + i_g * g_g
                h = o_g * jnp.tanh(c)
                if not last:
                    # Feed the next layer's hoisted matmul via VMEM scratch.
                    seq_ref[t * batch:(t + 1) * batch, :dh] = h

        o_ref[...] = h.astype(o_ref.dtype)

    return kernel


@functools.partial(jax.jit, static_argnames=("layer_dims", "to_unsqueeze"))
def encoder_lstm_forward(x, w_pack, b_pack, *, layer_dims, to_unsqueeze=False):
    """Full Encoder_LSTM forward in a single pallas_call.

    x       : (B, T, n_features)   (or (B, T) if to_unsqueeze=True)
    w_pack  : (2L, R_pad, C_pad)   packed [W_ih_l ; W_hh_l], gate cols [i,f,o,g]
    b_pack  : (L, 1, C_pad)        packed combined biases,   gate cols [i,f,o,g]
    returns : (B, embedding_dim)   final hidden state of the last layer
    """
    if to_unsqueeze:
        x = x[..., None]
    x = x.astype(jnp.float32)
    B, T, NF = x.shape
    emb = layer_dims[-1][1]
    hidden = layer_dims[0][1]

    # Time-major flatten so each time step is a contiguous (B, NF) row block
    # and the per-layer input projection is one big (T*B, din) matmul.
    x_tm = jnp.transpose(x, (1, 0, 2)).reshape(T * B, NF)

    kernel = _make_encoder_lstm_kernel(layer_dims, T, B)

    # Advisory cost estimate (total work is unchanged by the hoisting).
    flops = 0
    transcendentals = 0
    for din, dh in layer_dims:
        flops += 2 * B * T * (din + dh) * 4 * dh   # two matmuls per cell step
        flops += 10 * B * T * dh                   # gate elementwise math
        transcendentals += 5 * B * T * dh          # 3 sigmoid + 2 tanh per cell
    bytes_accessed = 4 * (x_tm.size + w_pack.size + b_pack.size + B * emb)

    vmem = pl.BlockSpec(memory_space=pltpu.MemorySpace.VMEM)
    return pl.pallas_call(
        kernel,
        out_shape=jax.ShapeDtypeStruct((B, emb), jnp.float32),
        in_specs=[vmem, vmem, vmem],
        out_specs=vmem,
        scratch_shapes=[pltpu.VMEM((T * B, hidden), jnp.float32)],
        cost_estimate=pl.CostEstimate(flops=flops,
                                      transcendentals=transcendentals,
                                      bytes_accessed=bytes_accessed),
    )(x_tm, w_pack, b_pack)


def init_params(key, layer_dims):
    """Synthetic init with exact PyTorch LSTM param shapes/order:
    weight_ih (4H, din), weight_hh (4H, H), bias_ih/bias_hh (4H,), gates [i,f,g,o]."""
    params = []
    for (din, dh) in layer_dims:
        key, k1, k2, k3, k4 = jax.random.split(key, 5)
        bound = 1.0 / float(dh) ** 0.5
        params.append(dict(
            w_ih=jax.random.uniform(k1, (4 * dh, din), jnp.float32, -bound, bound),
            w_hh=jax.random.uniform(k2, (4 * dh, dh), jnp.float32, -bound, bound),
            b_ih=jax.random.uniform(k3, (4 * dh,), jnp.float32, -bound, bound),
            b_hh=jax.random.uniform(k4, (4 * dh,), jnp.float32, -bound, bound)))
    return params


def pack_params(layer_dims, params):
    """Pack all layers into 2 zero-padded buffers (3 kernel operands total).

    PyTorch layout (4H, in) with gate order [i,f,g,o] is transposed to
    (in, 4H) and the gate COLUMN groups are reordered to [i,f,o,g] so the
    kernel applies sigmoid once to the first 3H columns and tanh once to the
    last H columns.  Biases b_ih + b_hh are folded together.
    """
    L = len(layer_dims)
    r_pad = _round_up(max(max(din, dh) for din, dh in layer_dims), 8)
    c_pad = _round_up(max(4 * dh for _, dh in layer_dims), 128)
    w_pack = jnp.zeros((2 * L, r_pad, c_pad), jnp.float32)
    b_pack = jnp.zeros((L, 1, c_pad), jnp.float32)

    def _reorder_t(w):                       # (4H, X) [i,f,g,o] -> (X, 4H) [i,f,o,g]
        i, f, g, o = jnp.split(w, 4, axis=0)
        return jnp.concatenate([i, f, o, g], axis=0).T

    for l, ((din, dh), p) in enumerate(zip(layer_dims, params)):
        w_pack = w_pack.at[2 * l, :din, :4 * dh].set(_reorder_t(p["w_ih"]))
        w_pack = w_pack.at[2 * l + 1, :dh, :4 * dh].set(_reorder_t(p["w_hh"]))
        b = p["b_ih"] + p["b_hh"]
        bi, bf, bg, bo = jnp.split(b, 4)
        b_pack = b_pack.at[l, 0, :4 * dh].set(jnp.concatenate([bi, bf, bo, bg]))
    return w_pack, b_pack


def _reference_forward(x, layer_dims, params, to_unsqueeze=False):
    """Pure-JAX (non-Pallas) reference with PyTorch LSTM semantics/layout."""
    if to_unsqueeze:
        x = x[..., None]
    seq = x.astype(jnp.float32)
    B, T = seq.shape[0], seq.shape[1]
    h = None
    for (din, dh), p in zip(layer_dims, params):
        w_ih, w_hh = p["w_ih"].T, p["w_hh"].T          # (din,4H), (H,4H), [i,f,g,o]
        b = p["b_ih"] + p["b_hh"]
        h = jnp.zeros((B, dh), jnp.float32)
        c = jnp.zeros((B, dh), jnp.float32)
        outs = []
        for t in range(T):
            z = seq[:, t, :] @ w_ih + h @ w_hh + b
            i_g = jax.nn.sigmoid(z[:, 0 * dh:1 * dh])
            f_g = jax.nn.sigmoid(z[:, 1 * dh:2 * dh])
            g_g = jnp.tanh(z[:, 2 * dh:3 * dh])
            o_g = jax.nn.sigmoid(z[:, 3 * dh:4 * dh])
            c = f_g * c + i_g * g_g
            h = o_g * jnp.tanh(c)
            outs.append(h)
        seq = jnp.stack(outs, axis=1)
    return h


if __name__ == "__main__":
    # Small shapes consistent with the module:
    # batch=2, seq=8, n_features=4, embedding_dim=16 (hidden_dim=32), N=3 layers
    B, T, NF, EMB, N = 2, 8, 4, 16, 3

    key = jax.random.PRNGKey(0)
    kx, kp = jax.random.split(key)
    x = jax.random.normal(kx, (B, T, NF), jnp.float32)

    layer_dims = encoder_lstm_layer_dims(NF, EMB, N)
    params = init_params(kp, layer_dims)
    w_pack, b_pack = pack_params(layer_dims, params)

    out = encoder_lstm_forward(x, w_pack, b_pack, layer_dims=layer_dims)
    jax.block_until_ready(out)

    ref = _reference_forward(x, layer_dims, params)
    assert out.shape == (B, EMB), out.shape
    assert jnp.allclose(out, ref, atol=2e-4, rtol=2e-4), \
        float(jnp.max(jnp.abs(out - ref)))

    print("KERNEL_OK")
</pallas_src>

<mosaic_0001>
module attributes {stable_mosaic.version = 11 : i64} {
  func.func @kernel(%arg0: memref<16x4xf32, #tpu.memory_space<vmem>>, %arg1: memref<6x32x128xf32, #tpu.memory_space<vmem>>, %arg2: memref<3x1x128xf32, #tpu.memory_space<vmem>>, %arg3: memref<2x16xf32, #tpu.memory_space<vmem>>, %arg4: memref<16x32xf32, #tpu.memory_space<vmem>>) attributes {dimension_semantics = [], scalar_prefetch = 0 : i64, scratch_operands = 1 : i64, tpu.core_type = #tpu.core_type<tc>} {
    %c0 = arith.constant 0 : index
    %c0_0 = arith.constant 0 : index
    %c0_1 = arith.constant 0 : index
    %0 = vector.load %arg1[%c0, %c0_0, %c0_1] : memref<6x32x128xf32, #tpu.memory_space<vmem>>, vector<1x4x128xf32>
    %1 = vector.shape_cast %0 : vector<1x4x128xf32> to vector<4x128xf32>
    %c1 = arith.constant 1 : index
    %c0_2 = arith.constant 0 : index
    %c0_3 = arith.constant 0 : index
    %2 = vector.load %arg1[%c1, %c0_2, %c0_3] : memref<6x32x128xf32, #tpu.memory_space<vmem>>, vector<1x32x128xf32>
    %3 = vector.shape_cast %2 : vector<1x32x128xf32> to vector<32x128xf32>
    %c0_4 = arith.constant 0 : index
    %c0_5 = arith.constant 0 : index
    %c0_6 = arith.constant 0 : index
    %4 = vector.load %arg2[%c0_4, %c0_5, %c0_6] : memref<3x1x128xf32, #tpu.memory_space<vmem>>, vector<1x1x128xf32>
    %5 = vector.shape_cast %4 : vector<1x1x128xf32> to vector<1x128xf32>
    %c0_7 = arith.constant 0 : index
    %c0_8 = arith.constant 0 : index
    %6 = vector.load %arg0[%c0_7, %c0_8] : memref<16x4xf32, #tpu.memory_space<vmem>>, vector<16x4xf32>
    %cst = arith.constant dense<0.000000e+00> : vector<16x128xf32>
    %7 = tpu.matmul %6, %1, %cst {dimension_numbers = #tpu.dot_dimension_numbers<[1], [0], [0], [1], [0, 0, 1, 1], [], []>} : vector<16x4xf32>, vector<4x128xf32>, vector<16x128xf32> -> vector<16x128xf32>
    %8 = vector.broadcast %5 : vector<1x128xf32> to vector<16x128xf32>
    %9 = arith.addf %7, %8 : vector<16x128xf32>
    %cst_9 = arith.constant 0.000000e+00 : f32
    %10 = vector.broadcast %cst_9 : f32 to vector<2x32xf32>
    %cst_10 = arith.constant 0.000000e+00 : f32
    %11 = vector.broadcast %cst_10 : f32 to vector<2x32xf32>
    %12 = vector.extract_strided_slice %9 {offsets = [0, 0], sizes = [2, 128], strides = [1, 1]} : vector<16x128xf32> to vector<2x128xf32>
    %cst_11 = arith.constant dense<0.000000e+00> : vector<2x128xf32>
    %13 = tpu.matmul %10, %3, %cst_11 {dimension_numbers = #tpu.dot_dimension_numbers<[1], [0], [0], [1], [0, 0, 1, 1], [], []>} : vector<2x32xf32>, vector<32x128xf32>, vector<2x128xf32> -> vector<2x128xf32>
    %14 = arith.addf %12, %13 : vector<2x128xf32>
    %15 = vector.extract_strided_slice %14 {offsets = [0, 0], sizes = [2, 96], strides = [1, 1]} : vector<2x128xf32> to vector<2x96xf32>
    %16 = arith.negf %15 : vector<2x96xf32>
    %17 = math.exp %16 : vector<2x96xf32>
    %cst_12 = arith.constant 1.000000e+00 : f32
    %18 = vector.broadcast %cst_12 : f32 to vector<2x96xf32>
    %19 = arith.addf %18, %17 : vector<2x96xf32>
    %20 = arith.divf %18, %19 : vector<2x96xf32>
    %21 = vector.extract_strided_slice %20 {offsets = [0, 0], sizes = [2, 32], strides = [1, 1]} : vector<2x96xf32> to vector<2x32xf32>
    %22 = vector.extract_strided_slice %20 {offsets = [0, 32], sizes = [2, 32], strides = [1, 1]} : vector<2x96xf32> to vector<2x32xf32>
    %23 = vector.extract_strided_slice %20 {offsets = [0, 64], sizes = [2, 32], strides = [1, 1]} : vector<2x96xf32> to vector<2x32xf32>
    %24 = vector.extract_strided_slice %14 {offsets = [0, 96], sizes = [2, 32], strides = [1, 1]} : vector<2x128xf32> to vector<2x32xf32>
    %25 = math.tanh %24 : vector<2x32xf32>
    %26 = arith.mulf %22, %11 : vector<2x32xf32>
    %27 = arith.mulf %21, %25 : vector<2x32xf32>
    %28 = arith.addf %26, %27 : vector<2x32xf32>
    %29 = math.tanh %28 : vector<2x32xf32>
    %30 = arith.mulf %23, %29 : vector<2x32xf32>
    %c0_13 = arith.constant 0 : index
    %c0_14 = arith.constant 0 : index
    %31 = vector.load %arg4[%c0_13, %c0_14] : memref<16x32xf32, #tpu.memory_space<vmem>>, vector<2x32xf32>
    tpu.vector_store %arg4[%c0_13, %c0_14], %30 {strides = array<i32>} : memref<16x32xf32, #tpu.memory_space<vmem>>, vector<2x32xf32>,
    %32 = vector.extract_strided_slice %9 {offsets = [2, 0], sizes = [2, 128], strides = [1, 1]} : vector<16x128xf32> to vector<2x128xf32>
    %cst_15 = arith.constant dense<0.000000e+00> : vector<2x128xf32>
    %33 = tpu.matmul %30, %3, %cst_15 {dimension_numbers = #tpu.dot_dimension_numbers<[1], [0], [0], [1], [0, 0, 1, 1], [], []>} : vector<2x32xf32>, vector<32x128xf32>, vector<2x128xf32> -> vector<2x128xf32>
    %34 = arith.addf %32, %33 : vector<2x128xf32>
    %35 = vector.extract_strided_slice %34 {offsets = [0, 0], sizes = [2, 96], strides = [1, 1]} : vector<2x128xf32> to vector<2x96xf32>
    %36 = arith.negf %35 : vector<2x96xf32>
    %37 = math.exp %36 : vector<2x96xf32>
    %cst_16 = arith.constant 1.000000e+00 : f32
    %38 = vector.broadcast %cst_16 : f32 to vector<2x96xf32>
    %39 = arith.addf %38, %37 : vector<2x96xf32>
    %40 = arith.divf %38, %39 : vector<2x96xf32>
    %41 = vector.extract_strided_slice %40 {offsets = [0, 0], sizes = [2, 32], strides = [1, 1]} : vector<2x96xf32> to vector<2x32xf32>
    %42 = vector.extract_strided_slice %40 {offsets = [0, 32], sizes = [2, 32], strides = [1, 1]} : vector<2x96xf32> to vector<2x32xf32>
    %43 = vector.extract_strided_slice %40 {offsets = [0, 64], sizes = [2, 32], strides = [1, 1]} : vector<2x96xf32> to vector<2x32xf32>
    %44 = vector.extract_strided_slice %34 {offsets = [0, 96], sizes = [2, 32], strides = [1, 1]} : vector<2x128xf32> to vector<2x32xf32>
    %45 = math.tanh %44 : vector<2x32xf32>
    %46 = arith.mulf %42, %28 : vector<2x32xf32>
    %47 = arith.mulf %41, %45 : vector<2x32xf32>
    %48 = arith.addf %46, %47 : vector<2x32xf32>
    %49 = math.tanh %48 : vector<2x32xf32>
    %50 = arith.mulf %43, %49 : vector<2x32xf32>
    %c2 = arith.constant 2 : index
    %c0_17 = arith.constant 0 : index
    %51 = vector.load %arg4[%c2, %c0_17] : memref<16x32xf32, #tpu.memory_space<vmem>>, vector<2x32xf32>
    tpu.vector_store %arg4[%c2, %c0_17], %50 {strides = array<i32>} : memref<16x32xf32, #tpu.memory_space<vmem>>, vector<2x32xf32>,
    %52 = vector.extract_strided_slice %9 {offsets = [4, 0], sizes = [2, 128], strides = [1, 1]} : vector<16x128xf32> to vector<2x128xf32>
    %cst_18 = arith.constant dense<0.000000e+00> : vector<2x128xf32>
    %53 = tpu.matmul %50, %3, %cst_18 {dimension_numbers = #tpu.dot_dimension_numbers<[1], [0], [0], [1], [0, 0, 1, 1], [], []>} : vector<2x32xf32>, vector<32x128xf32>, vector<2x128xf32> -> vector<2x128xf32>
    %54 = arith.addf %52, %53 : vector<2x128xf32>
    %55 = vector.extract_strided_slice %54 {offsets = [0, 0], sizes = [2, 96], strides = [1, 1]} : vector<2x128xf32> to vector<2x96xf32>
    %56 = arith.negf %55 : vector<2x96xf32>
    %57 = math.exp %56 : vector<2x96xf32>
    %cst_19 = arith.constant 1.000000e+00 : f32
    %58 = vector.broadcast %cst_19 : f32 to vector<2x96xf32>
    %59 = arith.addf %58, %57 : vector<2x96xf32>
    %60 = arith.divf %58, %59 : vector<2x96xf32>
    %61 = vector.extract_strided_slice %60 {offsets = [0, 0], sizes = [2, 32], strides = [1, 1]} : vector<2x96xf32> to vector<2x32xf32>
    %62 = vector.extract_strided_slice %60 {offsets = [0, 32], sizes = [2, 32], strides = [1, 1]} : vector<2x96xf32> to vector<2x32xf32>
    %63 = vector.extract_strided_slice %60 {offsets = [0, 64], sizes = [2, 32], strides = [1, 1]} : vector<2x96xf32> to vector<2x32xf32>
    %64 = vector.extract_strided_slice %54 {offsets = [0, 96], sizes = [2, 32], strides = [1, 1]} : vector<2x128xf32> to vector<2x32xf32>
    %65 = math.tanh %64 : vector<2x32xf32>
    %66 = arith.mulf %62, %48 : vector<2x32xf32>
    %67 = arith.mulf %61, %65 : vector<2x32xf32>
    %68 = arith.addf %66, %67 : vector<2x32xf32>
    %69 = math.tanh %68 : vector<2x32xf32>
    %70 = arith.mulf %63, %69 : vector<2x32xf32>
    %c4 = arith.constant 4 : index
    %c0_20 = arith.constant 0 : index
    %71 = vector.load %arg4[%c4, %c0_20] : memref<16x32xf32, #tpu.memory_space<vmem>>, vector<2x32xf32>
    tpu.vector_store %arg4[%c4, %c0_20], %70 {strides = array<i32>} : memref<16x32xf32, #tpu.memory_space<vmem>>, vector<2x32xf32>,
    %72 = vector.extract_strided_slice %9 {offsets = [6, 0], sizes = [2, 128], strides = [1, 1]} : vector<16x128xf32> to vector<2x128xf32>
    %cst_21 = arith.constant dense<0.000000e+00> : vector<2x128xf32>
    %73 = tpu.matmul %70, %3, %cst_21 {dimension_numbers = #tpu.dot_dimension_numbers<[1], [0], [0], [1], [0, 0, 1, 1], [], []>} : vector<2x32xf32>, vector<32x128xf32>, vector<2x128xf32> -> vector<2x128xf32>
    %74 = arith.addf %72, %73 : vector<2x128xf32>
    %75 = vector.extract_strided_slice %74 {offsets = [0, 0], sizes = [2, 96], strides = [1, 1]} : vector<2x128xf32> to vector<2x96xf32>
    %76 = arith.negf %75 : vector<2x96xf32>
    %77 = math.exp %76 : vector<2x96xf32>
    %cst_22 = arith.constant 1.000000e+00 : f32
    %78 = vector.broadcast %cst_22 : f32 to vector<2x96xf32>
    %79 = arith.addf %78, %77 : vector<2x96xf32>
    %80 = arith.divf %78, %79 : vector<2x96xf32>
    %81 = vector.extract_strided_slice %80 {offsets = [0, 0], sizes = [2, 32], strides = [1, 1]} : vector<2x96xf32> to vector<2x32xf32>
    %82 = vector.extract_strided_slice %80 {offsets = [0, 32], sizes = [2, 32], strides = [1, 1]} : vector<2x96xf32> to vector<2x32xf32>
    %83 = vector.extract_strided_slice %80 {offsets = [0, 64], sizes = [2, 32], strides = [1, 1]} : vector<2x96xf32> to vector<2x32xf32>
    %84 = vector.extract_strided_slice %74 {offsets = [0, 96], sizes = [2, 32], strides = [1, 1]} : vector<2x128xf32> to vector<2x32xf32>
    %85 = math.tanh %84 : vector<2x32xf32>
    %86 = arith.mulf %82, %68 : vector<2x32xf32>
    %87 = arith.mulf %81, %85 : vector<2x32xf32>
    %88 = arith.addf %86, %87 : vector<2x32xf32>
    %89 = math.tanh %88 : vector<2x32xf32>
    %90 = arith.mulf %83, %89 : vector<2x32xf32>
    %c6 = arith.constant 6 : index
    %c0_23 = arith.constant 0 : index
    %91 = vector.load %arg4[%c6, %c0_23] : memref<16x32xf32, #tpu.memory_space<vmem>>, vector<2x32xf32>
    tpu.vector_store %arg4[%c6, %c0_23], %90 {strides = array<i32>} : memref<16x32xf32, #tpu.memory_space<vmem>>, vector<2x32xf32>,
    %92 = vector.extract_strided_slice %9 {offsets = [8, 0], sizes = [2, 128], strides = [1, 1]} : vector<16x128xf32> to vector<2x128xf32>
    %cst_24 = arith.constant dense<0.000000e+00> : vector<2x128xf32>
    %93 = tpu.matmul %90, %3, %cst_24 {dimension_numbers = #tpu.dot_dimension_numbers<[1], [0], [0], [1], [0, 0, 1, 1], [], []>} : vector<2x32xf32>, vector<32x128xf32>, vector<2x128xf32> -> vector<2x128xf32>
    %94 = arith.addf %92, %93 : vector<2x128xf32>
    %95 = vector.extract_strided_slice %94 {offsets = [0, 0], sizes = [2, 96], strides = [1, 1]} : vector<2x128xf32> to vector<2x96xf32>
    %96 = arith.negf %95 : vector<2x96xf32>
    %97 = math.exp %96 : vector<2x96xf32>
    %cst_25 = arith.constant 1.000000e+00 : f32
    %98 = vector.broadcast %cst_25 : f32 to vector<2x96xf32>
    %99 = arith.addf %98, %97 : vector<2x96xf32>
    %100 = arith.divf %98, %99 : vector<2x96xf32>
    %101 = vector.extract_strided_slice %100 {offsets = [0, 0], sizes = [2, 32], strides = [1, 1]} : vector<2x96xf32> to vector<2x32xf32>
    %102 = vector.extract_strided_slice %100 {offsets = [0, 32], sizes = [2, 32], strides = [1, 1]} : vector<2x96xf32> to vector<2x32xf32>
    %103 = vector.extract_strided_slice %100 {offsets = [0, 64], sizes = [2, 32], strides = [1, 1]} : vector<2x96xf32> to vector<2x32xf32>
    %104 = vector.extract_strided_slice %94 {offsets = [0, 96], sizes = [2, 32], strides = [1, 1]} : vector<2x128xf32> to vector<2x32xf32>
    %105 = math.tanh %104 : vector<2x32xf32>
    %106 = arith.mulf %102, %88 : vector<2x32xf32>
    %107 = arith.mulf %101, %105 : vector<2x32xf32>
    %108 = arith.addf %106, %107 : vector<2x32xf32>
    %109 = math.tanh %108 : vector<2x32xf32>
    %110 = arith.mulf %103, %109 : vector<2x32xf32>
    %c8 = arith.constant 8 : index
    %c0_26 = arith.constant 0 : index
    %111 = vector.load %arg4[%c8, %c0_26] : memref<16x32xf32, #tpu.memory_space<vmem>>, vector<2x32xf32>
    tpu.vector_store %arg4[%c8, %c0_26], %110 {strides = array<i32>} : memref<16x32xf32, #tpu.memory_space<vmem>>, vector<2x32xf32>,
    %112 = vector.extract_strided_slice %9 {offsets = [10, 0], sizes = [2, 128], strides = [1, 1]} : vector<16x128xf32> to vector<2x128xf32>
    %cst_27 = arith.constant dense<0.000000e+00> : vector<2x128xf32>
    %113 = tpu.matmul %110, %3, %cst_27 {dimension_numbers = #tpu.dot_dimension_numbers<[1], [0], [0], [1], [0, 0, 1, 1], [], []>} : vector<2x32xf32>, vector<32x128xf32>, vector<2x128xf32> -> vector<2x128xf32>
    %114 = arith.addf %112, %113 : vector<2x128xf32>
    %115 = vector.extract_strided_slice %114 {offsets = [0, 0], sizes = [2, 96], strides = [1, 1]} : vector<2x128xf32> to vector<2x96xf32>
    %116 = arith.negf %115 : vector<2x96xf32>
    %117 = math.exp %116 : vector<2x96xf32>
    %cst_28 = arith.constant 1.000000e+00 : f32
    %118 = vector.broadcast %cst_28 : f32 to vector<2x96xf32>
    %119 = arith.addf %118, %117 : vector<2x96xf32>
    %120 = arith.divf %118, %119 : vector<2x96xf32>
    %121 = vector.extract_strided_slice %120 {offsets = [0, 0], sizes = [2, 32], strides = [1, 1]} : vector<2x96xf32> to vector<2x32xf32>
    %122 = vector.extract_strided_slice %120 {offsets = [0, 32], sizes = [2, 32], strides = [1, 1]} : vector<2x96xf32> to vector<2x32xf32>
    %123 = vector.extract_strided_slice %120 {offsets = [0, 64], sizes = [2, 32], strides = [1, 1]} : vector<2x96xf32> to vector<2x32xf32>
    %124 = vector.extract_strided_slice %114 {offsets = [0, 96], sizes = [2, 32], strides = [1, 1]} : vector<2x128xf32> to vector<2x32xf32>
    %125 = math.tanh %124 : vector<2x32xf32>
    %126 = arith.mulf %122, %108 : vector<2x32xf32>
    %127 = arith.mulf %121, %125 : vector<2x32xf32>
    %128 = arith.addf %126, %127 : vector<2x32xf32>
    %129 = math.tanh %128 : vector<2x32xf32>
    %130 = arith.mulf %123, %129 : vector<2x32xf32>
    %c10 = arith.constant 10 : index
    %c0_29 = arith.constant 0 : index
    %131 = vector.load %arg4[%c10, %c0_29] : memref<16x32xf32, #tpu.memory_space<vmem>>, vector<2x32xf32>
    tpu.vector_store %arg4[%c10, %c0_29], %130 {strides = array<i32>} : memref<16x32xf32, #tpu.memory_space<vmem>>, vector<2x32xf32>,
    %132 = vector.extract_strided_slice %9 {offsets = [12, 0], sizes = [2, 128], strides = [1, 1]} : vector<16x128xf32> to vector<2x128xf32>
    %cst_30 = arith.constant dense<0.000000e+00> : vector<2x128xf32>
    %133 = tpu.matmul %130, %3, %cst_30 {dimension_numbers = #tpu.dot_dimension_numbers<[1], [0], [0], [1], [0, 0, 1, 1], [], []>} : vector<2x32xf32>, vector<32x128xf32>, vector<2x128xf32> -> vector<2x128xf32>
    %134 = arith.addf %132, %133 : vector<2x128xf32>
    %135 = vector.extract_strided_slice %134 {offsets = [0, 0], sizes = [2, 96], strides = [1, 1]} : vector<2x128xf32> to vector<2x96xf32>
    %136 = arith.negf %135 : vector<2x96xf32>
    %137 = math.exp %136 : vector<2x96xf32>
    %cst_31 = arith.constant 1.000000e+00 : f32
    %138 = vector.broadcast %cst_31 : f32 to vector<2x96xf32>
    %139 = arith.addf %138, %137 : vector<2x96xf32>
    %140 = arith.divf %138, %139 : vector<2x96xf32>
    %141 = vector.extract_strided_slice %140 {offsets = [0, 0], sizes = [2, 32], strides = [1, 1]} : vector<2x96xf32> to vector<2x32xf32>
    %142 = vector.extract_strided_slice %140 {offsets = [0, 32], sizes = [2, 32], strides = [1, 1]} : vector<2x96xf32> to vector<2x32xf32>
    %143 = vector.extract_strided_slice %140 {offsets = [0, 64], sizes = [2, 32], strides = [1, 1]} : vector<2x96xf32> to vector<2x32xf32>
    %144 = vector.extract_strided_slice %134 {offsets = [0, 96], sizes = [2, 32], strides = [1, 1]} : vector<2x128xf32> to vector<2x32xf32>
    %145 = math.tanh %144 : vector<2x32xf32>
    %146 = arith.mulf %142, %128 : vector<2x32xf32>
    %147 = arith.mulf %141, %145 : vector<2x32xf32>
    %148 = arith.addf %146, %147 : vector<2x32xf32>
    %149 = math.tanh %148 : vector<2x32xf32>
    %150 = arith.mulf %143, %149 : vector<2x32xf32>
    %c12 = arith.constant 12 : index
    %c0_32 = arith.constant 0 : index
    %151 = vector.load %arg4[%c12, %c0_32] : memref<16x32xf32, #tpu.memory_space<vmem>>, vector<2x32xf32>
    tpu.vector_store %arg4[%c12, %c0_32], %150 {strides = array<i32>} : memref<16x32xf32, #tpu.memory_space<vmem>>, vector<2x32xf32>,
    %152 = vector.extract_strided_slice %9 {offsets = [14, 0], sizes = [2, 128], strides = [1, 1]} : vector<16x128xf32> to vector<2x128xf32>
    %cst_33 = arith.constant dense<0.000000e+00> : vector<2x128xf32>
    %153 = tpu.matmul %150, %3, %cst_33 {dimension_numbers = #tpu.dot_dimension_numbers<[1], [0], [0], [1], [0, 0, 1, 1], [], []>} : vector<2x32xf32>, vector<32x128xf32>, vector<2x128xf32> -> vector<2x128xf32>
    %154 = arith.addf %152, %153 : vector<2x128xf32>
    %155 = vector.extract_strided_slice %154 {offsets = [0, 0], sizes = [2, 96], strides = [1, 1]} : vector<2x128xf32> to vector<2x96xf32>
    %156 = arith.negf %155 : vector<2x96xf32>
    %157 = math.exp %156 : vector<2x96xf32>
    %cst_34 = arith.constant 1.000000e+00 : f32
    %158 = vector.broadcast %cst_34 : f32 to vector<2x96xf32>
    %159 = arith.addf %158, %157 : vector<2x96xf32>
    %160 = arith.divf %158, %159 : vector<2x96xf32>
    %161 = vector.extract_strided_slice %160 {offsets = [0, 0], sizes = [2, 32], strides = [1, 1]} : vector<2x96xf32> to vector<2x32xf32>
    %162 = vector.extract_strided_slice %160 {offsets = [0, 32], sizes = [2, 32], strides = [1, 1]} : vector<2x96xf32> to vector<2x32xf32>
    %163 = vector.extract_strided_slice %160 {offsets = [0, 64], sizes = [2, 32], strides = [1, 1]} : vector<2x96xf32> to vector<2x32xf32>
    %164 = vector.extract_strided_slice %154 {offsets = [0, 96], sizes = [2, 32], strides = [1, 1]} : vector<2x128xf32> to vector<2x32xf32>
    %165 = math.tanh %164 : vector<2x32xf32>
    %166 = arith.mulf %162, %148 : vector<2x32xf32>
    %167 = arith.mulf %161, %165 : vector<2x32xf32>
    %168 = arith.addf %166, %167 : vector<2x32xf32>
    %169 = math.tanh %168 : vector<2x32xf32>
    %170 = arith.mulf %163, %169 : vector<2x32xf32>
    %c14 = arith.constant 14 : index
    %c0_35 = arith.constant 0 : index
    %171 = vector.load %arg4[%c14, %c0_35] : memref<16x32xf32, #tpu.memory_space<vmem>>, vector<2x32xf32>
    tpu.vector_store %arg4[%c14, %c0_35], %170 {strides = array<i32>} : memref<16x32xf32, #tpu.memory_space<vmem>>, vector<2x32xf32>,
    %c2_36 = arith.constant 2 : index
    %c0_37 = arith.constant 0 : index
    %c0_38 = arith.constant 0 : index
    %172 = vector.load %arg1[%c2_36, %c0_37, %c0_38] : memref<6x32x128xf32, #tpu.memory_space<vmem>>, vector<1x32x128xf32>
    %173 = vector.shape_cast %172 : vector<1x32x128xf32> to vector<32x128xf32>
    %c3 = arith.constant 3 : index
    %c0_39 = arith.constant 0 : index
    %c0_40 = arith.constant 0 : index
    %174 = vector.load %arg1[%c3, %c0_39, %c0_40] : memref<6x32x128xf32, #tpu.memory_space<vmem>>, vector<1x32x128xf32>
    %175 = vector.shape_cast %174 : vector<1x32x128xf32> to vector<32x128xf32>
    %c1_41 = arith.constant 1 : index
    %c0_42 = arith.constant 0 : index
    %c0_43 = arith.constant 0 : index
    %176 = vector.load %arg2[%c1_41, %c0_42, %c0_43] : memref<3x1x128xf32, #tpu.memory_space<vmem>>, vector<1x1x128xf32>
    %177 = vector.shape_cast %176 : vector<1x1x128xf32> to vector<1x128xf32>
    %c0_44 = arith.constant 0 : index
    %c0_45 = arith.constant 0 : index
    %178 = vector.load %arg4[%c0_44, %c0_45] : memref<16x32xf32, #tpu.memory_space<vmem>>, vector<16x32xf32>
    %cst_46 = arith.constant dense<0.000000e+00> : vector<16x128xf32>
    %179 = tpu.matmul %178, %173, %cst_46 {dimension_numbers = #tpu.dot_dimension_numbers<[1], [0], [0], [1], [0, 0, 1, 1], [], []>} : vector<16x32xf32>, vector<32x128xf32>, vector<16x128xf32> -> vector<16x128xf32>
    %180 = vector.broadcast %177 : vector<1x128xf32> to vector<16x128xf32>
    %181 = arith.addf %179, %180 : vector<16x128xf32>
    %cst_47 = arith.constant 0.000000e+00 : f32
    %182 = vector.broadcast %cst_47 : f32 to vector<2x32xf32>
    %cst_48 = arith.constant 0.000000e+00 : f32
    %183 = vector.broadcast %cst_48 : f32 to vector<2x32xf32>
    %184 = vector.extract_strided_slice %181 {offsets = [0, 0], sizes = [2, 128], strides = [1, 1]} : vector<16x128xf32> to vector<2x128xf32>
    %cst_49 = arith.constant dense<0.000000e+00> : vector<2x128xf32>
    %185 = tpu.matmul %182, %175, %cst_49 {dimension_numbers = #tpu.dot_dimension_numbers<[1], [0], [0], [1], [0, 0, 1, 1], [], []>} : vector<2x32xf32>, vector<32x128xf32>, vector<2x128xf32> -> vector<2x128xf32>
    %186 = arith.addf %184, %185 : vector<2x128xf32>
    %187 = vector.extract_strided_slice %186 {offsets = [0, 0], sizes = [2, 96], strides = [1, 1]} : vector<2x128xf32> to vector<2x96xf32>
    %188 = arith.negf %187 : vector<2x96xf32>
    %189 = math.exp %188 : vector<2x96xf32>
    %cst_50 = arith.constant 1.000000e+00 : f32
    %190 = vector.broadcast %cst_50 : f32 to vector<2x96xf32>
    %191 = arith.addf %190, %189 : vector<2x96xf32>
    %192 = arith.divf %190, %191 : vector<2x96xf32>
    %193 = vector.extract_strided_slice %192 {offsets = [0, 0], sizes = [2, 32], strides = [1, 1]} : vector<2x96xf32> to vector<2x32xf32>
    %194 = vector.extract_strided_slice %192 {offsets = [0, 32], sizes = [2, 32], strides = [1, 1]} : vector<2x96xf32> to vector<2x32xf32>
    %195 = vector.extract_strided_slice %192 {offsets = [0, 64], sizes = [2, 32], strides = [1, 1]} : vector<2x96xf32> to vector<2x32xf32>
    %196 = vector.extract_strided_slice %186 {offsets = [0, 96], sizes = [2, 32], strides = [1, 1]} : vector<2x128xf32> to vector<2x32xf32>
    %197 = math.tanh %196 : vector<2x32xf32>
    %198 = arith.mulf %194, %183 : vector<2x32xf32>
    %199 = arith.mulf %193, %197 : vector<2x32xf32>
    %200 = arith.addf %198, %199 : vector<2x32xf32>
    %201 = math.tanh %200 : vector<2x32xf32>
    %202 = arith.mulf %195, %201 : vector<2x32xf32>
    %c0_51 = arith.constant 0 : index
    %c0_52 = arith.constant 0 : index
    %203 = vector.load %arg4[%c0_51, %c0_52] : memref<16x32xf32, #tpu.memory_space<vmem>>, vector<2x32xf32>
    tpu.vector_store %arg4[%c0_51, %c0_52], %202 {strides = array<i32>} : memref<16x32xf32, #tpu.memory_space<vmem>>, vector<2x32xf32>,
    %204 = vector.extract_strided_slice %181 {offsets = [2, 0], sizes = [2, 128], strides = [1, 1]} : vector<16x128xf32> to vector<2x128xf32>
    %cst_53 = arith.constant dense<0.000000e+00> : vector<2x128xf32>
    %205 = tpu.matmul %202, %175, %cst_53 {dimension_numbers = #tpu.dot_dimension_numbers<[1], [0], [0], [1], [0, 0, 1, 1], [], []>} : vector<2x32xf32>, vector<32x128xf32>, vector<2x128xf32> -> vector<2x128xf32>
    %206 = arith.addf %204, %205 : vector<2x128xf32>
    %207 = vector.extract_strided_slice %206 {offsets = [0, 0], sizes = [2, 96], strides = [1, 1]} : vector<2x128xf32> to vector<2x96xf32>
    %208 = arith.negf %207 : vector<2x96xf32>
    %209 = math.exp %208 : vector<2x96xf32>
    %cst_54 = arith.constant 1.000000e+00 : f32
    %210 = vector.broadcast %cst_54 : f32 to vector<2x96xf32>
    %211 = arith.addf %210, %209 : vector<2x96xf32>
    %212 = arith.divf %210, %211 : vector<2x96xf32>
    %213 = vector.extract_strided_slice %212 {offsets = [0, 0], sizes = [2, 32], strides = [1, 1]} : vector<2x96xf32> to vector<2x32xf32>
    %214 = vector.extract_strided_slice %212 {offsets = [0, 32], sizes = [2, 32], strides = [1, 1]} : vector<2x96xf32> to vector<2x32xf32>
    %215 = vector.extract_strided_slice %212 {offsets = [0, 64], sizes = [2, 32], strides = [1, 1]} : vector<2x96xf32> to vector<2x32xf32>
    %216 = vector.extract_strided_slice %206 {offsets = [0, 96], sizes = [2, 32], strides = [1, 1]} : vector<2x128xf32> to vector<2x32xf32>
    %217 = math.tanh %216 : vector<2x32xf32>
    %218 = arith.mulf %214, %200 : vector<2x32xf32>
    %219 = arith.mulf %213, %217 : vector<2x32xf32>
    %220 = arith.addf %218, %219 : vector<2x32xf32>
    %221 = math.tanh %220 : vector<2x32xf32>
    %222 = arith.mulf %215, %221 : vector<2x32xf32>
    %c2_55 = arith.constant 2 : index
    %c0_56 = arith.constant 0 : index
    %223 = vector.load %arg4[%c2_55, %c0_56] : memref<16x32xf32, #tpu.memory_space<vmem>>, vector<2x32xf32>
    tpu.vector_store %arg4[%c2_55, %c0_56], %222 {strides = array<i32>} : memref<16x32xf32, #tpu.memory_space<vmem>>, vector<2x32xf32>,
    %224 = vector.extract_strided_slice %181 {offsets = [4, 0], sizes = [2, 128], strides = [1, 1]} : vector<16x128xf32> to vector<2x128xf32>
    %cst_57 = arith.constant dense<0.000000e+00> : vector<2x128xf32>
    %225 = tpu.matmul %222, %175, %cst_57 {dimension_numbers = #tpu.dot_dimension_numbers<[1], [0], [0], [1], [0, 0, 1, 1], [], []>} : vector<2x32xf32>, vector<32x128xf32>, vector<2x128xf32> -> vector<2x128xf32>
    %226 = arith.addf %224, %225 : vector<2x128xf32>
    %227 = vector.extract_strided_slice %226 {offsets = [0, 0], sizes = [2, 96], strides = [1, 1]} : vector<2x128xf32> to vector<2x96xf32>
    %228 = arith.negf %227 : vector<2x96xf32>
    %229 = math.exp %228 : vector<2x96xf32>
    %cst_58 = arith.constant 1.000000e+00 : f32
    %230 = vector.broadcast %cst_58 : f32 to vector<2x96xf32>
    %231 = arith.addf %230, %229 : vector<2x96xf32>
    %232 = arith.divf %230, %231 : vector<2x96xf32>
    %233 = vector.extract_strided_slice %232 {offsets = [0, 0], sizes = [2, 32], strides = [1, 1]} : vector<2x96xf32> to vector<2x32xf32>
    %234 = vector.extract_strided_slice %232 {offsets = [0, 32], sizes = [2, 32], strides = [1, 1]} : vector<2x96xf32> to vector<2x32xf32>
    %235 = vector.extract_strided_slice %232 {offsets = [0, 64], sizes = [2, 32], strides = [1, 1]} : vector<2x96xf32> to vector<2x32xf32>
    %236 = vector.extract_strided_slice %226 {offsets = [0, 96], sizes = [2, 32], strides = [1, 1]} : vector<2x128xf32> to vector<2x32xf32>
    %237 = math.tanh %236 : vector<2x32xf32>
    %238 = arith.mulf %234, %220 : vector<2x32xf32>
    %239 = arith.mulf %233, %237 : vector<2x32xf32>
    %240 = arith.addf %238, %239 : vector<2x32xf32>
    %241 = math.tanh %240 : vector<2x32xf32>
    %242 = arith.mulf %235, %241 : vector<2x32xf32>
    %c4_59 = arith.constant 4 : index
    %c0_60 = arith.constant 0 : index
    %243 = vector.load %arg4[%c4_59, %c0_60] : memref<16x32xf32, #tpu.memory_space<vmem>>, vector<2x32xf32>
    tpu.vector_store %arg4[%c4_59, %c0_60], %242 {strides = array<i32>} : memref<16x32xf32, #tpu.memory_space<vmem>>, vector<2x32xf32>,
    %244 = vector.extract_strided_slice %181 {offsets = [6, 0], sizes = [2, 128], strides = [1, 1]} : vector<16x128xf32> to vector<2x128xf32>
    %cst_61 = arith.constant dense<0.000000e+00> : vector<2x128xf32>
    %245 = tpu.matmul %242, %175, %cst_61 {dimension_numbers = #tpu.dot_dimension_numbers<[1], [0], [0], [1], [0, 0, 1, 1], [], []>} : vector<2x32xf32>, vector<32x128xf32>, vector<2x128xf32> -> vector<2x128xf32>
    %246 = arith.addf %244, %245 : vector<2x128xf32>
    %247 = vector.extract_strided_slice %246 {offsets = [0, 0], sizes = [2, 96], strides = [1, 1]} : vector<2x128xf32> to vector<2x96xf32>
    %248 = arith.negf %247 : vector<2x96xf32>
    %249 = math.exp %248 : vector<2x96xf32>
    %cst_62 = arith.constant 1.000000e+00 : f32
    %250 = vector.broadcast %cst_62 : f32 to vector<2x96xf32>
    %251 = arith.addf %250, %249 : vector<2x96xf32>
    %252 = arith.divf %250, %251 : vector<2x96xf32>
    %253 = vector.extract_strided_slice %252 {offsets = [0, 0], sizes = [2, 32], strides = [1, 1]} : vector<2x96xf32> to vector<2x32xf32>
    %254 = vector.extract_strided_slice %252 {offsets = [0, 32], sizes = [2, 32], strides = [1, 1]} : vector<2x96xf32> to vector<2x32xf32>
    %255 = vector.extract_strided_slice %252 {offsets = [0, 64], sizes = [2, 32], strides = [1, 1]} : vector<2x96xf32> to vector<2x32xf32>
    %256 = vector.extract_strided_slice %246 {offsets = [0, 96], sizes = [2, 32], strides = [1, 1]} : vector<2x128xf32> to vector<2x32xf32>
    %257 = math.tanh %256 : vector<2x32xf32>
    %258 = arith.mulf %254, %240 : vector<2x32xf32>
    %259 = arith.mulf %253, %257 : vector<2x32xf32>
    %260 = arith.addf %258, %259 : vector<2x32xf32>
    %261 = math.tanh %260 : vector<2x32xf32>
    %262 = arith.mulf %255, %261 : vector<2x32xf32>
    %c6_63 = arith.constant 6 : index
    %c0_64 = arith.constant 0 : index
    %263 = vector.load %arg4[%c6_63, %c0_64] : memref<16x32xf32, #tpu.memory_space<vmem>>, vector<2x32xf32>
    tpu.vector_store %arg4[%c6_63, %c0_64], %262 {strides = array<i32>} : memref<16x32xf32, #tpu.memory_space<vmem>>, vector<2x32xf32>,
    %264 = vector.extract_strided_slice %181 {offsets = [8, 0], sizes = [2, 128], strides = [1, 1]} : vector<16x128xf32> to vector<2x128xf32>
    %cst_65 = arith.constant dense<0.000000e+00> : vector<2x128xf32>
    %265 = tpu.matmul %262, %175, %cst_65 {dimension_numbers = #tpu.dot_dimension_numbers<[1], [0], [0], [1], [0, 0, 1, 1], [], []>} : vector<2x32xf32>, vector<32x128xf32>, vector<2x128xf32> -> vector<2x128xf32>
    %266 = arith.addf %264, %265 : vector<2x128xf32>
    %267 = vector.extract_strided_slice %266 {offsets = [0, 0], sizes = [2, 96], strides = [1, 1]} : vector<2x128xf32> to vector<2x96xf32>
    %268 = arith.negf %267 : vector<2x96xf32>
    %269 = math.exp %268 : vector<2x96xf32>
    %cst_66 = arith.constant 1.000000e+00 : f32
    %270 = vector.broadcast %cst_66 : f32 to vector<2x96xf32>
    %271 = arith.addf %270, %269 : vector<2x96xf32>
    %272 = arith.divf %270, %271 : vector<2x96xf32>
    %273 = vector.extract_strided_slice %272 {offsets = [0, 0], sizes = [2, 32], strides = [1, 1]} : vector<2x96xf32> to vector<2x32xf32>
    %274 = vector.extract_strided_slice %272 {offsets = [0, 32], sizes = [2, 32], strides = [1, 1]} : vector<2x96xf32> to vector<2x32xf32>
    %275 = vector.extract_strided_slice %272 {offsets = [0, 64], sizes = [2, 32], strides = [1, 1]} : vector<2x96xf32> to vector<2x32xf32>
    %276 = vector.extract_strided_slice %266 {offsets = [0, 96], sizes = [2, 32], strides = [1, 1]} : vector<2x128xf32> to vector<2x32xf32>
    %277 = math.tanh %276 : vector<2x32xf32>
    %278 = arith.mulf %274, %260 : vector<2x32xf32>
    %279 = arith.mulf %273, %277 : vector<2x32xf32>
    %280 = arith.addf %278, %279 : vector<2x32xf32>
    %281 = math.tanh %280 : vector<2x32xf32>
    %282 = arith.mulf %275, %281 : vector<2x32xf32>
    %c8_67 = arith.constant 8 : index
    %c0_68 = arith.constant 0 : index
    %283 = vector.load %arg4[%c8_67, %c0_68] : memref<16x32xf32, #tpu.memory_space<vmem>>, vector<2x32xf32>
    tpu.vector_store %arg4[%c8_67, %c0_68], %282 {strides = array<i32>} : memref<16x32xf32, #tpu.memory_space<vmem>>, vector<2x32xf32>,
    %284 = vector.extract_strided_slice %181 {offsets = [10, 0], sizes = [2, 128], strides = [1, 1]} : vector<16x128xf32> to vector<2x128xf32>
    %cst_69 = arith.constant dense<0.000000e+00> : vector<2x128xf32>
    %285 = tpu.matmul %282, %175, %cst_69 {dimension_numbers = #tpu.dot_dimension_numbers<[1], [0], [0], [1], [0, 0, 1, 1], [], []>} : vector<2x32xf32>, vector<32x128xf32>, vector<2x128xf32> -> vector<2x128xf32>
    %286 = arith.addf %284, %285 : vector<2x128xf32>
    %287 = vector.extract_strided_slice %286 {offsets = [0, 0], sizes = [2, 96], strides = [1, 1]} : vector<2x128xf32> to vector<2x96xf32>
    %288 = arith.negf %287 : vector<2x96xf32>
    %289 = math.exp %288 : vector<2x96xf32>
    %cst_70 = arith.constant 1.000000e+00 : f32
    %290 = vector.broadcast %cst_70 : f32 to vector<2x96xf32>
    %291 = arith.addf %290, %289 : vector<2x96xf32>
    %292 = arith.divf %290, %291 : vector<2x96xf32>
    %293 = vector.extract_strided_slice %292 {offsets = [0, 0], sizes = [2, 32], strides = [1, 1]} : vector<2x96xf32> to vector<2x32xf32>
    %294 = vector.extract_strided_slice %292 {offsets = [0, 32], sizes = [2, 32], strides = [1, 1]} : vector<2x96xf32> to vector<2x32xf32>
    %295 = vector.extract_strided_slice %292 {offsets = [0, 64], sizes = [2, 32], strides = [1, 1]} : vector<2x96xf32> to vector<2x32xf32>
    %296 = vector.extract_strided_slice %286 {offsets = [0, 96], sizes = [2, 32], strides = [1, 1]} : vector<2x128xf32> to vector<2x32xf32>
    %297 = math.tanh %296 : vector<2x32xf32>
    %298 = arith.mulf %294, %280 : vector<2x32xf32>
    %299 = arith.mulf %293, %297 : vector<2x32xf32>
    %300 = arith.addf %298, %299 : vector<2x32xf32>
    %301 = math.tanh %300 : vector<2x32xf32>
    %302 = arith.mulf %295, %301 : vector<2x32xf32>
    %c10_71 = arith.constant 10 : index
    %c0_72 = arith.constant 0 : index
    %303 = vector.load %arg4[%c10_71, %c0_72] : memref<16x32xf32, #tpu.memory_space<vmem>>, vector<2x32xf32>
    tpu.vector_store %arg4[%c10_71, %c0_72], %302 {strides = array<i32>} : memref<16x32xf32, #tpu.memory_space<vmem>>, vector<2x32xf32>,
    %304 = vector.extract_strided_slice %181 {offsets = [12, 0], sizes = [2, 128], strides = [1, 1]} : vector<16x128xf32> to vector<2x128xf32>
    %cst_73 = arith.constant dense<0.000000e+00> : vector<2x128xf32>
    %305 = tpu.matmul %302, %175, %cst_73 {dimension_numbers = #tpu.dot_dimension_numbers<[1], [0], [0], [1], [0, 0, 1, 1], [], []>} : vector<2x32xf32>, vector<32x128xf32>, vector<2x128xf32> -> vector<2x128xf32>
    %306 = arith.addf %304, %305 : vector<2x128xf32>
    %307 = vector.extract_strided_slice %306 {offsets = [0, 0], sizes = [2, 96], strides = [1, 1]} : vector<2x128xf32> to vector<2x96xf32>
    %308 = arith.negf %307 : vector<2x96xf32>
    %309 = math.exp %308 : vector<2x96xf32>
    %cst_74 = arith.constant 1.000000e+00 : f32
    %310 = vector.broadcast %cst_74 : f32 to vector<2x96xf32>
    %311 = arith.addf %310, %309 : vector<2x96xf32>
    %312 = arith.divf %310, %311 : vector<2x96xf32>
    %313 = vector.extract_strided_slice %312 {offsets = [0, 0], sizes = [2, 32], strides = [1, 1]} : vector<2x96xf32> to vector<2x32xf32>
    %314 = vector.extract_strided_slice %312 {offsets = [0, 32], sizes = [2, 32], strides = [1, 1]} : vector<2x96xf32> to vector<2x32xf32>
    %315 = vector.extract_strided_slice %312 {offsets = [0, 64], sizes = [2, 32], strides = [1, 1]} : vector<2x96xf32> to vector<2x32xf32>
    %316 = vector.extract_strided_slice %306 {offsets = [0, 96], sizes = [2, 32], strides = [1, 1]} : vector<2x128xf32> to vector<2x32xf32>
    %317 = math.tanh %316 : vector<2x32xf32>
    %318 = arith.mulf %314, %300 : vector<2x32xf32>
    %319 = arith.mulf %313, %317 : vector<2x32xf32>
    %320 = arith.addf %318, %319 : vector<2x32xf32>
    %321 = math.tanh %320 : vector<2x32xf32>
    %322 = arith.mulf %315, %321 : vector<2x32xf32>
    %c12_75 = arith.constant 12 : index
    %c0_76 = arith.constant 0 : index
    %323 = vector.load %arg4[%c12_75, %c0_76] : memref<16x32xf32, #tpu.memory_space<vmem>>, vector<2x32xf32>
    tpu.vector_store %arg4[%c12_75, %c0_76], %322 {strides = array<i32>} : memref<16x32xf32, #tpu.memory_space<vmem>>, vector<2x32xf32>,
    %324 = vector.extract_strided_slice %181 {offsets = [14, 0], sizes = [2, 128], strides = [1, 1]} : vector<16x128xf32> to vector<2x128xf32>
    %cst_77 = arith.constant dense<0.000000e+00> : vector<2x128xf32>
    %325 = tpu.matmul %322, %175, %cst_77 {dimension_numbers = #tpu.dot_dimension_numbers<[1], [0], [0], [1], [0, 0, 1, 1], [], []>} : vector<2x32xf32>, vector<32x128xf32>, vector<2x128xf32> -> vector<2x128xf32>
    %326 = arith.addf %324, %325 : vector<2x128xf32>
    %327 = vector.extract_strided_slice %326 {offsets = [0, 0], sizes = [2, 96], strides = [1, 1]} : vector<2x128xf32> to vector<2x96xf32>
    %328 = arith.negf %327 : vector<2x96xf32>
    %329 = math.exp %328 : vector<2x96xf32>
    %cst_78 = arith.constant 1.000000e+00 : f32
    %330 = vector.broadcast %cst_78 : f32 to vector<2x96xf32>
    %331 = arith.addf %330, %329 : vector<2x96xf32>
    %332 = arith.divf %330, %331 : vector<2x96xf32>
    %333 = vector.extract_strided_slice %332 {offsets = [0, 0], sizes = [2, 32], strides = [1, 1]} : vector<2x96xf32> to vector<2x32xf32>
    %334 = vector.extract_strided_slice %332 {offsets = [0, 32], sizes = [2, 32], strides = [1, 1]} : vector<2x96xf32> to vector<2x32xf32>
    %335 = vector.extract_strided_slice %332 {offsets = [0, 64], sizes = [2, 32], strides = [1, 1]} : vector<2x96xf32> to vector<2x32xf32>
    %336 = vector.extract_strided_slice %326 {offsets = [0, 96], sizes = [2, 32], strides = [1, 1]} : vector<2x128xf32> to vector<2x32xf32>
    %337 = math.tanh %336 : vector<2x32xf32>
    %338 = arith.mulf %334, %320 : vector<2x32xf32>
    %339 = arith.mulf %333, %337 : vector<2x32xf32>
    %340 = arith.addf %338, %339 : vector<2x32xf32>
    %341 = math.tanh %340 : vector<2x32xf32>
    %342 = arith.mulf %335, %341 : vector<2x32xf32>
    %c14_79 = arith.constant 14 : index
    %c0_80 = arith.constant 0 : index
    %343 = vector.load %arg4[%c14_79, %c0_80] : memref<16x32xf32, #tpu.memory_space<vmem>>, vector<2x32xf32>
    tpu.vector_store %arg4[%c14_79, %c0_80], %342 {strides = array<i32>} : memref<16x32xf32, #tpu.memory_space<vmem>>, vector<2x32xf32>,
    %c4_81 = arith.constant 4 : index
    %c0_82 = arith.constant 0 : index
    %c0_83 = arith.constant 0 : index
    %344 = vector.load %arg1[%c4_81, %c0_82, %c0_83] : memref<6x32x128xf32, #tpu.memory_space<vmem>>, vector<1x32x64xf32>
    %345 = vector.shape_cast %344 : vector<1x32x64xf32> to vector<32x64xf32>
    %c5 = arith.constant 5 : index
    %c0_84 = arith.constant 0 : index
    %c0_85 = arith.constant 0 : index
    %346 = vector.load %arg1[%c5, %c0_84, %c0_85] : memref<6x32x128xf32, #tpu.memory_space<vmem>>, vector<1x16x64xf32>
    %347 = vector.shape_cast %346 : vector<1x16x64xf32> to vector<16x64xf32>
    %c2_86 = arith.constant 2 : index
    %c0_87 = arith.constant 0 : index
    %c0_88 = arith.constant 0 : index
    %348 = vector.load %arg2[%c2_86, %c0_87, %c0_88] : memref<3x1x128xf32, #tpu.memory_space<vmem>>, vector<1x1x64xf32>
    %349 = vector.shape_cast %348 : vector<1x1x64xf32> to vector<1x64xf32>
    %c0_89 = arith.constant 0 : index
    %c0_90 = arith.constant 0 : index
    %350 = vector.load %arg4[%c0_89, %c0_90] : memref<16x32xf32, #tpu.memory_space<vmem>>, vector<16x32xf32>
    %cst_91 = arith.constant dense<0.000000e+00> : vector<16x64xf32>
    %351 = tpu.matmul %350, %345, %cst_91 {dimension_numbers = #tpu.dot_dimension_numbers<[1], [0], [0], [1], [0, 0, 1, 1], [], []>} : vector<16x32xf32>, vector<32x64xf32>, vector<16x64xf32> -> vector<16x64xf32>
    %352 = vector.broadcast %349 : vector<1x64xf32> to vector<16x64xf32>
    %353 = arith.addf %351, %352 : vector<16x64xf32>
    %cst_92 = arith.constant 0.000000e+00 : f32
    %354 = vector.broadcast %cst_92 : f32 to vector<2x16xf32>
    %cst_93 = arith.constant 0.000000e+00 : f32
    %355 = vector.broadcast %cst_93 : f32 to vector<2x16xf32>
    %356 = vector.extract_strided_slice %353 {offsets = [0, 0], sizes = [2, 64], strides = [1, 1]} : vector<16x64xf32> to vector<2x64xf32>
    %cst_94 = arith.constant dense<0.000000e+00> : vector<2x64xf32>
    %357 = tpu.matmul %354, %347, %cst_94 {dimension_numbers = #tpu.dot_dimension_numbers<[1], [0], [0], [1], [0, 0, 1, 1], [], []>} : vector<2x16xf32>, vector<16x64xf32>, vector<2x64xf32> -> vector<2x64xf32>
    %358 = arith.addf %356, %357 : vector<2x64xf32>
    %359 = vector.extract_strided_slice %358 {offsets = [0, 0], sizes = [2, 48], strides = [1, 1]} : vector<2x64xf32> to vector<2x48xf32>
    %360 = arith.negf %359 : vector<2x48xf32>
    %361 = math.exp %360 : vector<2x48xf32>
    %cst_95 = arith.constant 1.000000e+00 : f32
    %362 = vector.broadcast %cst_95 : f32 to vector<2x48xf32>
    %363 = arith.addf %362, %361 : vector<2x48xf32>
    %364 = arith.divf %362, %363 : vector<2x48xf32>
    %365 = vector.extract_strided_slice %364 {offsets = [0, 0], sizes = [2, 16], strides = [1, 1]} : vector<2x48xf32> to vector<2x16xf32>
    %366 = vector.extract_strided_slice %364 {offsets = [0, 16], sizes = [2, 16], strides = [1, 1]} : vector<2x48xf32> to vector<2x16xf32>
    %367 = vector.extract_strided_slice %364 {offsets = [0, 32], sizes = [2, 16], strides = [1, 1]} : vector<2x48xf32> to vector<2x16xf32>
    %368 = vector.extract_strided_slice %358 {offsets = [0, 48], sizes = [2, 16], strides = [1, 1]} : vector<2x64xf32> to vector<2x16xf32>
    %369 = math.tanh %368 : vector<2x16xf32>
    %370 = arith.mulf %366, %355 : vector<2x16xf32>
    %371 = arith.mulf %365, %369 : vector<2x16xf32>
    %372 = arith.addf %370, %371 : vector<2x16xf32>
    %373 = math.tanh %372 : vector<2x16xf32>
    %374 = arith.mulf %367, %373 : vector<2x16xf32>
    %375 = vector.extract_strided_slice %353 {offsets = [2, 0], sizes = [2, 64], strides = [1, 1]} : vector<16x64xf32> to vector<2x64xf32>
    %cst_96 = arith.constant dense<0.000000e+00> : vector<2x64xf32>
    %376 = tpu.matmul %374, %347, %cst_96 {dimension_numbers = #tpu.dot_dimension_numbers<[1], [0], [0], [1], [0, 0, 1, 1], [], []>} : vector<2x16xf32>, vector<16x64xf32>, vector<2x64xf32> -> vector<2x64xf32>
    %377 = arith.addf %375, %376 : vector<2x64xf32>
    %378 = vector.extract_strided_slice %377 {offsets = [0, 0], sizes = [2, 48], strides = [1, 1]} : vector<2x64xf32> to vector<2x48xf32>
    %379 = arith.negf %378 : vector<2x48xf32>
    %380 = math.exp %379 : vector<2x48xf32>
    %cst_97 = arith.constant 1.000000e+00 : f32
    %381 = vector.broadcast %cst_97 : f32 to vector<2x48xf32>
    %382 = arith.addf %381, %380 : vector<2x48xf32>
    %383 = arith.divf %381, %382 : vector<2x48xf32>
    %384 = vector.extract_strided_slice %383 {offsets = [0, 0], sizes = [2, 16], strides = [1, 1]} : vector<2x48xf32> to vector<2x16xf32>
    %385 = vector.extract_strided_slice %383 {offsets = [0, 16], sizes = [2, 16], strides = [1, 1]} : vector<2x48xf32> to vector<2x16xf32>
    %386 = vector.extract_strided_slice %383 {offsets = [0, 32], sizes = [2, 16], strides = [1, 1]} : vector<2x48xf32> to vector<2x16xf32>
    %387 = vector.extract_strided_slice %377 {offsets = [0, 48], sizes = [2, 16], strides = [1, 1]} : vector<2x64xf32> to vector<2x16xf32>
    %388 = math.tanh %387 : vector<2x16xf32>
    %389 = arith.mulf %385, %372 : vector<2x16xf32>
    %390 = arith.mulf %384, %388 : vector<2x16xf32>
    %391 = arith.addf %389, %390 : vector<2x16xf32>
    %392 = math.tanh %391 : vector<2x16xf32>
    %393 = arith.mulf %386, %392 : vector<2x16xf32>
    %394 = vector.extract_strided_slice %353 {offsets = [4, 0], sizes = [2, 64], strides = [1, 1]} : vector<16x64xf32> to vector<2x64xf32>
    %cst_98 = arith.constant dense<0.000000e+00> : vector<2x64xf32>
    %395 = tpu.matmul %393, %347, %cst_98 {dimension_numbers = #tpu.dot_dimension_numbers<[1], [0], [0], [1], [0, 0, 1, 1], [], []>} : vector<2x16xf32>, vector<16x64xf32>, vector<2x64xf32> -> vector<2x64xf32>
    %396 = arith.addf %394, %395 : vector<2x64xf32>
    %397 = vector.extract_strided_slice %396 {offsets = [0, 0], sizes = [2, 48], strides = [1, 1]} : vector<2x64xf32> to vector<2x48xf32>
    %398 = arith.negf %397 : vector<2x48xf32>
    %399 = math.exp %398 : vector<2x48xf32>
    %cst_99 = arith.constant 1.000000e+00 : f32
    %400 = vector.broadcast %cst_99 : f32 to vector<2x48xf32>
    %401 = arith.addf %400, %399 : vector<2x48xf32>
    %402 = arith.divf %400, %401 : vector<2x48xf32>
    %403 = vector.extract_strided_slice %402 {offsets = [0, 0], sizes = [2, 16], strides = [1, 1]} : vector<2x48xf32> to vector<2x16xf32>
    %404 = vector.extract_strided_slice %402 {offsets = [0, 16], sizes = [2, 16], strides = [1, 1]} : vector<2x48xf32> to vector<2x16xf32>
    %405 = vector.extract_strided_slice %402 {offsets = [0, 32], sizes = [2, 16], strides = [1, 1]} : vector<2x48xf32> to vector<2x16xf32>
    %406 = vector.extract_strided_slice %396 {offsets = [0, 48], sizes = [2, 16], strides = [1, 1]} : vector<2x64xf32> to vector<2x16xf32>
    %407 = math.tanh %406 : vector<2x16xf32>
    %408 = arith.mulf %404, %391 : vector<2x16xf32>
    %409 = arith.mulf %403, %407 : vector<2x16xf32>
    %410 = arith.addf %408, %409 : vector<2x16xf32>
    %411 = math.tanh %410 : vector<2x16xf32>
    %412 = arith.mulf %405, %411 : vector<2x16xf32>
    %413 = vector.extract_strided_slice %353 {offsets = [6, 0], sizes = [2, 64], strides = [1, 1]} : vector<16x64xf32> to vector<2x64xf32>
    %cst_100 = arith.constant dense<0.000000e+00> : vector<2x64xf32>
    %414 = tpu.matmul %412, %347, %cst_100 {dimension_numbers = #tpu.dot_dimension_numbers<[1], [0], [0], [1], [0, 0, 1, 1], [], []>} : vector<2x16xf32>, vector<16x64xf32>, vector<2x64xf32> -> vector<2x64xf32>
    %415 = arith.addf %413, %414 : vector<2x64xf32>
    %416 = vector.extract_strided_slice %415 {offsets = [0, 0], sizes = [2, 48], strides = [1, 1]} : vector<2x64xf32> to vector<2x48xf32>
    %417 = arith.negf %416 : vector<2x48xf32>
    %418 = math.exp %417 : vector<2x48xf32>
    %cst_101 = arith.constant 1.000000e+00 : f32
    %419 = vector.broadcast %cst_101 : f32 to vector<2x48xf32>
    %420 = arith.addf %419, %418 : vector<2x48xf32>
    %421 = arith.divf %419, %420 : vector<2x48xf32>
    %422 = vector.extract_strided_slice %421 {offsets = [0, 0], sizes = [2, 16], strides = [1, 1]} : vector<2x48xf32> to vector<2x16xf32>
    %423 = vector.extract_strided_slice %421 {offsets = [0, 16], sizes = [2, 16], strides = [1, 1]} : vector<2x48xf32> to vector<2x16xf32>
    %424 = vector.extract_strided_slice %421 {offsets = [0, 32], sizes = [2, 16], strides = [1, 1]} : vector<2x48xf32> to vector<2x16xf32>
    %425 = vector.extract_strided_slice %415 {offsets = [0, 48], sizes = [2, 16], strides = [1, 1]} : vector<2x64xf32> to vector<2x16xf32>
    %426 = math.tanh %425 : vector<2x16xf32>
    %427 = arith.mulf %423, %410 : vector<2x16xf32>
    %428 = arith.mulf %422, %426 : vector<2x16xf32>
    %429 = arith.addf %427, %428 : vector<2x16xf32>
    %430 = math.tanh %429 : vector<2x16xf32>
    %431 = arith.mulf %424, %430 : vector<2x16xf32>
    %432 = vector.extract_strided_slice %353 {offsets = [8, 0], sizes = [2, 64], strides = [1, 1]} : vector<16x64xf32> to vector<2x64xf32>
    %cst_102 = arith.constant dense<0.000000e+00> : vector<2x64xf32>
    %433 = tpu.matmul %431, %347, %cst_102 {dimension_numbers = #tpu.dot_dimension_numbers<[1], [0], [0], [1], [0, 0, 1, 1], [], []>} : vector<2x16xf32>, vector<16x64xf32>, vector<2x64xf32> -> vector<2x64xf32>
    %434 = arith.addf %432, %433 : vector<2x64xf32>
    %435 = vector.extract_strided_slice %434 {offsets = [0, 0], sizes = [2, 48], strides = [1, 1]} : vector<2x64xf32> to vector<2x48xf32>
    %436 = arith.negf %435 : vector<2x48xf32>
    %437 = math.exp %436 : vector<2x48xf32>
    %cst_103 = arith.constant 1.000000e+00 : f32
    %438 = vector.broadcast %cst_103 : f32 to vector<2x48xf32>
    %439 = arith.addf %438, %437 : vector<2x48xf32>
    %440 = arith.divf %438, %439 : vector<2x48xf32>
    %441 = vector.extract_strided_slice %440 {offsets = [0, 0], sizes = [2, 16], strides = [1, 1]} : vector<2x48xf32> to vector<2x16xf32>
    %442 = vector.extract_strided_slice %440 {offsets = [0, 16], sizes = [2, 16], strides = [1, 1]} : vector<2x48xf32> to vector<2x16xf32>
    %443 = vector.extract_strided_slice %440 {offsets = [0, 32], sizes = [2, 16], strides = [1, 1]} : vector<2x48xf32> to vector<2x16xf32>
    %444 = vector.extract_strided_slice %434 {offsets = [0, 48], sizes = [2, 16], strides = [1, 1]} : vector<2x64xf32> to vector<2x16xf32>
    %445 = math.tanh %444 : vector<2x16xf32>
    %446 = arith.mulf %442, %429 : vector<2x16xf32>
    %447 = arith.mulf %441, %445 : vector<2x16xf32>
    %448 = arith.addf %446, %447 : vector<2x16xf32>
    %449 = math.tanh %448 : vector<2x16xf32>
    %450 = arith.mulf %443, %449 : vector<2x16xf32>
    %451 = vector.extract_strided_slice %353 {offsets = [10, 0], sizes = [2, 64], strides = [1, 1]} : vector<16x64xf32> to vector<2x64xf32>
    %cst_104 = arith.constant dense<0.000000e+00> : vector<2x64xf32>
    %452 = tpu.matmul %450, %347, %cst_104 {dimension_numbers = #tpu.dot_dimension_numbers<[1], [0], [0], [1], [0, 0, 1, 1], [], []>} : vector<2x16xf32>, vector<16x64xf32>, vector<2x64xf32> -> vector<2x64xf32>
    %453 = arith.addf %451, %452 : vector<2x64xf32>
    %454 = vector.extract_strided_slice %453 {offsets = [0, 0], sizes = [2, 48], strides = [1, 1]} : vector<2x64xf32> to vector<2x48xf32>
    %455 = arith.negf %454 : vector<2x48xf32>
    %456 = math.exp %455 : vector<2x48xf32>
    %cst_105 = arith.constant 1.000000e+00 : f32
    %457 = vector.broadcast %cst_105 : f32 to vector<2x48xf32>
    %458 = arith.addf %457, %456 : vector<2x48xf32>
    %459 = arith.divf %457, %458 : vector<2x48xf32>
    %460 = vector.extract_strided_slice %459 {offsets = [0, 0], sizes = [2, 16], strides = [1, 1]} : vector<2x48xf32> to vector<2x16xf32>
    %461 = vector.extract_strided_slice %459 {offsets = [0, 16], sizes = [2, 16], strides = [1, 1]} : vector<2x48xf32> to vector<2x16xf32>
    %462 = vector.extract_strided_slice %459 {offsets = [0, 32], sizes = [2, 16], strides = [1, 1]} : vector<2x48xf32> to vector<2x16xf32>
    %463 = vector.extract_strided_slice %453 {offsets = [0, 48], sizes = [2, 16], strides = [1, 1]} : vector<2x64xf32> to vector<2x16xf32>
    %464 = math.tanh %463 : vector<2x16xf32>
    %465 = arith.mulf %461, %448 : vector<2x16xf32>
    %466 = arith.mulf %460, %464 : vector<2x16xf32>
    %467 = arith.addf %465, %466 : vector<2x16xf32>
    %468 = math.tanh %467 : vector<2x16xf32>
    %469 = arith.mulf %462, %468 : vector<2x16xf32>
    %470 = vector.extract_strided_slice %353 {offsets = [12, 0], sizes = [2, 64], strides = [1, 1]} : vector<16x64xf32> to vector<2x64xf32>
    %cst_106 = arith.constant dense<0.000000e+00> : vector<2x64xf32>
    %471 = tpu.matmul %469, %347, %cst_106 {dimension_numbers = #tpu.dot_dimension_numbers<[1], [0], [0], [1], [0, 0, 1, 1], [], []>} : vector<2x16xf32>, vector<16x64xf32>, vector<2x64xf32> -> vector<2x64xf32>
    %472 = arith.addf %470, %471 : vector<2x64xf32>
    %473 = vector.extract_strided_slice %472 {offsets = [0, 0], sizes = [2, 48], strides = [1, 1]} : vector<2x64xf32> to vector<2x48xf32>
    %474 = arith.negf %473 : vector<2x48xf32>
    %475 = math.exp %474 : vector<2x48xf32>
    %cst_107 = arith.constant 1.000000e+00 : f32
    %476 = vector.broadcast %cst_107 : f32 to vector<2x48xf32>
    %477 = arith.addf %476, %475 : vector<2x48xf32>
    %478 = arith.divf %476, %477 : vector<2x48xf32>
    %479 = vector.extract_strided_slice %478 {offsets = [0, 0], sizes = [2, 16], strides = [1, 1]} : vector<2x48xf32> to vector<2x16xf32>
    %480 = vector.extract_strided_slice %478 {offsets = [0, 16], sizes = [2, 16], strides = [1, 1]} : vector<2x48xf32> to vector<2x16xf32>
    %481 = vector.extract_strided_slice %478 {offsets = [0, 32], sizes = [2, 16], strides = [1, 1]} : vector<2x48xf32> to vector<2x16xf32>
    %482 = vector.extract_strided_slice %472 {offsets = [0, 48], sizes = [2, 16], strides = [1, 1]} : vector<2x64xf32> to vector<2x16xf32>
    %483 = math.tanh %482 : vector<2x16xf32>
    %484 = arith.mulf %480, %467 : vector<2x16xf32>
    %485 = arith.mulf %479, %483 : vector<2x16xf32>
    %486 = arith.addf %484, %485 : vector<2x16xf32>
    %487 = math.tanh %486 : vector<2x16xf32>
    %488 = arith.mulf %481, %487 : vector<2x16xf32>
    %489 = vector.extract_strided_slice %353 {offsets = [14, 0], sizes = [2, 64], strides = [1, 1]} : vector<16x64xf32> to vector<2x64xf32>
    %cst_108 = arith.constant dense<0.000000e+00> : vector<2x64xf32>
    %490 = tpu.matmul %488, %347, %cst_108 {dimension_numbers = #tpu.dot_dimension_numbers<[1], [0], [0], [1], [0, 0, 1, 1], [], []>} : vector<2x16xf32>, vector<16x64xf32>, vector<2x64xf32> -> vector<2x64xf32>
    %491 = arith.addf %489, %490 : vector<2x64xf32>
    %492 = vector.extract_strided_slice %491 {offsets = [0, 0], sizes = [2, 48], strides = [1, 1]} : vector<2x64xf32> to vector<2x48xf32>
    %493 = arith.negf %492 : vector<2x48xf32>
    %494 = math.exp %493 : vector<2x48xf32>
    %cst_109 = arith.constant 1.000000e+00 : f32
    %495 = vector.broadcast %cst_109 : f32 to vector<2x48xf32>
    %496 = arith.addf %495, %494 : vector<2x48xf32>
    %497 = arith.divf %495, %496 : vector<2x48xf32>
    %498 = vector.extract_strided_slice %497 {offsets = [0, 0], sizes = [2, 16], strides = [1, 1]} : vector<2x48xf32> to vector<2x16xf32>
    %499 = vector.extract_strided_slice %497 {offsets = [0, 16], sizes = [2, 16], strides = [1, 1]} : vector<2x48xf32> to vector<2x16xf32>
    %500 = vector.extract_strided_slice %497 {offsets = [0, 32], sizes = [2, 16], strides = [1, 1]} : vector<2x48xf32> to vector<2x16xf32>
    %501 = vector.extract_strided_slice %491 {offsets = [0, 48], sizes = [2, 16], strides = [1, 1]} : vector<2x64xf32> to vector<2x16xf32>
    %502 = math.tanh %501 : vector<2x16xf32>
    %503 = arith.mulf %499, %486 : vector<2x16xf32>
    %504 = arith.mulf %498, %502 : vector<2x16xf32>
    %505 = arith.addf %503, %504 : vector<2x16xf32>
    %506 = math.tanh %505 : vector<2x16xf32>
    %507 = arith.mulf %500, %506 : vector<2x16xf32>
    %c0_110 = arith.constant 0 : index
    %c0_111 = arith.constant 0 : index
    %508 = vector.load %arg3[%c0_110, %c0_111] : memref<2x16xf32, #tpu.memory_space<vmem>>, vector<2x16xf32>
    tpu.vector_store %arg3[%c0_110, %c0_111], %507 {strides = array<i32>} : memref<2x16xf32, #tpu.memory_space<vmem>>, vector<2x16xf32>,
    return
  }
}

</mosaic_0001>

<llo_original>
// kernel: encoder_lstm_forward.1
$region0: #{encoder_lstm_forward.1}
  #allocation0 [shape = 'u32[]', space=smem, size = 0x4, offset = 0x4, fixed_abs, tag = 'smem constant byte address 0x4 - core index']
  #allocation1 [shape = 'u32[144,128]{1,0:T(1,128)}', space=vmem, size = 0x12000, scoped, tag = 'internal scratch']
  #allocation2 [shape = 'f32[16,32]{1,0:T(8,128)}', space=vmem, size = 0x2000, scoped, tag = 'scratch operand']
  %s0 = inlined_call_operand.vmem [shape: f32[16,4], index: 0, kind: input, shape index: {}]
  %s1 = inlined_call_operand.hbm [shape: f32[6,32,128], index: 1, kind: input, shape index: {}]
  %s2 = inlined_call_operand.vmem [shape: f32[3,1,128], index: 2, kind: input, shape index: {}]
  %s3 = inlined_call_operand.hbm [shape: f32[2,16], index: 3, kind: output, shape index: {}]
  %s4 = sld [smem:[#allocation0]]
  $region26: #{encoder_lstm_forward.1} parent=0
    _
  %s6 = ssub.s32 1, %s4
  %s7 = scalar_select 0, %s6, %s4
  $region1: #{encoder_lstm_forward.1} parent=0
    #allocation3 [shape = 'u8[98304]{0}', space=vmem, size = 0x18000, scoped, tag = 'input window, operand 1, single buffered']
    #allocation4 [shape = 's32[1]{0}', space=sflag, size = 0x4, scoped, tag = 'scoped memory for encoder_lstm_forward.1']
    #allocation5 [shape = 's32[1]{0}', space=sflag, size = 0x4, scoped, tag = 'scoped memory for encoder_lstm_forward.1']
    #allocation6 [shape = 'u8[1024]{0}', space=vmem, size = 0x400, scoped, tag = 'output window, operand 0, single buffered']
    %8 = vsyncpa [#allocation4], 0
    %9 = vsyncpa [#allocation5], 0
    // Predicated region
    $region2: #{encoder_lstm_forward.1} parent=1 // pred_check
      _
    $region3: #{encoder_lstm_forward.1} parent=1 // pred_check_branch
      %11 = sbr.rel (0) target = $region5
    $region4: #{encoder_lstm_forward.1} parent=1 // pred_region
      _
    $region5: #{encoder_lstm_forward.1} parent=1 // pred_fallthru
      _
    // Predicated region
    $region6: #{encoder_lstm_forward.1} parent=1 // pred_check
      _
    $region7: #{encoder_lstm_forward.1} parent=1 // pred_check_branch
      %13 = sbr.rel (0) target = $region9
    $region8: #{encoder_lstm_forward.1} parent=1 // pred_region
      %s15 = ssub.s32 3072, 3072
      %16 = vsyncadd [#allocation4], %s15
      %s17 = sshll.u32 [#allocation3], 4
      %s18 = int_to_ptr.vmem [resolvable:$true] %s17
      %23 = dma.hbm_to_vmem [thread:$0]  %s1, 3072, %s18, [#allocation4], 128, 128, 8
    $region9: #{encoder_lstm_forward.1} parent=1 // pred_fallthru
      _
    // Predicated region
    $region10: #{encoder_lstm_forward.1} parent=1 // pred_check
      _
    $region11: #{encoder_lstm_forward.1} parent=1 // pred_check_branch
      %25 = sbr.rel (0) target = $region13
    $region12: #{encoder_lstm_forward.1} parent=1 // pred_region
      _
    $region13: #{encoder_lstm_forward.1} parent=1 // pred_fallthru
      _
    // Predicated region
    $region14: #{encoder_lstm_forward.1} parent=1 // pred_check
      _
    $region15: #{encoder_lstm_forward.1} parent=1 // pred_check_branch
      %27 = sbr.rel (0) target = $region17
    $region16: #{encoder_lstm_forward.1} parent=1 // pred_region
      %28 = dma.done [#allocation4], 3072
    $region17: #{encoder_lstm_forward.1} parent=1 // pred_fallthru
      _
    %v29 = vld [vmem:[#allocation3] sm:$0xf]
    %s30 = scalar_lea.vmem [#allocation3], 32
    %v31 = vld [vmem:[%s30] sm:$0xff]
    %v32 = vld [vmem:[%s30 + $0x8] sm:$0xff]
    %v33 = vld [vmem:[%s30 + $0x10] sm:$0xff]
    %v34 = vld [vmem:[%s30 + $0x18] sm:$0xff]
    %v35 = vld [vmem:[%s2] sm:$0x1]
    %v36 = vld [vmem:[%s0] sm:$0xff]
    %v37 = vld [vmem:[%s0 + $0x8] sm:$0xff]
    %v39 = vlaneseq
    %v40 = vshrl.u32 %v39, 7
    %v41 = vsub.s32 0, %v40
    %v42 = vrot.slane %v35, %v41
    %vm44 = vcmask 31744
    %v46 = vsel %vm44, %v36, 0
    %v49 = vsel %vm44, %v37, 0
    %vm51 = vcmask 1043456
    %v53 = vsel %vm51, %v29, 0
    %55 = vmatprep.subr.mxu0 0.0
    %56 = vmatpush1.msra.mxu0 0.0
    %57 = vmatprep.subr.mxu0 0.0
    %58 = vmatpush1.msra.mxu0 0.0
    %59 = vmatprep.subr.mxu0 0.0
    %60 = vmatpush1.msra.mxu0 0.0
    %61 = vmatprep.subr.mxu0 0.0
    %62 = vmatpush1.msra.mxu0 0.0
    %63 = vmatprep.subr.mxu0 0.0
    %64 = vmatpush1.msra.mxu0 0.0
    %65 = vmatprep.subr.mxu0 0.0
    %66 = vmatpush1.msra.mxu0 0.0
    %67 = vmatprep.subr.mxu0 0.0
    %68 = vmatpush1.msra.mxu0 0.0
    %69 = vmatprep.subr.mxu0 0.0
    %70 = vmatpush1.msra.mxu0 0.0
    %71 = vmatprep.subr.mxu0 0.0
    %72 = vmatpush1.msra.mxu0 0.0
    %73 = vmatprep.subr.mxu0 0.0
    %74 = vmatpush1.msra.mxu0 0.0
    %75 = vmatprep.subr.mxu0 0.0
    %76 = vmatpush1.msra.mxu0 0.0
    %77 = vmatprep.subr.mxu0 0.0
    %78 = vmatpush1.msra.mxu0 0.0
    %79 = vmatprep.subr.mxu0 0.0
    %80 = vmatpush1.msra.mxu0 0.0
    %81 = vmatprep.subr.mxu0 0.0
    %82 = vmatpush1.msra.mxu0 0.0
    %83 = vmatprep.subr.mxu0 0.0
    %84 = vmatpush1.msra.mxu0 0.0
    %85 = vmatprep.subr.mxu0 0.0
    %86 = vmatpush1.msra.mxu0 %v53
    %87 = vmatprep.subr.mxu0 0.0
    %88 = vmatpush2.msra.mxu0 0.0
    %89 = vmatprep.subr.mxu0 0.0
    %90 = vmatpush2.msra.mxu0 0.0
    %91 = vmatprep.subr.mxu0 0.0
    %92 = vmatpush2.msra.mxu0 0.0
    %93 = vmatprep.subr.mxu0 0.0
    %94 = vmatpush2.msra.mxu0 0.0
    %95 = vmatprep.subr.mxu0 0.0
    %96 = vmatpush2.msra.mxu0 0.0
    %97 = vmatprep.subr.mxu0 0.0
    %98 = vmatpush2.msra.mxu0 0.0
    %99 = vmatprep.subr.mxu0 0.0
    %100 = vmatpush2.msra.mxu0 0.0
    %101 = vmatprep.subr.mxu0 0.0
    %102 = vmatpush2.msra.mxu0 0.0
    %103 = vmatprep.subr.mxu0 0.0
    %104 = vmatpush2.msra.mxu0 0.0
    %105 = vmatprep.subr.mxu0 0.0
    %106 = vmatpush2.msra.mxu0 0.0
    %107 = vmatprep.subr.mxu0 0.0
    %108 = vmatpush2.msra.mxu0 0.0
    %109 = vmatprep.subr.mxu0 0.0
    %110 = vmatpush2.msra.mxu0 0.0
    %111 = vmatprep.subr.mxu0 0.0
    %112 = vmatpush2.msra.mxu0 0.0
    %113 = vmatprep.subr.mxu0 0.0
    %114 = vmatpush2.msra.mxu0 0.0
    %115 = vmatprep.subr.mxu0 0.0
    %116 = vmatpush2.msra.mxu0 0.0
    %117 = vmatprep.subr.mxu0 0.0
    %118 = vmatpush2.msra.mxu0 0.0
    %119 = vmatprep.mubr.f32.mxu0 0.0
    %120 = vmatmul.mubr.f32.gmra.mxu0 %v46
    %v121 = vpop.f32.mrf.mxu0
    %v122 = vadd.f32 %v42, %v121
    %v123 = vpop.f32.mrf.mxu0
    %124 = vmatprep.mubr.f32.mxu0 0.0
    %125 = vmatmul.mubr.f32.gmra.mxu0 %v49
    %v126 = vpop.f32.mrf.mxu0
    %v127 = vadd.f32 %v42, %v126
    %v128 = vpop.f32.mrf.mxu0
    %129 = vdwg.mxu0
    %vm130 = vcmask 261120
    %v132 = vsel %vm130, 0.0, 0
    %134 = vmatprep.subr.mxu0 0.0
    %135 = vmatpush1.msra.mxu0 0.0
    %136 = vmatprep.subr.mxu0 0.0
    %137 = vmatpush1.msra.mxu0 0.0
    %138 = vmatprep.subr.mxu0 0.0
    %139 = vmatpush1.msra.mxu0 0.0
    %140 = vmatprep.subr.mxu0 0.0
    %141 = vmatpush1.msra.mxu0 0.0
    %142 = vmatprep.subr.mxu0 0.0
    %143 = vmatpush1.msra.mxu0 0.0
    %144 = vmatprep.subr.mxu0 0.0
    %145 = vmatpush1.msra.mxu0 0.0
    %146 = vmatprep.subr.mxu0 0.0
    %147 = vmatpush1.msra.mxu0 0.0
    %148 = vmatprep.subr.mxu0 0.0
    %149 = vmatpush1.msra.mxu0 0.0
    %150 = vmatprep.subr.mxu0 0.0
    %151 = vmatpush1.msra.mxu0 0.0
    %152 = vmatprep.subr.mxu0 0.0
    %153 = vmatpush1.msra.mxu0 0.0
    %154 = vmatprep.subr.mxu0 0.0
    %155 = vmatpush1.msra.mxu0 0.0
    %156 = vmatprep.subr.mxu0 0.0
    %157 = vmatpush1.msra.mxu0 0.0
    %158 = vmatprep.subr.mxu0 0.0
    %159 = vmatpush1.msra.mxu0 %v34
    %160 = vmatprep.subr.mxu0 0.0
    %161 = vmatpush1.msra.mxu0 %v33
    %162 = vmatprep.subr.mxu0 0.0
    %163 = vmatpush1.msra.mxu0 %v32
    %164 = vmatprep.subr.mxu0 0.0
    %165 = vmatpush1.msra.mxu0 %v31
    %166 = vmatprep.subr.mxu0 0.0
    %167 = vmatpush2.msra.mxu0 0.0
    %168 = vmatprep.subr.mxu0 0.0
    %169 = vmatpush2.msra.mxu0 0.0
    %170 = vmatprep.subr.mxu0 0.0
    %171 = vmatpush2.msra.mxu0 0.0
    %172 = vmatprep.subr.mxu0 0.0
    %173 = vmatpush2.msra.mxu0 0.0
    %174 = vmatprep.subr.mxu0 0.0
    %175 = vmatpush2.msra.mxu0 0.0
    %176 = vmatprep.subr.mxu0 0.0
    %177 = vmatpush2.msra.mxu0 0.0
    %178 = vmatprep.subr.mxu0 0.0
    %179 = vmatpush2.msra.mxu0 0.0
    %180 = vmatprep.subr.mxu0 0.0
    %181 = vmatpush2.msra.mxu0 0.0
    %182 = vmatprep.subr.mxu0 0.0
    %183 = vmatpush2.msra.mxu0 0.0
    %184 = vmatprep.subr.mxu0 0.0
    %185 = vmatpush2.msra.mxu0 0.0
    %186 = vmatprep.subr.mxu0 0.0
    %187 = vmatpush2.msra.mxu0 0.0
    %188 = vmatprep.subr.mxu0 0.0
    %189 = vmatpush2.msra.mxu0 0.0
    %190 = vmatprep.subr.mxu0 0.0
    %191 = vmatpush2.msra.mxu0 0.0
    %192 = vmatprep.subr.mxu0 0.0
    %193 = vmatpush2.msra.mxu0 0.0
    %194 = vmatprep.subr.mxu0 0.0
    %195 = vmatpush2.msra.mxu0 0.0
    %196 = vmatprep.subr.mxu0 0.0
    %197 = vmatpush2.msra.mxu0 0.0
    %198 = vmatprep.mubr.f32.mxu0 0.0
    %199 = vmatmul.mubr.f32.gmra.mxu0 %v132
    %v200 = vpop.f32.mrf.mxu0
    %v201 = vadd.f32 0.0, %v200
    %v202 = vpop.f32.mrf.mxu0
    %203 = vdwg.mxu0
    %v204 = vadd.f32 %v122, %v201
    %v205 = vxor.u32 %v204, 2147483648
    %v206 = vmul.f32 %v205, 1.442695
    %v207 = vpow.pop %v206
    %v208 = vadd.f32 %v207, 1.0
    %v209 = vrcp.pop %v208
    %v210 = vmul.f32 1.0, %v209
    %v211 = vtanh.pop %v204
    %v212 = vmul.f32 %v210, 0.0
    %214 = vrot.lane.b32.xlu0 %v211, 32
    %v215 = vpop.permute.xlu0 %214
    %v217 = vmul.f32 %v210, %v215
    %219 = vrot.lane.b32.xlu0 %v217, 32
    %v220 = vpop.permute.xlu0 %219
    %v222 = vadd.f32 %v212, %v220
    %v223 = vtanh.pop %v222
    %225 = vrot.lane.b32.xlu0 %v223, 32
    %v226 = vpop.permute.xlu0 %225
    %v228 = vmul.f32 %v210, %v226
    %230 = vrot.lane.b32.xlu0 %v228, 64
    %v231 = vpop.permute.xlu0 %230
    %vm233 = vcmask 254976
    %234 = vst.msk [vmem:[#allocation2] sm:$0x3] %vm233, %v231
    %v235 = vsel %vm130, %v231, 0
    %237 = vmatprep.subr.mxu0 0.0
    %238 = vmatpush1.msra.mxu0 0.0
    %239 = vmatprep.subr.mxu0 0.0
    %240 = vmatpush1.msra.mxu0 0.0
    %241 = vmatprep.subr.mxu0 0.0
    %242 = vmatpush1.msra.mxu0 0.0
    %243 = vmatprep.subr.mxu0 0.0
    %244 = vmatpush1.msra.mxu0 0.0
    %245 = vmatprep.subr.mxu0 0.0
    %246 = vmatpush1.msra.mxu0 0.0
    %247 = vmatprep.subr.mxu0 0.0
    %248 = vmatpush1.msra.mxu0 0.0
    %249 = vmatprep.subr.mxu0 0.0
    %250 = vmatpush1.msra.mxu0 0.0
    %251 = vmatprep.subr.mxu0 0.0
    %252 = vmatpush1.msra.mxu0 0.0
    %253 = vmatprep.subr.mxu0 0.0
    %254 = vmatpush1.msra.mxu0 0.0
    %255 = vmatprep.subr.mxu0 0.0
    %256 = vmatpush1.msra.mxu0 0.0
    %257 = vmatprep.subr.mxu0 0.0
    %258 = vmatpush1.msra.mxu0 0.0
    %259 = vmatprep.subr.mxu0 0.0
    %260 = vmatpush1.msra.mxu0 0.0
    %261 = vmatprep.subr.mxu0 0.0
    %262 = vmatpush1.msra.mxu0 %v34
    %263 = vmatprep.subr.mxu0 0.0
    %264 = vmatpush1.msra.mxu0 %v33
    %265 = vmatprep.subr.mxu0 0.0
    %266 = vmatpush1.msra.mxu0 %v32
    %267 = vmatprep.subr.mxu0 0.0
    %268 = vmatpush1.msra.mxu0 %v31
    %269 = vmatprep.subr.mxu0 0.0
    %270 = vmatpush2.msra.mxu0 0.0
    %271 = vmatprep.subr.mxu0 0.0
    %272 = vmatpush2.msra.mxu0 0.0
    %273 = vmatprep.subr.mxu0 0.0
    %274 = vmatpush2.msra.mxu0 0.0
    %275 = vmatprep.subr.mxu0 0.0
    %276 = vmatpush2.msra.mxu0 0.0
    %277 = vmatprep.subr.mxu0 0.0
    %278 = vmatpush2.msra.mxu0 0.0
    %279 = vmatprep.subr.mxu0 0.0
    %280 = vmatpush2.msra.mxu0 0.0
    %281 = vmatprep.subr.mxu0 0.0
    %282 = vmatpush2.msra.mxu0 0.0
    %283 = vmatprep.subr.mxu0 0.0
    %284 = vmatpush2.msra.mxu0 0.0
    %285 = vmatprep.subr.mxu0 0.0
    %286 = vmatpush2.msra.mxu0 0.0
    %287 = vmatprep.subr.mxu0 0.0
    %288 = vmatpush2.msra.mxu0 0.0
    %289 = vmatprep.subr.mxu0 0.0
    %290 = vmatpush2.msra.mxu0 0.0
    %291 = vmatprep.subr.mxu0 0.0
    %292 = vmatpush2.msra.mxu0 0.0
    %293 = vmatprep.subr.mxu0 0.0
    %294 = vmatpush2.msra.mxu0 0.0
    %295 = vmatprep.subr.mxu0 0.0
    %296 = vmatpush2.msra.mxu0 0.0
    %297 = vmatprep.subr.mxu0 0.0
    %298 = vmatpush2.msra.mxu0 0.0
    %299 = vmatprep.subr.mxu0 0.0
    %300 = vmatpush2.msra.mxu0 0.0
    %301 = vmatprep.mubr.f32.mxu0 0.0
    %302 = vmatmul.mubr.f32.gmra.mxu0 %v235
    %v303 = vpop.f32.mrf.mxu0
    %v304 = vadd.f32 0.0, %v303
    %v305 = vpop.f32.mrf.mxu0
    %306 = vdwg.mxu0
    %v308 = vrot.slane %v304, 6
    %v310 = vadd.f32 %v122, %v308
    %v311 = vxor.u32 %v310, 2147483648
    %v312 = vmul.f32 %v311, 1.442695
    %v313 = vpow.pop %v312
    %v314 = vadd.f32 %v313, 1.0
    %v315 = vrcp.pop %v314
    %v316 = vmul.f32 1.0, %v315
    %v317 = vtanh.pop %v310
    %v319 = vrot.slane %v222, 6
    %v321 = vmul.f32 %v316, %v319
    %323 = vrot.lane.b32.xlu0 %v317, 32
    %v324 = vpop.permute.xlu0 %323
    %v326 = vmul.f32 %v316, %v324
    %328 = vrot.lane.b32.xlu0 %v326, 32
    %v329 = vpop.permute.xlu0 %328
    %v331 = vadd.f32 %v321, %v329
    %v332 = vtanh.pop %v331
    %334 = vrot.lane.b32.xlu0 %v332, 32
    %v335 = vpop.permute.xlu0 %334
    %v337 = vmul.f32 %v316, %v335
    %339 = vrot.lane.b32.xlu0 %v337, 64
    %v340 = vpop.permute.xlu0 %339
    %vm342 = vcmask 257026
    %343 = vst.msk [vmem:[#allocation2] sm:$0xc] %vm342, %v340
    %v344 = vrot.slane %v337, 2
    %345 = vrot.lane.b32.xlu0 %v344, 64
    %v346 = vpop.permute.xlu0 %345
    %v347 = vsel %vm130, %v346, 0
    %349 = vmatprep.subr.mxu0 0.0
    %350 = vmatpush1.msra.mxu0 0.0
    %351 = vmatprep.subr.mxu0 0.0
    %352 = vmatpush1.msra.mxu0 0.0
    %353 = vmatprep.subr.mxu0 0.0
    %354 = vmatpush1.msra.mxu0 0.0
    %355 = vmatprep.subr.mxu0 0.0
    %356 = vmatpush1.msra.mxu0 0.0
    %357 = vmatprep.subr.mxu0 0.0
    %358 = vmatpush1.msra.mxu0 0.0
    %359 = vmatprep.subr.mxu0 0.0
    %360 = vmatpush1.msra.mxu0 0.0
    %361 = vmatprep.subr.mxu0 0.0
    %362 = vmatpush1.msra.mxu0 0.0
    %363 = vmatprep.subr.mxu0 0.0
    %364 = vmatpush1.msra.mxu0 0.0
    %365 = vmatprep.subr.mxu0 0.0
    %366 = vmatpush1.msra.mxu0 0.0
    %367 = vmatprep.subr.mxu0 0.0
    %368 = vmatpush1.msra.mxu0 0.0
    %369 = vmatprep.subr.mxu0 0.0
    %370 = vmatpush1.msra.mxu0 0.0
    %371 = vmatprep.subr.mxu0 0.0
    %372 = vmatpush1.msra.mxu0 0.0
    %373 = vmatprep.subr.mxu0 0.0
    %374 = vmatpush1.msra.mxu0 %v34
    %375 = vmatprep.subr.mxu0 0.0
    %376 = vmatpush1.msra.mxu0 %v33
    %377 = vmatprep.subr.mxu0 0.0
    %378 = vmatpush1.msra.mxu0 %v32
    %379 = vmatprep.subr.mxu0 0.0
    %380 = vmatpush1.msra.mxu0 %v31
    %381 = vmatprep.subr.mxu0 0.0
    %382 = vmatpush2.msra.mxu0 0.0
    %383 = vmatprep.subr.mxu0 0.0
    %384 = vmatpush2.msra.mxu0 0.0
    %385 = vmatprep.subr.mxu0 0.0
    %386 = vmatpush2.msra.mxu0 0.0
    %387 = vmatprep.subr.mxu0 0.0
    %388 = vmatpush2.msra.mxu0 0.0
    %389 = vmatprep.subr.mxu0 0.0
    %390 = vmatpush2.msra.mxu0 0.0
    %391 = vmatprep.subr.mxu0 0.0
    %392 = vmatpush2.msra.mxu0 0.0
    %393 = vmatprep.subr.mxu0 0.0
    %394 = vmatpush2.msra.mxu0 0.0
    %395 = vmatprep.subr.mxu0 0.0
    %396 = vmatpush2.msra.mxu0 0.0
    %397 = vmatprep.subr.mxu0 0.0
    %398 = vmatpush2.msra.mxu0 0.0
    %399 = vmatprep.subr.mxu0 0.0
    %400 = vmatpush2.msra.mxu0 0.0
    %401 = vmatprep.subr.mxu0 0.0
    %402 = vmatpush2.msra.mxu0 0.0
    %403 = vmatprep.subr.mxu0 0.0
    %404 = vmatpush2.msra.mxu0 0.0
    %405 = vmatprep.subr.mxu0 0.0
    %406 = vmatpush2.msra.mxu0 0.0
    %407 = vmatprep.subr.mxu0 0.0
    %408 = vmatpush2.msra.mxu0 0.0
    %409 = vmatprep.subr.mxu0 0.0
    %410 = vmatpush2.msra.mxu0 0.0
    %411 = vmatprep.subr.mxu0 0.0
    %412 = vmatpush2.msra.mxu0 0.0
    %413 = vmatprep.mubr.f32.mxu0 0.0
    %414 = vmatmul.mubr.f32.gmra.mxu0 %v347
    %v415 = vpop.f32.mrf.mxu0
    %v416 = vadd.f32 0.0, %v415
    %v417 = vpop.f32.mrf.mxu0
    %418 = vdwg.mxu0
    %v420 = vrot.slane %v416, 4
    %v422 = vadd.f32 %v122, %v420
    %v423 = vxor.u32 %v422, 2147483648
    %v424 = vmul.f32 %v423, 1.442695
    %v425 = vpow.pop %v424
    %v426 = vadd.f32 %v425, 1.0
    %v427 = vrcp.pop %v426
    %v428 = vmul.f32 1.0, %v427
    %v429 = vtanh.pop %v422
    %v431 = vrot.slane %v331, 6
    %v433 = vmul.f32 %v428, %v431
    %435 = vrot.lane.b32.xlu0 %v429, 32
    %v436 = vpop.permute.xlu0 %435
    %v438 = vmul.f32 %v428, %v436
    %440 = vrot.lane.b32.xlu0 %v438, 32
    %v441 = vpop.permute.xlu0 %440
    %v443 = vadd.f32 %v433, %v441
    %v444 = vtanh.pop %v443
    %446 = vrot.lane.b32.xlu0 %v444, 32
    %v447 = vpop.permute.xlu0 %446
    %v449 = vmul.f32 %v428, %v447
    %451 = vrot.lane.b32.xlu0 %v449, 64
    %v452 = vpop.permute.xlu0 %451
    %vm454 = vcmask 259076
    %455 = vst.msk [vmem:[#allocation2] sm:$0x30] %vm454, %v452
    %v456 = vrot.slane %v449, 4
    %457 = vrot.lane.b32.xlu0 %v456, 64
    %v458 = vpop.permute.xlu0 %457
    %v459 = vsel %vm130, %v458, 0
    %461 = vmatprep.subr.mxu0 0.0
    %462 = vmatpush1.msra.mxu0 0.0
    %463 = vmatprep.subr.mxu0 0.0
    %464 = vmatpush1.msra.mxu0 0.0
    %465 = vmatprep.subr.mxu0 0.0
    %466 = vmatpush1.msra.mxu0 0.0
    %467 = vmatprep.subr.mxu0 0.0
    %468 = vmatpush1.msra.mxu0 0.0
    %469 = vmatprep.subr.mxu0 0.0
    %470 = vmatpush1.msra.mxu0 0.0
    %471 = vmatprep.subr.mxu0 0.0
    %472 = vmatpush1.msra.mxu0 0.0
    %473 = vmatprep.subr.mxu0 0.0
    %474 = vmatpush1.msra.mxu0 0.0
    %475 = vmatprep.subr.mxu0 0.0
    %476 = vmatpush1.msra.mxu0 0.0
    %477 = vmatprep.subr.mxu0 0.0
    %478 = vmatpush1.msra.mxu0 0.0
    %479 = vmatprep.subr.mxu0 0.0
    %480 = vmatpush1.msra.mxu0 0.0
    %481 = vmatprep.subr.mxu0 0.0
    %482 = vmatpush1.msra.mxu0 0.0
    %483 = vmatprep.subr.mxu0 0.0
    %484 = vmatpush1.msra.mxu0 0.0
    %485 = vmatprep.subr.mxu0 0.0
    %486 = vmatpush1.msra.mxu0 %v34
    %487 = vmatprep.subr.mxu0 0.0
    %488 = vmatpush1.msra.mxu0 %v33
    %489 = vmatprep.subr.mxu0 0.0
    %490 = vmatpush1.msra.mxu0 %v32
    %491 = vmatprep.subr.mxu0 0.0
    %492 = vmatpush1.msra.mxu0 %v31
    %493 = vmatprep.subr.mxu0 0.0
    %494 = vmatpush2.msra.mxu0 0.0
    %495 = vmatprep.subr.mxu0 0.0
    %496 = vmatpush2.msra.mxu0 0.0
    %497 = vmatprep.subr.mxu0 0.0
    %498 = vmatpush2.msra.mxu0 0.0
    %499 = vmatprep.subr.mxu0 0.0
    %500 = vmatpush2.msra.mxu0 0.0
    %501 = vmatprep.subr.mxu0 0.0
    %502 = vmatpush2.msra.mxu0 0.0
    %503 = vmatprep.subr.mxu0 0.0
    %504 = vmatpush2.msra.mxu0 0.0
    %505 = vmatprep.subr.mxu0 0.0
    %506 = vmatpush2.msra.mxu0 0.0
    %507 = vmatprep.subr.mxu0 0.0
    %508 = vmatpush2.msra.mxu0 0.0
    %509 = vmatprep.subr.mxu0 0.0
    %510 = vmatpush2.msra.mxu0 0.0
    %511 = vmatprep.subr.mxu0 0.0
    %512 = vmatpush2.msra.mxu0 0.0
    %513 = vmatprep.subr.mxu0 0.0
    %514 = vmatpush2.msra.mxu0 0.0
    %515 = vmatprep.subr.mxu0 0.0
    %516 = vmatpush2.msra.mxu0 0.0
    %517 = vmatprep.subr.mxu0 0.0
    %518 = vmatpush2.msra.mxu0 0.0
    %519 = vmatprep.subr.mxu0 0.0
    %520 = vmatpush2.msra.mxu0 0.0
    %521 = vmatprep.subr.mxu0 0.0
    %522 = vmatpush2.msra.mxu0 0.0
    %523 = vmatprep.subr.mxu0 0.0
    %524 = vmatpush2.msra.mxu0 0.0
    %525 = vmatprep.mubr.f32.mxu0 0.0
    %526 = vmatmul.mubr.f32.gmra.mxu0 %v459
    %v527 = vpop.f32.mrf.mxu0
    %v528 = vadd.f32 0.0, %v527
    %v529 = vpop.f32.mrf.mxu0
    %530 = vdwg.mxu0
    %v532 = vrot.slane %v528, 2
    %v534 = vadd.f32 %v122, %v532
    %v535 = vxor.u32 %v534, 2147483648
    %v536 = vmul.f32 %v535, 1.442695
    %v537 = vpow.pop %v536
    %v538 = vadd.f32 %v537, 1.0
    %v539 = vrcp.pop %v538
    %v540 = vmul.f32 1.0, %v539
    %v541 = vtanh.pop %v534
    %v543 = vrot.slane %v443, 6
    %v545 = vmul.f32 %v540, %v543
    %547 = vrot.lane.b32.xlu0 %v541, 32
    %v548 = vpop.permute.xlu0 %547
    %v550 = vmul.f32 %v540, %v548
    %552 = vrot.lane.b32.xlu0 %v550, 32
    %v553 = vpop.permute.xlu0 %552
    %v555 = vadd.f32 %v545, %v553
    %v556 = vtanh.pop %v555
    %558 = vrot.lane.b32.xlu0 %v556, 32
    %v559 = vpop.permute.xlu0 %558
    %v561 = vmul.f32 %v540, %v559
    %563 = vrot.lane.b32.xlu0 %v561, 64
    %v564 = vpop.permute.xlu0 %563
    %vm566 = vcmask 261126
    %567 = vst.msk [vmem:[#allocation2] sm:$0xc0] %vm566, %v564
    %v568 = vrot.slane %v561, 6
    %569 = vrot.lane.b32.xlu0 %v568, 64
    %v570 = vpop.permute.xlu0 %569
    %v571 = vsel %vm130, %v570, 0
    %573 = vmatprep.subr.mxu0 0.0
    %574 = vmatpush1.msra.mxu0 0.0
    %575 = vmatprep.subr.mxu0 0.0
    %576 = vmatpush1.msra.mxu0 0.0
    %577 = vmatprep.subr.mxu0 0.0
    %578 = vmatpush1.msra.mxu0 0.0
    %579 = vmatprep.subr.mxu0 0.0
    %580 = vmatpush1.msra.mxu0 0.0
    %581 = vmatprep.subr.mxu0 0.0
    %582 = vmatpush1.msra.mxu0 0.0
    %583 = vmatprep.subr.mxu0 0.0
    %584 = vmatpush1.msra.mxu0 0.0
    %585 = vmatprep.subr.mxu0 0.0
    %586 = vmatpush1.msra.mxu0 0.0
    %587 = vmatprep.subr.mxu0 0.0
    %588 = vmatpush1.msra.mxu0 0.0
    %589 = vmatprep.subr.mxu0 0.0
    %590 = vmatpush1.msra.mxu0 0.0
    %591 = vmatprep.subr.mxu0 0.0
    %592 = vmatpush1.msra.mxu0 0.0
    %593 = vmatprep.subr.mxu0 0.0
    %594 = vmatpush1.msra.mxu0 0.0
    %595 = vmatprep.subr.mxu0 0.0
    %596 = vmatpush1.msra.mxu0 0.0
    %597 = vmatprep.subr.mxu0 0.0
    %598 = vmatpush1.msra.mxu0 %v34
    %599 = vmatprep.subr.mxu0 0.0
    %600 = vmatpush1.msra.mxu0 %v33
    %601 = vmatprep.subr.mxu0 0.0
    %602 = vmatpush1.msra.mxu0 %v32
    %603 = vmatprep.subr.mxu0 0.0
    %604 = vmatpush1.msra.mxu0 %v31
    %605 = vmatprep.subr.mxu0 0.0
    %606 = vmatpush2.msra.mxu0 0.0
    %607 = vmatprep.subr.mxu0 0.0
    %608 = vmatpush2.msra.mxu0 0.0
    %609 = vmatprep.subr.mxu0 0.0
    %610 = vmatpush2.msra.mxu0 0.0
    %611 = vmatprep.subr.mxu0 0.0
    %612 = vmatpush2.msra.mxu0 0.0
    %613 = vmatprep.subr.mxu0 0.0
    %614 = vmatpush2.msra.mxu0 0.0
    %615 = vmatprep.subr.mxu0 0.0
    %616 = vmatpush2.msra.mxu0 0.0
    %617 = vmatprep.subr.mxu0 0.0
    %618 = vmatpush2.msra.mxu0 0.0
    %619 = vmatprep.subr.mxu0 0.0
    %620 = vmatpush2.msra.mxu0 0.0
    %621 = vmatprep.subr.mxu0 0.0
    %622 = vmatpush2.msra.mxu0 0.0
    %623 = vmatprep.subr.mxu0 0.0
    %624 = vmatpush2.msra.mxu0 0.0
    %625 = vmatprep.subr.mxu0 0.0
    %626 = vmatpush2.msra.mxu0 0.0
    %627 = vmatprep.subr.mxu0 0.0
    %628 = vmatpush2.msra.mxu0 0.0
    %629 = vmatprep.subr.mxu0 0.0
    %630 = vmatpush2.msra.mxu0 0.0
    %631 = vmatprep.subr.mxu0 0.0
    %632 = vmatpush2.msra.mxu0 0.0
    %633 = vmatprep.subr.mxu0 0.0
    %634 = vmatpush2.msra.mxu0 0.0
    %635 = vmatprep.subr.mxu0 0.0
    %636 = vmatpush2.msra.mxu0 0.0
    %637 = vmatprep.mubr.f32.mxu0 0.0
    %638 = vmatmul.mubr.f32.gmra.mxu0 %v571
    %v639 = vpop.f32.mrf.mxu0
    %v640 = vadd.f32 0.0, %v639
    %v641 = vpop.f32.mrf.mxu0
    %642 = vdwg.mxu0
    %v643 = vadd.f32 %v127, %v640
    %v644 = vxor.u32 %v643, 2147483648
    %v645 = vmul.f32 %v644, 1.442695
    %v646 = vpow.pop %v645
    %v647 = vadd.f32 %v646, 1.0
    %v648 = vrcp.pop %v647
    %v649 = vmul.f32 1.0, %v648
    %v650 = vtanh.pop %v643
    %v652 = vrot.slane %v555, 6
    %v654 = vmul.f32 %v649, %v652
    %656 = vrot.lane.b32.xlu0 %v650, 32
    %v657 = vpop.permute.xlu0 %656
    %v659 = vmul.f32 %v649, %v657
    %661 = vrot.lane.b32.xlu0 %v659, 32
    %v662 = vpop.permute.xlu0 %661
    %v664 = vadd.f32 %v654, %v662
    %v665 = vtanh.pop %v664
    %667 = vrot.lane.b32.xlu0 %v665, 32
    %v668 = vpop.permute.xlu0 %667
    %v670 = vmul.f32 %v649, %v668
    %672 = vrot.lane.b32.xlu0 %v670, 64
    %v673 = vpop.permute.xlu0 %672
    %675 = vst.msk [vmem:[#allocation2 + $0x8] sm:$0x3] %vm233, %v673
    %v676 = vsel %vm130, %v673, 0
    %678 = vmatprep.subr.mxu0 0.0
    %679 = vmatpush1.msra.mxu0 0.0
    %680 = vmatprep.subr.mxu0 0.0
    %681 = vmatpush1.msra.mxu0 0.0
    %682 = vmatprep.subr.mxu0 0.0
    %683 = vmatpush1.msra.mxu0 0.0
    %684 = vmatprep.subr.mxu0 0.0
    %685 = vmatpush1.msra.mxu0 0.0
    %686 = vmatprep.subr.mxu0 0.0
    %687 = vmatpush1.msra.mxu0 0.0
    %688 = vmatprep.subr.mxu0 0.0
    %689 = vmatpush1.msra.mxu0 0.0
    %690 = vmatprep.subr.mxu0 0.0
    %691 = vmatpush1.msra.mxu0 0.0
    %692 = vmatprep.subr.mxu0 0.0
    %693 = vmatpush1.msra.mxu0 0.0
    %694 = vmatprep.subr.mxu0 0.0
    %695 = vmatpush1.msra.mxu0 0.0
    %696 = vmatprep.subr.mxu0 0.0
    %697 = vmatpush1.msra.mxu0 0.0
    %698 = vmatprep.subr.mxu0 0.0
    %699 = vmatpush1.msra.mxu0 0.0
    %700 = vmatprep.subr.mxu0 0.0
    %701 = vmatpush1.msra.mxu0 0.0
    %702 = vmatprep.subr.mxu0 0.0
    %703 = vmatpush1.msra.mxu0 %v34
    %704 = vmatprep.subr.mxu0 0.0
    %705 = vmatpush1.msra.mxu0 %v33
    %706 = vmatprep.subr.mxu0 0.0
    %707 = vmatpush1.msra.mxu0 %v32
    %708 = vmatprep.subr.mxu0 0.0
    %709 = vmatpush1.msra.mxu0 %v31
    %710 = vmatprep.subr.mxu0 0.0
    %711 = vmatpush2.msra.mxu0 0.0
    %712 = vmatprep.subr.mxu0 0.0
    %713 = vmatpush2.msra.mxu0 0.0
    %714 = vmatprep.subr.mxu0 0.0
    %715 = vmatpush2.msra.mxu0 0.0
    %716 = vmatprep.subr.mxu0 0.0
    %717 = vmatpush2.msra.mxu0 0.0
    %718 = vmatprep.subr.mxu0 0.0
    %719 = vmatpush2.msra.mxu0 0.0
    %720 = vmatprep.subr.mxu0 0.0
    %721 = vmatpush2.msra.mxu0 0.0
    %722 = vmatprep.subr.mxu0 0.0
    %723 = vmatpush2.msra.mxu0 0.0
    %724 = vmatprep.subr.mxu0 0.0
    %725 = vmatpush2.msra.mxu0 0.0
    %726 = vmatprep.subr.mxu0 0.0
    %727 = vmatpush2.msra.mxu0 0.0
    %728 = vmatprep.subr.mxu0 0.0
    %729 = vmatpush2.msra.mxu0 0.0
    %730 = vmatprep.subr.mxu0 0.0
    %731 = vmatpush2.msra.mxu0 0.0
    %732 = vmatprep.subr.mxu0 0.0
    %733 = vmatpush2.msra.mxu0 0.0
    %734 = vmatprep.subr.mxu0 0.0
    %735 = vmatpush2.msra.mxu0 0.0
    %736 = vmatprep.subr.mxu0 0.0
    %737 = vmatpush2.msra.mxu0 0.0
    %738 = vmatprep.subr.mxu0 0.0
    %739 = vmatpush2.msra.mxu0 0.0
    %740 = vmatprep.subr.mxu0 0.0
    %741 = vmatpush2.msra.mxu0 0.0
    %742 = vmatprep.mubr.f32.mxu0 0.0
    %743 = vmatmul.mubr.f32.gmra.mxu0 %v676
    %v744 = vpop.f32.mrf.mxu0
    %v745 = vadd.f32 0.0, %v744
    %v746 = vpop.f32.mrf.mxu0
    %747 = vdwg.mxu0
    %v749 = vrot.slane %v745, 6
    %v751 = vadd.f32 %v127, %v749
    %v752 = vxor.u32 %v751, 2147483648
    %v753 = vmul.f32 %v752, 1.442695
    %v754 = vpow.pop %v753
    %v755 = vadd.f32 %v754, 1.0
    %v756 = vrcp.pop %v755
    %v757 = vmul.f32 1.0, %v756
    %v758 = vtanh.pop %v751
    %v760 = vrot.slane %v664, 6
    %v762 = vmul.f32 %v757, %v760
    %764 = vrot.lane.b32.xlu0 %v758, 32
    %v765 = vpop.permute.xlu0 %764
    %v767 = vmul.f32 %v757, %v765
    %769 = vrot.lane.b32.xlu0 %v767, 32
    %v770 = vpop.permute.xlu0 %769
    %v772 = vadd.f32 %v762, %v770
    %v773 = vtanh.pop %v772
    %775 = vrot.lane.b32.xlu0 %v773, 32
    %v776 = vpop.permute.xlu0 %775
    %v778 = vmul.f32 %v757, %v776
    %780 = vrot.lane.b32.xlu0 %v778, 64
    %v781 = vpop.permute.xlu0 %780
    %783 = vst.msk [vmem:[#allocation2 + $0x8] sm:$0xc] %vm342, %v781
    %v784 = vrot.slane %v778, 2
    %785 = vrot.lane.b32.xlu0 %v784, 64
    %v786 = vpop.permute.xlu0 %785
    %v787 = vsel %vm130, %v786, 0
    %789 = vmatprep.subr.mxu0 0.0
    %790 = vmatpush1.msra.mxu0 0.0
    %791 = vmatprep.subr.mxu0 0.0
    %792 = vmatpush1.msra.mxu0 0.0
    %793 = vmatprep.subr.mxu0 0.0
    %794 = vmatpush1.msra.mxu0 0.0
    %795 = vmatprep.subr.mxu0 0.0
    %796 = vmatpush1.msra.mxu0 0.0
    %797 = vmatprep.subr.mxu0 0.0
    %798 = vmatpush1.msra.mxu0 0.0
    %799 = vmatprep.subr.mxu0 0.0
    %800 = vmatpush1.msra.mxu0 0.0
    %801 = vmatprep.subr.mxu0 0.0
    %802 = vmatpush1.msra.mxu0 0.0
    %803 = vmatprep.subr.mxu0 0.0
    %804 = vmatpush1.msra.mxu0 0.0
    %805 = vmatprep.subr.mxu0 0.0
    %806 = vmatpush1.msra.mxu0 0.0
    %807 = vmatprep.subr.mxu0 0.0
    %808 = vmatpush1.msra.mxu0 0.0
    %809 = vmatprep.subr.mxu0 0.0
    %810 = vmatpush1.msra.mxu0 0.0
    %811 = vmatprep.subr.mxu0 0.0
    %812 = vmatpush1.msra.mxu0 0.0
    %813 = vmatprep.subr.mxu0 0.0
    %814 = vmatpush1.msra.mxu0 %v34
    %815 = vmatprep.subr.mxu0 0.0
    %816 = vmatpush1.msra.mxu0 %v33
    %817 = vmatprep.subr.mxu0 0.0
    %818 = vmatpush1.msra.mxu0 %v32
    %819 = vmatprep.subr.mxu0 0.0
    %820 = vmatpush1.msra.mxu0 %v31
    %821 = vmatprep.subr.mxu0 0.0
    %822 = vmatpush2.msra.mxu0 0.0
    %823 = vmatprep.subr.mxu0 0.0
    %824 = vmatpush2.msra.mxu0 0.0
    %825 = vmatprep.subr.mxu0 0.0
    %826 = vmatpush2.msra.mxu0 0.0
    %827 = vmatprep.subr.mxu0 0.0
    %828 = vmatpush2.msra.mxu0 0.0
    %829 = vmatprep.subr.mxu0 0.0
    %830 = vmatpush2.msra.mxu0 0.0
    %831 = vmatprep.subr.mxu0 0.0
    %832 = vmatpush2.msra.mxu0 0.0
    %833 = vmatprep.subr.mxu0 0.0
    %834 = vmatpush2.msra.mxu0 0.0
    %835 = vmatprep.subr.mxu0 0.0
    %836 = vmatpush2.msra.mxu0 0.0
    %837 = vmatprep.subr.mxu0 0.0
    %838 = vmatpush2.msra.mxu0 0.0
    %839 = vmatprep.subr.mxu0 0.0
    %840 = vmatpush2.msra.mxu0 0.0
    %841 = vmatprep.subr.mxu0 0.0
    %842 = vmatpush2.msra.mxu0 0.0
    %843 = vmatprep.subr.mxu0 0.0
    %844 = vmatpush2.msra.mxu0 0.0
    %845 = vmatprep.subr.mxu0 0.0
    %846 = vmatpush2.msra.mxu0 0.0
    %847 = vmatprep.subr.mxu0 0.0
    %848 = vmatpush2.msra.mxu0 0.0
    %849 = vmatprep.subr.mxu0 0.0
    %850 = vmatpush2.msra.mxu0 0.0
    %851 = vmatprep.subr.mxu0 0.0
    %852 = vmatpush2.msra.mxu0 0.0
    %853 = vmatprep.mubr.f32.mxu0 0.0
    %854 = vmatmul.mubr.f32.gmra.mxu0 %v787
    %v855 = vpop.f32.mrf.mxu0
    %v856 = vadd.f32 0.0, %v855
    %v857 = vpop.f32.mrf.mxu0
    %858 = vdwg.mxu0
    %v860 = vrot.slane %v856, 4
    %v862 = vadd.f32 %v127, %v860
    %v863 = vxor.u32 %v862, 2147483648
    %v864 = vmul.f32 %v863, 1.442695
    %v865 = vpow.pop %v864
    %v866 = vadd.f32 %v865, 1.0
    %v867 = vrcp.pop %v866
    %v868 = vmul.f32 1.0, %v867
    %v869 = vtanh.pop %v862
    %v871 = vrot.slane %v772, 6
    %v873 = vmul.f32 %v868, %v871
    %875 = vrot.lane.b32.xlu0 %v869, 32
    %v876 = vpop.permute.xlu0 %875
    %v878 = vmul.f32 %v868, %v876
    %880 = vrot.lane.b32.xlu0 %v878, 32
    %v881 = vpop.permute.xlu0 %880
    %v883 = vadd.f32 %v873, %v881
    %v884 = vtanh.pop %v883
    %886 = vrot.lane.b32.xlu0 %v884, 32
    %v887 = vpop.permute.xlu0 %886
    %v889 = vmul.f32 %v868, %v887
    %891 = vrot.lane.b32.xlu0 %v889, 64
    %v892 = vpop.permute.xlu0 %891
    %894 = vst.msk [vmem:[#allocation2 + $0x8] sm:$0x30] %vm454, %v892
    %v895 = vrot.slane %v889, 4
    %896 = vrot.lane.b32.xlu0 %v895, 64
    %v897 = vpop.permute.xlu0 %896
    %v898 = vsel %vm130, %v897, 0
    %900 = vmatprep.subr.mxu0 0.0
    %901 = vmatpush1.msra.mxu0 0.0
    %902 = vmatprep.subr.mxu0 0.0
    %903 = vmatpush1.msra.mxu0 0.0
    %904 = vmatprep.subr.mxu0 0.0
    %905 = vmatpush1.msra.mxu0 0.0
    %906 = vmatprep.subr.mxu0 0.0
    %907 = vmatpush1.msra.mxu0 0.0
    %908 = vmatprep.subr.mxu0 0.0
    %909 = vmatpush1.msra.mxu0 0.0
    %910 = vmatprep.subr.mxu0 0.0
    %911 = vmatpush1.msra.mxu0 0.0
    %912 = vmatprep.subr.mxu0 0.0
    %913 = vmatpush1.msra.mxu0 0.0
    %914 = vmatprep.subr.mxu0 0.0
    %915 = vmatpush1.msra.mxu0 0.0
    %916 = vmatprep.subr.mxu0 0.0
    %917 = vmatpush1.msra.mxu0 0.0
    %918 = vmatprep.subr.mxu0 0.0
    %919 = vmatpush1.msra.mxu0 0.0
    %920 = vmatprep.subr.mxu0 0.0
    %921 = vmatpush1.msra.mxu0 0.0
    %922 = vmatprep.subr.mxu0 0.0
    %923 = vmatpush1.msra.mxu0 0.0
    %924 = vmatprep.subr.mxu0 0.0
    %925 = vmatpush1.msra.mxu0 %v34
    %926 = vmatprep.subr.mxu0 0.0
    %927 = vmatpush1.msra.mxu0 %v33
    %928 = vmatprep.subr.mxu0 0.0
    %929 = vmatpush1.msra.mxu0 %v32
    %930 = vmatprep.subr.mxu0 0.0
    %931 = vmatpush1.msra.mxu0 %v31
    %932 = vmatprep.subr.mxu0 0.0
    %933 = vmatpush2.msra.mxu0 0.0
    %934 = vmatprep.subr.mxu0 0.0
    %935 = vmatpush2.msra.mxu0 0.0
    %936 = vmatprep.subr.mxu0 0.0
    %937 = vmatpush2.msra.mxu0 0.0
    %938 = vmatprep.subr.mxu0 0.0
    %939 = vmatpush2.msra.mxu0 0.0
    %940 = vmatprep.subr.mxu0 0.0
    %941 = vmatpush2.msra.mxu0 0.0
    %942 = vmatprep.subr.mxu0 0.0
    %943 = vmatpush2.msra.mxu0 0.0
    %944 = vmatprep.subr.mxu0 0.0
    %945 = vmatpush2.msra.mxu0 0.0
    %946 = vmatprep.subr.mxu0 0.0
    %947 = vmatpush2.msra.mxu0 0.0
    %948 = vmatprep.subr.mxu0 0.0
    %949 = vmatpush2.msra.mxu0 0.0
    %950 = vmatprep.subr.mxu0 0.0
    %951 = vmatpush2.msra.mxu0 0.0
    %952 = vmatprep.subr.mxu0 0.0
    %953 = vmatpush2.msra.mxu0 0.0
    %954 = vmatprep.subr.mxu0 0.0
    %955 = vmatpush2.msra.mxu0 0.0
    %956 = vmatprep.subr.mxu0 0.0
    %957 = vmatpush2.msra.mxu0 0.0
    %958 = vmatprep.subr.mxu0 0.0
    %959 = vmatpush2.msra.mxu0 0.0
    %960 = vmatprep.subr.mxu0 0.0
    %961 = vmatpush2.msra.mxu0 0.0
    %962 = vmatprep.subr.mxu0 0.0
    %963 = vmatpush2.msra.mxu0 0.0
    %964 = vmatprep.mubr.f32.mxu0 0.0
    %965 = vmatmul.mubr.f32.gmra.mxu0 %v898
    %v966 = vpop.f32.mrf.mxu0
    %v967 = vadd.f32 0.0, %v966
    %v968 = vpop.f32.mrf.mxu0
    %969 = vdwg.mxu0
    %v971 = vrot.slane %v967, 2
    %v973 = vadd.f32 %v127, %v971
    %v974 = vxor.u32 %v973, 2147483648
    %v975 = vmul.f32 %v974, 1.442695
    %v976 = vpow.pop %v975
    %v977 = vadd.f32 %v976, 1.0
    %v978 = vrcp.pop %v977
    %v979 = vmul.f32 1.0, %v978
    %v980 = vtanh.pop %v973
    %v982 = vrot.slane %v883, 6
    %v984 = vmul.f32 %v979, %v982
    %986 = vrot.lane.b32.xlu0 %v980, 32
    %v987 = vpop.permute.xlu0 %986
    %v989 = vmul.f32 %v979, %v987
    %991 = vrot.lane.b32.xlu0 %v989, 32
    %v992 = vpop.permute.xlu0 %991
    %v994 = vadd.f32 %v984, %v992
    %v995 = vtanh.pop %v994
    %997 = vrot.lane.b32.xlu0 %v995, 32
    %v998 = vpop.permute.xlu0 %997
    %v1000 = vmul.f32 %v979, %v998
    %1002 = vrot.lane.b32.xlu0 %v1000, 64
    %v1003 = vpop.permute.xlu0 %1002
    %1005 = vst.msk [vmem:[#allocation2 + $0x8] sm:$0xc0] %vm566, %v1003
    %s1006 = scalar_lea.vmem [#allocation3], 64
    %v1007 = vld [vmem:[%s1006] sm:$0xff]
    %v1008 = vld [vmem:[%s1006 + $0x8] sm:$0xff]
    %v1009 = vld [vmem:[%s1006 + $0x10] sm:$0xff]
    %v1010 = vld [vmem:[%s1006 + $0x18] sm:$0xff]
    %s1011 = scalar_lea.vmem [#allocation3], 96
    %v1012 = vld [vmem:[%s1011] sm:$0xff]
    %v1013 = vld [vmem:[%s1011 + $0x8] sm:$0xff]
    %v1014 = vld [vmem:[%s1011 + $0x10] sm:$0xff]
    %v1015 = vld [vmem:[%s1011 + $0x18] sm:$0xff]
    %s1016 = scalar_lea.vmem %s2, 1
    %v1017 = vld [vmem:[%s1016] sm:$0x1]
    %v1018 = vld [vmem:[#allocation2] sm:$0xff]
    %v1019 = vld [vmem:[#allocation2 + $0x8] sm:$0xff]
    %v1021 = vlaneseq
    %v1022 = vshrl.u32 %v1021, 7
    %v1023 = vsub.s32 0, %v1022
    %v1024 = vrot.slane %v1017, %v1023
    %v1027 = vsel %vm130, %v1018, 0
    %v1030 = vsel %vm130, %v1019, 0
    %1032 = vmatprep.subr.mxu0 0.0
    %1033 = vmatpush1.msra.mxu0 0.0
    %1034 = vmatprep.subr.mxu0 0.0
    %1035 = vmatpush1.msra.mxu0 0.0
    %1036 = vmatprep.subr.mxu0 0.0
    %1037 = vmatpush1.msra.mxu0 0.0
    %1038 = vmatprep.subr.mxu0 0.0
    %1039 = vmatpush1.msra.mxu0 0.0
    %1040 = vmatprep.subr.mxu0 0.0
    %1041 = vmatpush1.msra.mxu0 0.0
    %1042 = vmatprep.subr.mxu0 0.0
    %1043 = vmatpush1.msra.mxu0 0.0
    %1044 = vmatprep.subr.mxu0 0.0
    %1045 = vmatpush1.msra.mxu0 0.0
    %1046 = vmatprep.subr.mxu0 0.0
    %1047 = vmatpush1.msra.mxu0 0.0
    %1048 = vmatprep.subr.mxu0 0.0
    %1049 = vmatpush1.msra.mxu0 0.0
    %1050 = vmatprep.subr.mxu0 0.0
    %1051 = vmatpush1.msra.mxu0 0.0
    %1052 = vmatprep.subr.mxu0 0.0
    %1053 = vmatpush1.msra.mxu0 0.0
    %1054 = vmatprep.subr.mxu0 0.0
    %1055 = vmatpush1.msra.mxu0 0.0
    %1056 = vmatprep.subr.mxu0 0.0
    %1057 = vmatpush1.msra.mxu0 %v1010
    %1058 = vmatprep.subr.mxu0 0.0
    %1059 = vmatpush1.msra.mxu0 %v1009
    %1060 = vmatprep.subr.mxu0 0.0
    %1061 = vmatpush1.msra.mxu0 %v1008
    %1062 = vmatprep.subr.mxu0 0.0
    %1063 = vmatpush1.msra.mxu0 %v1007
    %1064 = vmatprep.subr.mxu0 0.0
    %1065 = vmatpush2.msra.mxu0 0.0
    %1066 = vmatprep.subr.mxu0 0.0
    %1067 = vmatpush2.msra.mxu0 0.0
    %1068 = vmatprep.subr.mxu0 0.0
    %1069 = vmatpush2.msra.mxu0 0.0
    %1070 = vmatprep.subr.mxu0 0.0
    %1071 = vmatpush2.msra.mxu0 0.0
    %1072 = vmatprep.subr.mxu0 0.0
    %1073 = vmatpush2.msra.mxu0 0.0
    %1074 = vmatprep.subr.mxu0 0.0
    %1075 = vmatpush2.msra.mxu0 0.0
    %1076 = vmatprep.subr.mxu0 0.0
    %1077 = vmatpush2.msra.mxu0 0.0
    %1078 = vmatprep.subr.mxu0 0.0
    %1079 = vmatpush2.msra.mxu0 0.0
    %1080 = vmatprep.subr.mxu0 0.0
    %1081 = vmatpush2.msra.mxu0 0.0
    %1082 = vmatprep.subr.mxu0 0.0
    %1083 = vmatpush2.msra.mxu0 0.0
    %1084 = vmatprep.subr.mxu0 0.0
    %1085 = vmatpush2.msra.mxu0 0.0
    %1086 = vmatprep.subr.mxu0 0.0
    %1087 = vmatpush2.msra.mxu0 0.0
    %1088 = vmatprep.subr.mxu0 0.0
    %1089 = vmatpush2.msra.mxu0 0.0
    %1090 = vmatprep.subr.mxu0 0.0
    %1091 = vmatpush2.msra.mxu0 0.0
    %1092 = vmatprep.subr.mxu0 0.0
    %1093 = vmatpush2.msra.mxu0 0.0
    %1094 = vmatprep.subr.mxu0 0.0
    %1095 = vmatpush2.msra.mxu0 0.0
    %1096 = vmatprep.mubr.f32.mxu0 0.0
    %1097 = vmatmul.mubr.f32.gmra.mxu0 %v1027
    %v1098 = vpop.f32.mrf.mxu0
    %v1099 = vadd.f32 %v1024, %v1098
    %v1100 = vpop.f32.mrf.mxu0
    %1101 = vmatprep.mubr.f32.mxu0 0.0
    %1102 = vmatmul.mubr.f32.gmra.mxu0 %v1030
    %v1103 = vpop.f32.mrf.mxu0
    %v1104 = vadd.f32 %v1024, %v1103
    %v1105 = vpop.f32.mrf.mxu0
    %1106 = vdwg.mxu0
    %1107 = vmatprep.subr.mxu0 0.0
    %1108 = vmatpush1.msra.mxu0 0.0
    %1109 = vmatprep.subr.mxu0 0.0
    %1110 = vmatpush1.msra.mxu0 0.0
    %1111 = vmatprep.subr.mxu0 0.0
    %1112 = vmatpush1.msra.mxu0 0.0
    %1113 = vmatprep.subr.mxu0 0.0
    %1114 = vmatpush1.msra.mxu0 0.0
    %1115 = vmatprep.subr.mxu0 0.0
    %1116 = vmatpush1.msra.mxu0 0.0
    %1117 = vmatprep.subr.mxu0 0.0
    %1118 = vmatpush1.msra.mxu0 0.0
    %1119 = vmatprep.subr.mxu0 0.0
    %1120 = vmatpush1.msra.mxu0 0.0
    %1121 = vmatprep.subr.mxu0 0.0
    %1122 = vmatpush1.msra.mxu0 0.0
    %1123 = vmatprep.subr.mxu0 0.0
    %1124 = vmatpush1.msra.mxu0 0.0
    %1125 = vmatprep.subr.mxu0 0.0
    %1126 = vmatpush1.msra.mxu0 0.0
    %1127 = vmatprep.subr.mxu0 0.0
    %1128 = vmatpush1.msra.mxu0 0.0
    %1129 = vmatprep.subr.mxu0 0.0
    %1130 = vmatpush1.msra.mxu0 0.0
    %1131 = vmatprep.subr.mxu0 0.0
    %1132 = vmatpush1.msra.mxu0 %v1015
    %1133 = vmatprep.subr.mxu0 0.0
    %1134 = vmatpush1.msra.mxu0 %v1014
    %1135 = vmatprep.subr.mxu0 0.0
    %1136 = vmatpush1.msra.mxu0 %v1013
    %1137 = vmatprep.subr.mxu0 0.0
    %1138 = vmatpush1.msra.mxu0 %v1012
    %1139 = vmatprep.subr.mxu0 0.0
    %1140 = vmatpush2.msra.mxu0 0.0
    %1141 = vmatprep.subr.mxu0 0.0
    %1142 = vmatpush2.msra.mxu0 0.0
    %1143 = vmatprep.subr.mxu0 0.0
    %1144 = vmatpush2.msra.mxu0 0.0
    %1145 = vmatprep.subr.mxu0 0.0
    %1146 = vmatpush2.msra.mxu0 0.0
    %1147 = vmatprep.subr.mxu0 0.0
    %1148 = vmatpush2.msra.mxu0 0.0
    %1149 = vmatprep.subr.mxu0 0.0
    %1150 = vmatpush2.msra.mxu0 0.0
    %1151 = vmatprep.subr.mxu0 0.0
    %1152 = vmatpush2.msra.mxu0 0.0
    %1153 = vmatprep.subr.mxu0 0.0
    %1154 = vmatpush2.msra.mxu0 0.0
    %1155 = vmatprep.subr.mxu0 0.0
    %1156 = vmatpush2.msra.mxu0 0.0
    %1157 = vmatprep.subr.mxu0 0.0
    %1158 = vmatpush2.msra.mxu0 0.0
    %1159 = vmatprep.subr.mxu0 0.0
    %1160 = vmatpush2.msra.mxu0 0.0
    %1161 = vmatprep.subr.mxu0 0.0
    %1162 = vmatpush2.msra.mxu0 0.0
    %1163 = vmatprep.subr.mxu0 0.0
    %1164 = vmatpush2.msra.mxu0 0.0
    %1165 = vmatprep.subr.mxu0 0.0
    %1166 = vmatpush2.msra.mxu0 0.0
    %1167 = vmatprep.subr.mxu0 0.0
    %1168 = vmatpush2.msra.mxu0 0.0
    %1169 = vmatprep.subr.mxu0 0.0
    %1170 = vmatpush2.msra.mxu0 0.0
    %1171 = vmatprep.mubr.f32.mxu0 0.0
    %1172 = vmatmul.mubr.f32.gmra.mxu0 %v132
    %v1173 = vpop.f32.mrf.mxu0
    %v1174 = vadd.f32 0.0, %v1173
    %v1175 = vpop.f32.mrf.mxu0
    %1176 = vdwg.mxu0
    %v1177 = vadd.f32 %v1099, %v1174
    %v1178 = vxor.u32 %v1177, 2147483648
    %v1179 = vmul.f32 %v1178, 1.442695
    %v1180 = vpow.pop %v1179
    %v1181 = vadd.f32 %v1180, 1.0
    %v1182 = vrcp.pop %v1181
    %v1183 = vmul.f32 1.0, %v1182
    %v1184 = vtanh.pop %v1177
    %v1185 = vmul.f32 %v1183, 0.0
    %1187 = vrot.lane.b32.xlu0 %v1184, 32
    %v1188 = vpop.permute.xlu0 %1187
    %v1190 = vmul.f32 %v1183, %v1188
    %1192 = vrot.lane.b32.xlu0 %v1190, 32
    %v1193 = vpop.permute.xlu0 %1192
    %v1195 = vadd.f32 %v1185, %v1193
    %v1196 = vtanh.pop %v1195
    %1198 = vrot.lane.b32.xlu0 %v1196, 32
    %v1199 = vpop.permute.xlu0 %1198
    %v1201 = vmul.f32 %v1183, %v1199
    %1203 = vrot.lane.b32.xlu0 %v1201, 64
    %v1204 = vpop.permute.xlu0 %1203
    %1206 = vst.msk [vmem:[#allocation2] sm:$0x3] %vm233, %v1204
    %v1207 = vsel %vm130, %v1204, 0
    %1209 = vmatprep.subr.mxu0 0.0
    %1210 = vmatpush1.msra.mxu0 0.0
    %1211 = vmatprep.subr.mxu0 0.0
    %1212 = vmatpush1.msra.mxu0 0.0
    %1213 = vmatprep.subr.mxu0 0.0
    %1214 = vmatpush1.msra.mxu0 0.0
    %1215 = vmatprep.subr.mxu0 0.0
    %1216 = vmatpush1.msra.mxu0 0.0
    %1217 = vmatprep.subr.mxu0 0.0
    %1218 = vmatpush1.msra.mxu0 0.0
    %1219 = vmatprep.subr.mxu0 0.0
    %1220 = vmatpush1.msra.mxu0 0.0
    %1221 = vmatprep.subr.mxu0 0.0
    %1222 = vmatpush1.msra.mxu0 0.0
    %1223 = vmatprep.subr.mxu0 0.0
    %1224 = vmatpush1.msra.mxu0 0.0
    %1225 = vmatprep.subr.mxu0 0.0
    %1226 = vmatpush1.msra.mxu0 0.0
    %1227 = vmatprep.subr.mxu0 0.0
    %1228 = vmatpush1.msra.mxu0 0.0
    %1229 = vmatprep.subr.mxu0 0.0
    %1230 = vmatpush1.msra.mxu0 0.0
    %1231 = vmatprep.subr.mxu0 0.0
    %1232 = vmatpush1.msra.mxu0 0.0
    %1233 = vmatprep.subr.mxu0 0.0
    %1234 = vmatpush1.msra.mxu0 %v1015
    %1235 = vmatprep.subr.mxu0 0.0
    %1236 = vmatpush1.msra.mxu0 %v1014
    %1237 = vmatprep.subr.mxu0 0.0
    %1238 = vmatpush1.msra.mxu0 %v1013
    %1239 = vmatprep.subr.mxu0 0.0
    %1240 = vmatpush1.msra.mxu0 %v1012
    %1241 = vmatprep.subr.mxu0 0.0
    %1242 = vmatpush2.msra.mxu0 0.0
    %1243 = vmatprep.subr.mxu0 0.0
    %1244 = vmatpush2.msra.mxu0 0.0
    %1245 = vmatprep.subr.mxu0 0.0
    %1246 = vmatpush2.msra.mxu0 0.0
    %1247 = vmatprep.subr.mxu0 0.0
    %1248 = vmatpush2.msra.mxu0 0.0
    %1249 = vmatprep.subr.mxu0 0.0
    %1250 = vmatpush2.msra.mxu0 0.0
    %1251 = vmatprep.subr.mxu0 0.0
    %1252 = vmatpush2.msra.mxu0 0.0
    %1253 = vmatprep.subr.mxu0 0.0
    %1254 = vmatpush2.msra.mxu0 0.0
    %1255 = vmatprep.subr.mxu0 0.0
    %1256 = vmatpush2.msra.mxu0 0.0
    %1257 = vmatprep.subr.mxu0 0.0
    %1258 = vmatpush2.msra.mxu0 0.0
    %1259 = vmatprep.subr.mxu0 0.0
    %1260 = vmatpush2.msra.mxu0 0.0
    %1261 = vmatprep.subr.mxu0 0.0
    %1262 = vmatpush2.msra.mxu0 0.0
    %1263 = vmatprep.subr.mxu0 0.0
    %1264 = vmatpush2.msra.mxu0 0.0
    %1265 = vmatprep.subr.mxu0 0.0
    %1266 = vmatpush2.msra.mxu0 0.0
    %1267 = vmatprep.subr.mxu0 0.0
    %1268 = vmatpush2.msra.mxu0 0.0
    %1269 = vmatprep.subr.mxu0 0.0
    %1270 = vmatpush2.msra.mxu0 0.0
    %1271 = vmatprep.subr.mxu0 0.0
    %1272 = vmatpush2.msra.mxu0 0.0
    %1273 = vmatprep.mubr.f32.mxu0 0.0
    %1274 = vmatmul.mubr.f32.gmra.mxu0 %v1207
    %v1275 = vpop.f32.mrf.mxu0
    %v1276 = vadd.f32 0.0, %v1275
    %v1277 = vpop.f32.mrf.mxu0
    %1278 = vdwg.mxu0
    %v1280 = vrot.slane %v1276, 6
    %v1282 = vadd.f32 %v1099, %v1280
    %v1283 = vxor.u32 %v1282, 2147483648
    %v1284 = vmul.f32 %v1283, 1.442695
    %v1285 = vpow.pop %v1284
    %v1286 = vadd.f32 %v1285, 1.0
    %v1287 = vrcp.pop %v1286
    %v1288 = vmul.f32 1.0, %v1287
    %v1289 = vtanh.pop %v1282
    %v1291 = vrot.slane %v1195, 6
    %v1293 = vmul.f32 %v1288, %v1291
    %1295 = vrot.lane.b32.xlu0 %v1289, 32
    %v1296 = vpop.permute.xlu0 %1295
    %v1298 = vmul.f32 %v1288, %v1296
    %1300 = vrot.lane.b32.xlu0 %v1298, 32
    %v1301 = vpop.permute.xlu0 %1300
    %v1303 = vadd.f32 %v1293, %v1301
    %v1304 = vtanh.pop %v1303
    %1306 = vrot.lane.b32.xlu0 %v1304, 32
    %v1307 = vpop.permute.xlu0 %1306
    %v1309 = vmul.f32 %v1288, %v1307
    %1311 = vrot.lane.b32.xlu0 %v1309, 64
    %v1312 = vpop.permute.xlu0 %1311
    %1314 = vst.msk [vmem:[#allocation2] sm:$0xc] %vm342, %v1312
    %v1315 = vrot.slane %v1309, 2
    %1316 = vrot.lane.b32.xlu0 %v1315, 64
    %v1317 = vpop.permute.xlu0 %1316
    %v1318 = vsel %vm130, %v1317, 0
    %1320 = vmatprep.subr.mxu0 0.0
    %1321 = vmatpush1.msra.mxu0 0.0
    %1322 = vmatprep.subr.mxu0 0.0
    %1323 = vmatpush1.msra.mxu0 0.0
    %1324 = vmatprep.subr.mxu0 0.0
    %1325 = vmatpush1.msra.mxu0 0.0
    %1326 = vmatprep.subr.mxu0 0.0
    %1327 = vmatpush1.msra.mxu0 0.0
    %1328 = vmatprep.subr.mxu0 0.0
    %1329 = vmatpush1.msra.mxu0 0.0
    %1330 = vmatprep.subr.mxu0 0.0
    %1331 = vmatpush1.msra.mxu0 0.0
    %1332 = vmatprep.subr.mxu0 0.0
    %1333 = vmatpush1.msra.mxu0 0.0
    %1334 = vmatprep.subr.mxu0 0.0
    %1335 = vmatpush1.msra.mxu0 0.0
    %1336 = vmatprep.subr.mxu0 0.0
    %1337 = vmatpush1.msra.mxu0 0.0
    %1338 = vmatprep.subr.mxu0 0.0
    %1339 = vmatpush1.msra.mxu0 0.0
    %1340 = vmatprep.subr.mxu0 0.0
    %1341 = vmatpush1.msra.mxu0 0.0
    %1342 = vmatprep.subr.mxu0 0.0
    %1343 = vmatpush1.msra.mxu0 0.0
    %1344 = vmatprep.subr.mxu0 0.0
    %1345 = vmatpush1.msra.mxu0 %v1015
    %1346 = vmatprep.subr.mxu0 0.0
    %1347 = vmatpush1.msra.mxu0 %v1014
    %1348 = vmatprep.subr.mxu0 0.0
    %1349 = vmatpush1.msra.mxu0 %v1013
    %1350 = vmatprep.subr.mxu0 0.0
    %1351 = vmatpush1.msra.mxu0 %v1012
    %1352 = vmatprep.subr.mxu0 0.0
    %1353 = vmatpush2.msra.mxu0 0.0
    %1354 = vmatprep.subr.mxu0 0.0
    %1355 = vmatpush2.msra.mxu0 0.0
    %1356 = vmatprep.subr.mxu0 0.0
    %1357 = vmatpush2.msra.mxu0 0.0
    %1358 = vmatprep.subr.mxu0 0.0
    %1359 = vmatpush2.msra.mxu0 0.0
    %1360 = vmatprep.subr.mxu0 0.0
    %1361 = vmatpush2.msra.mxu0 0.0
    %1362 = vmatprep.subr.mxu0 0.0
    %1363 = vmatpush2.msra.mxu0 0.0
    %1364 = vmatprep.subr.mxu0 0.0
    %1365 = vmatpush2.msra.mxu0 0.0
    %1366 = vmatprep.subr.mxu0 0.0
    %1367 = vmatpush2.msra.mxu0 0.0
    %1368 = vmatprep.subr.mxu0 0.0
    %1369 = vmatpush2.msra.mxu0 0.0
    %1370 = vmatprep.subr.mxu0 0.0
    %1371 = vmatpush2.msra.mxu0 0.0
    %1372 = vmatprep.subr.mxu0 0.0
    %1373 = vmatpush2.msra.mxu0 0.0
    %1374 = vmatprep.subr.mxu0 0.0
    %1375 = vmatpush2.msra.mxu0 0.0
    %1376 = vmatprep.subr.mxu0 0.0
    %1377 = vmatpush2.msra.mxu0 0.0
    %1378 = vmatprep.subr.mxu0 0.0
    %1379 = vmatpush2.msra.mxu0 0.0
    %1380 = vmatprep.subr.mxu0 0.0
    %1381 = vmatpush2.msra.mxu0 0.0
    %1382 = vmatprep.subr.mxu0 0.0
    %1383 = vmatpush2.msra.mxu0 0.0
    %1384 = vmatprep.mubr.f32.mxu0 0.0
    %1385 = vmatmul.mubr.f32.gmra.mxu0 %v1318
    %v1386 = vpop.f32.mrf.mxu0
    %v1387 = vadd.f32 0.0, %v1386
    %v1388 = vpop.f32.mrf.mxu0
    %1389 = vdwg.mxu0
    %v1391 = vrot.slane %v1387, 4
    %v1393 = vadd.f32 %v1099, %v1391
    %v1394 = vxor.u32 %v1393, 2147483648
    %v1395 = vmul.f32 %v1394, 1.442695
    %v1396 = vpow.pop %v1395
    %v1397 = vadd.f32 %v1396, 1.0
    %v1398 = vrcp.pop %v1397
    %v1399 = vmul.f32 1.0, %v1398
    %v1400 = vtanh.pop %v1393
    %v1402 = vrot.slane %v1303, 6
    %v1404 = vmul.f32 %v1399, %v1402
    %1406 = vrot.lane.b32.xlu0 %v1400, 32
    %v1407 = vpop.permute.xlu0 %1406
    %v1409 = vmul.f32 %v1399, %v1407
    %1411 = vrot.lane.b32.xlu0 %v1409, 32
    %v1412 = vpop.permute.xlu0 %1411
    %v1414 = vadd.f32 %v1404, %v1412
    %v1415 = vtanh.pop %v1414
    %1417 = vrot.lane.b32.xlu0 %v1415, 32
    %v1418 = vpop.permute.xlu0 %1417
    %v1420 = vmul.f32 %v1399, %v1418
    %1422 = vrot.lane.b32.xlu0 %v1420, 64
    %v1423 = vpop.permute.xlu0 %1422
    %1425 = vst.msk [vmem:[#allocation2] sm:$0x30] %vm454, %v1423
    %v1426 = vrot.slane %v1420, 4
    %1427 = vrot.lane.b32.xlu0 %v1426, 64
    %v1428 = vpop.permute.xlu0 %1427
    %v1429 = vsel %vm130, %v1428, 0
    %1431 = vmatprep.subr.mxu0 0.0
    %1432 = vmatpush1.msra.mxu0 0.0
    %1433 = vmatprep.subr.mxu0 0.0
    %1434 = vmatpush1.msra.mxu0 0.0
    %1435 = vmatprep.subr.mxu0 0.0
    %1436 = vmatpush1.msra.mxu0 0.0
    %1437 = vmatprep.subr.mxu0 0.0
    %1438 = vmatpush1.msra.mxu0 0.0
    %1439 = vmatprep.subr.mxu0 0.0
    %1440 = vmatpush1.msra.mxu0 0.0
    %1441 = vmatprep.subr.mxu0 0.0
    %1442 = vmatpush1.msra.mxu0 0.0
    %1443 = vmatprep.subr.mxu0 0.0
    %1444 = vmatpush1.msra.mxu0 0.0
    %1445 = vmatprep.subr.mxu0 0.0
    %1446 = vmatpush1.msra.mxu0 0.0
    %1447 = vmatprep.subr.mxu0 0.0
    %1448 = vmatpush1.msra.mxu0 0.0
    %1449 = vmatprep.subr.mxu0 0.0
    %1450 = vmatpush1.msra.mxu0 0.0
    %1451 = vmatprep.subr.mxu0 0.0
    %1452 = vmatpush1.msra.mxu0 0.0
    %1453 = vmatprep.subr.mxu0 0.0
    %1454 = vmatpush1.msra.mxu0 0.0
    %1455 = vmatprep.subr.mxu0 0.0
    %1456 = vmatpush1.msra.mxu0 %v1015
    %1457 = vmatprep.subr.mxu0 0.0
    %1458 = vmatpush1.msra.mxu0 %v1014
    %1459 = vmatprep.subr.mxu0 0.0
    %1460 = vmatpush1.msra.mxu0 %v1013
    %1461 = vmatprep.subr.mxu0 0.0
    %1462 = vmatpush1.msra.mxu0 %v1012
    %1463 = vmatprep.subr.mxu0 0.0
    %1464 = vmatpush2.msra.mxu0 0.0
    %1465 = vmatprep.subr.mxu0 0.0
    %1466 = vmatpush2.msra.mxu0 0.0
    %1467 = vmatprep.subr.mxu0 0.0
    %1468 = vmatpush2.msra.mxu0 0.0
    %1469 = vmatprep.subr.mxu0 0.0
    %1470 = vmatpush2.msra.mxu0 0.0
    %1471 = vmatprep.subr.mxu0 0.0
    %1472 = vmatpush2.msra.mxu0 0.0
    %1473 = vmatprep.subr.mxu0 0.0
    %1474 = vmatpush2.msra.mxu0 0.0
    %1475 = vmatprep.subr.mxu0 0.0
    %1476 = vmatpush2.msra.mxu0 0.0
    %1477 = vmatprep.subr.mxu0 0.0
    %1478 = vmatpush2.msra.mxu0 0.0
    %1479 = vmatprep.subr.mxu0 0.0
    %1480 = vmatpush2.msra.mxu0 0.0
    %1481 = vmatprep.subr.mxu0 0.0
    %1482 = vmatpush2.msra.mxu0 0.0
    %1483 = vmatprep.subr.mxu0 0.0
    %1484 = vmatpush2.msra.mxu0 0.0
    %1485 = vmatprep.subr.mxu0 0.0
    %1486 = vmatpush2.msra.mxu0 0.0
    %1487 = vmatprep.subr.mxu0 0.0
    %1488 = vmatpush2.msra.mxu0 0.0
    %1489 = vmatprep.subr.mxu0 0.0
    %1490 = vmatpush2.msra.mxu0 0.0
    %1491 = vmatprep.subr.mxu0 0.0
    %1492 = vmatpush2.msra.mxu0 0.0
    %1493 = vmatprep.subr.mxu0 0.0
    %1494 = vmatpush2.msra.mxu0 0.0
    %1495 = vmatprep.mubr.f32.mxu0 0.0
    %1496 = vmatmul.mubr.f32.gmra.mxu0 %v1429
    %v1497 = vpop.f32.mrf.mxu0
    %v1498 = vadd.f32 0.0, %v1497
    %v1499 = vpop.f32.mrf.mxu0
    %1500 = vdwg.mxu0
    %v1502 = vrot.slane %v1498, 2
    %v1504 = vadd.f32 %v1099, %v1502
    %v1505 = vxor.u32 %v1504, 2147483648
    %v1506 = vmul.f32 %v1505, 1.442695
    %v1507 = vpow.pop %v1506
    %v1508 = vadd.f32 %v1507, 1.0
    %v1509 = vrcp.pop %v1508
    %v1510 = vmul.f32 1.0, %v1509
    %v1511 = vtanh.pop %v1504
    %v1513 = vrot.slane %v1414, 6
    %v1515 = vmul.f32 %v1510, %v1513
    %1517 = vrot.lane.b32.xlu0 %v1511, 32
    %v1518 = vpop.permute.xlu0 %1517
    %v1520 = vmul.f32 %v1510, %v1518
    %1522 = vrot.lane.b32.xlu0 %v1520, 32
    %v1523 = vpop.permute.xlu0 %1522
    %v1525 = vadd.f32 %v1515, %v1523
    %v1526 = vtanh.pop %v1525
    %1528 = vrot.lane.b32.xlu0 %v1526, 32
    %v1529 = vpop.permute.xlu0 %1528
    %v1531 = vmul.f32 %v1510, %v1529
    %1533 = vrot.lane.b32.xlu0 %v1531, 64
    %v1534 = vpop.permute.xlu0 %1533
    %1536 = vst.msk [vmem:[#allocation2] sm:$0xc0] %vm566, %v1534
    %v1537 = vrot.slane %v1531, 6
    %1538 = vrot.lane.b32.xlu0 %v1537, 64
    %v1539 = vpop.permute.xlu0 %1538
    %v1540 = vsel %vm130, %v1539, 0
    %1542 = vmatprep.subr.mxu0 0.0
    %1543 = vmatpush1.msra.mxu0 0.0
    %1544 = vmatprep.subr.mxu0 0.0
    %1545 = vmatpush1.msra.mxu0 0.0
    %1546 = vmatprep.subr.mxu0 0.0
    %1547 = vmatpush1.msra.mxu0 0.0
    %1548 = vmatprep.subr.mxu0 0.0
    %1549 = vmatpush1.msra.mxu0 0.0
    %1550 = vmatprep.subr.mxu0 0.0
    %1551 = vmatpush1.msra.mxu0 0.0
    %1552 = vmatprep.subr.mxu0 0.0
    %1553 = vmatpush1.msra.mxu0 0.0
    %1554 = vmatprep.subr.mxu0 0.0
    %1555 = vmatpush1.msra.mxu0 0.0
    %1556 = vmatprep.subr.mxu0 0.0
    %1557 = vmatpush1.msra.mxu0 0.0
    %1558 = vmatprep.subr.mxu0 0.0
    %1559 = vmatpush1.msra.mxu0 0.0
    %1560 = vmatprep.subr.mxu0 0.0
    %1561 = vmatpush1.msra.mxu0 0.0
    %1562 = vmatprep.subr.mxu0 0.0
    %1563 = vmatpush1.msra.mxu0 0.0
    %1564 = vmatprep.subr.mxu0 0.0
    %1565 = vmatpush1.msra.mxu0 0.0
    %1566 = vmatprep.subr.mxu0 0.0
    %1567 = vmatpush1.msra.mxu0 %v1015
    %1568 = vmatprep.subr.mxu0 0.0
    %1569 = vmatpush1.msra.mxu0 %v1014
    %1570 = vmatprep.subr.mxu0 0.0
    %1571 = vmatpush1.msra.mxu0 %v1013
    %1572 = vmatprep.subr.mxu0 0.0
    %1573 = vmatpush1.msra.mxu0 %v1012
    %1574 = vmatprep.subr.mxu0 0.0
    %1575 = vmatpush2.msra.mxu0 0.0
    %1576 = vmatprep.subr.mxu0 0.0
    %1577 = vmatpush2.msra.mxu0 0.0
    %1578 = vmatprep.subr.mxu0 0.0
    %1579 = vmatpush2.msra.mxu0 0.0
    %1580 = vmatprep.subr.mxu0 0.0
    %1581 = vmatpush2.msra.mxu0 0.0
    %1582 = vmatprep.subr.mxu0 0.0
    %1583 = vmatpush2.msra.mxu0 0.0
    %1584 = vmatprep.subr.mxu0 0.0
    %1585 = vmatpush2.msra.mxu0 0.0
    %1586 = vmatprep.subr.mxu0 0.0
    %1587 = vmatpush2.msra.mxu0 0.0
    %1588 = vmatprep.subr.mxu0 0.0
    %1589 = vmatpush2.msra.mxu0 0.0
    %1590 = vmatprep.subr.mxu0 0.0
    %1591 = vmatpush2.msra.mxu0 0.0
    %1592 = vmatprep.subr.mxu0 0.0
    %1593 = vmatpush2.msra.mxu0 0.0
    %1594 = vmatprep.subr.mxu0 0.0
    %1595 = vmatpush2.msra.mxu0 0.0
    %1596 = vmatprep.subr.mxu0 0.0
    %1597 = vmatpush2.msra.mxu0 0.0
    %1598 = vmatprep.subr.mxu0 0.0
    %1599 = vmatpush2.msra.mxu0 0.0
    %1600 = vmatprep.subr.mxu0 0.0
    %1601 = vmatpush2.msra.mxu0 0.0
    %1602 = vmatprep.subr.mxu0 0.0
    %1603 = vmatpush2.msra.mxu0 0.0
    %1604 = vmatprep.subr.mxu0 0.0
    %1605 = vmatpush2.msra.mxu0 0.0
    %1606 = vmatprep.mubr.f32.mxu0 0.0
    %1607 = vmatmul.mubr.f32.gmra.mxu0 %v1540
    %v1608 = vpop.f32.mrf.mxu0
    %v1609 = vadd.f32 0.0, %v1608
    %v1610 = vpop.f32.mrf.mxu0
    %1611 = vdwg.mxu0
    %v1612 = vadd.f32 %v1104, %v1609
    %v1613 = vxor.u32 %v1612, 2147483648
    %v1614 = vmul.f32 %v1613, 1.442695
    %v1615 = vpow.pop %v1614
    %v1616 = vadd.f32 %v1615, 1.0
    %v1617 = vrcp.pop %v1616
    %v1618 = vmul.f32 1.0, %v1617
    %v1619 = vtanh.pop %v1612
    %v1621 = vrot.slane %v1525, 6
    %v1623 = vmul.f32 %v1618, %v1621
    %1625 = vrot.lane.b32.xlu0 %v1619, 32
    %v1626 = vpop.permute.xlu0 %1625
    %v1628 = vmul.f32 %v1618, %v1626
    %1630 = vrot.lane.b32.xlu0 %v1628, 32
    %v1631 = vpop.permute.xlu0 %1630
    %v1633 = vadd.f32 %v1623, %v1631
    %v1634 = vtanh.pop %v1633
    %1636 = vrot.lane.b32.xlu0 %v1634, 32
    %v1637 = vpop.permute.xlu0 %1636
    %v1639 = vmul.f32 %v1618, %v1637
    %1641 = vrot.lane.b32.xlu0 %v1639, 64
    %v1642 = vpop.permute.xlu0 %1641
    %1644 = vst.msk [vmem:[#allocation2 + $0x8] sm:$0x3] %vm233, %v1642
    %v1645 = vsel %vm130, %v1642, 0
    %1647 = vmatprep.subr.mxu0 0.0
    %1648 = vmatpush1.msra.mxu0 0.0
    %1649 = vmatprep.subr.mxu0 0.0
    %1650 = vmatpush1.msra.mxu0 0.0
    %1651 = vmatprep.subr.mxu0 0.0
    %1652 = vmatpush1.msra.mxu0 0.0
    %1653 = vmatprep.subr.mxu0 0.0
    %1654 = vmatpush1.msra.mxu0 0.0
    %1655 = vmatprep.subr.mxu0 0.0
    %1656 = vmatpush1.msra.mxu0 0.0
    %1657 = vmatprep.subr.mxu0 0.0
    %1658 = vmatpush1.msra.mxu0 0.0
    %1659 = vmatprep.subr.mxu0 0.0
    %1660 = vmatpush1.msra.mxu0 0.0
    %1661 = vmatprep.subr.mxu0 0.0
    %1662 = vmatpush1.msra.mxu0 0.0
    %1663 = vmatprep.subr.mxu0 0.0
    %1664 = vmatpush1.msra.mxu0 0.0
    %1665 = vmatprep.subr.mxu0 0.0
    %1666 = vmatpush1.msra.mxu0 0.0
    %1667 = vmatprep.subr.mxu0 0.0
    %1668 = vmatpush1.msra.mxu0 0.0
    %1669 = vmatprep.subr.mxu0 0.0
    %1670 = vmatpush1.msra.mxu0 0.0
    %1671 = vmatprep.subr.mxu0 0.0
    %1672 = vmatpush1.msra.mxu0 %v1015
    %1673 = vmatprep.subr.mxu0 0.0
    %1674 = vmatpush1.msra.mxu0 %v1014
    %1675 = vmatprep.subr.mxu0 0.0
    %1676 = vmatpush1.msra.mxu0 %v1013
    %1677 = vmatprep.subr.mxu0 0.0
    %1678 = vmatpush1.msra.mxu0 %v1012
    %1679 = vmatprep.subr.mxu0 0.0
    %1680 = vmatpush2.msra.mxu0 0.0
    %1681 = vmatprep.subr.mxu0 0.0
    %1682 = vmatpush2.msra.mxu0 0.0
    %1683 = vmatprep.subr.mxu0 0.0
    %1684 = vmatpush2.msra.mxu0 0.0
    %1685 = vmatprep.subr.mxu0 0.0
    %1686 = vmatpush2.msra.mxu0 0.0
    %1687 = vmatprep.subr.mxu0 0.0
    %1688 = vmatpush2.msra.mxu0 0.0
    %1689 = vmatprep.subr.mxu0 0.0
    %1690 = vmatpush2.msra.mxu0 0.0
    %1691 = vmatprep.subr.mxu0 0.0
    %1692 = vmatpush2.msra.mxu0 0.0
    %1693 = vmatprep.subr.mxu0 0.0
    %1694 = vmatpush2.msra.mxu0 0.0
    %1695 = vmatprep.subr.mxu0 0.0
    %1696 = vmatpush2.msra.mxu0 0.0
    %1697 = vmatprep.subr.mxu0 0.0
    %1698 = vmatpush2.msra.mxu0 0.0
    %1699 = vmatprep.subr.mxu0 0.0
    %1700 = vmatpush2.msra.mxu0 0.0
    %1701 = vmatprep.subr.mxu0 0.0
    %1702 = vmatpush2.msra.mxu0 0.0
    %1703 = vmatprep.subr.mxu0 0.0
    %1704 = vmatpush2.msra.mxu0 0.0
    %1705 = vmatprep.subr.mxu0 0.0
    %1706 = vmatpush2.msra.mxu0 0.0
    %1707 = vmatprep.subr.mxu0 0.0
    %1708 = vmatpush2.msra.mxu0 0.0
    %1709 = vmatprep.subr.mxu0 0.0
    %1710 = vmatpush2.msra.mxu0 0.0
    %1711 = vmatprep.mubr.f32.mxu0 0.0
    %1712 = vmatmul.mubr.f32.gmra.mxu0 %v1645
    %v1713 = vpop.f32.mrf.mxu0
    %v1714 = vadd.f32 0.0, %v1713
    %v1715 = vpop.f32.mrf.mxu0
    %1716 = vdwg.mxu0
    %v1718 = vrot.slane %v1714, 6
    %v1720 = vadd.f32 %v1104, %v1718
    %v1721 = vxor.u32 %v1720, 2147483648
    %v1722 = vmul.f32 %v1721, 1.442695
    %v1723 = vpow.pop %v1722
    %v1724 = vadd.f32 %v1723, 1.0
    %v1725 = vrcp.pop %v1724
    %v1726 = vmul.f32 1.0, %v1725
    %v1727 = vtanh.pop %v1720
    %v1729 = vrot.slane %v1633, 6
    %v1731 = vmul.f32 %v1726, %v1729
    %1733 = vrot.lane.b32.xlu0 %v1727, 32
    %v1734 = vpop.permute.xlu0 %1733
    %v1736 = vmul.f32 %v1726, %v1734
    %1738 = vrot.lane.b32.xlu0 %v1736, 32
    %v1739 = vpop.permute.xlu0 %1738
    %v1741 = vadd.f32 %v1731, %v1739
    %v1742 = vtanh.pop %v1741
    %1744 = vrot.lane.b32.xlu0 %v1742, 32
    %v1745 = vpop.permute.xlu0 %1744
    %v1747 = vmul.f32 %v1726, %v1745
    %1749 = vrot.lane.b32.xlu0 %v1747, 64
    %v1750 = vpop.permute.xlu0 %1749
    %1752 = vst.msk [vmem:[#allocation2 + $0x8] sm:$0xc] %vm342, %v1750
    %v1753 = vrot.slane %v1747, 2
    %1754 = vrot.lane.b32.xlu0 %v1753, 64
    %v1755 = vpop.permute.xlu0 %1754
    %v1756 = vsel %vm130, %v1755, 0
    %1758 = vmatprep.subr.mxu0 0.0
    %1759 = vmatpush1.msra.mxu0 0.0
    %1760 = vmatprep.subr.mxu0 0.0
    %1761 = vmatpush1.msra.mxu0 0.0
    %1762 = vmatprep.subr.mxu0 0.0
    %1763 = vmatpush1.msra.mxu0 0.0
    %1764 = vmatprep.subr.mxu0 0.0
    %1765 = vmatpush1.msra.mxu0 0.0
    %1766 = vmatprep.subr.mxu0 0.0
    %1767 = vmatpush1.msra.mxu0 0.0
    %1768 = vmatprep.subr.mxu0 0.0
    %1769 = vmatpush1.msra.mxu0 0.0
    %1770 = vmatprep.subr.mxu0 0.0
    %1771 = vmatpush1.msra.mxu0 0.0
    %1772 = vmatprep.subr.mxu0 0.0
    %1773 = vmatpush1.msra.mxu0 0.0
    %1774 = vmatprep.subr.mxu0 0.0
    %1775 = vmatpush1.msra.mxu0 0.0
    %1776 = vmatprep.subr.mxu0 0.0
    %1777 = vmatpush1.msra.mxu0 0.0
    %1778 = vmatprep.subr.mxu0 0.0
    %1779 = vmatpush1.msra.mxu0 0.0
    %1780 = vmatprep.subr.mxu0 0.0
    %1781 = vmatpush1.msra.mxu0 0.0
    %1782 = vmatprep.subr.mxu0 0.0
    %1783 = vmatpush1.msra.mxu0 %v1015
    %1784 = vmatprep.subr.mxu0 0.0
    %1785 = vmatpush1.msra.mxu0 %v1014
    %1786 = vmatprep.subr.mxu0 0.0
    %1787 = vmatpush1.msra.mxu0 %v1013
    %1788 = vmatprep.subr.mxu0 0.0
    %1789 = vmatpush1.msra.mxu0 %v1012
    %1790 = vmatprep.subr.mxu0 0.0
    %1791 = vmatpush2.msra.mxu0 0.0
    %1792 = vmatprep.subr.mxu0 0.0
    %1793 = vmatpush2.msra.mxu0 0.0
    %1794 = vmatprep.subr.mxu0 0.0
    %1795 = vmatpush2.msra.mxu0 0.0
    %1796 = vmatprep.subr.mxu0 0.0
    %1797 = vmatpush2.msra.mxu0 0.0
    %1798 = vmatprep.subr.mxu0 0.0
    %1799 = vmatpush2.msra.mxu0 0.0
    %1800 = vmatprep.subr.mxu0 0.0
    %1801 = vmatpush2.msra.mxu0 0.0
    %1802 = vmatprep.subr.mxu0 0.0
    %1803 = vmatpush2.msra.mxu0 0.0
    %1804 = vmatprep.subr.mxu0 0.0
    %1805 = vmatpush2.msra.mxu0 0.0
    %1806 = vmatprep.subr.mxu0 0.0
    %1807 = vmatpush2.msra.mxu0 0.0
    %1808 = vmatprep.subr.mxu0 0.0
    %1809 = vmatpush2.msra.mxu0 0.0
    %1810 = vmatprep.subr.mxu0 0.0
    %1811 = vmatpush2.msra.mxu0 0.0
    %1812 = vmatprep.subr.mxu0 0.0
    %1813 = vmatpush2.msra.mxu0 0.0
    %1814 = vmatprep.subr.mxu0 0.0
    %1815 = vmatpush2.msra.mxu0 0.0
    %1816 = vmatprep.subr.mxu0 0.0
    %1817 = vmatpush2.msra.mxu0 0.0
    %1818 = vmatprep.subr.mxu0 0.0
    %1819 = vmatpush2.msra.mxu0 0.0
    %1820 = vmatprep.subr.mxu0 0.0
    %1821 = vmatpush2.msra.mxu0 0.0
    %1822 = vmatprep.mubr.f32.mxu0 0.0
    %1823 = vmatmul.mubr.f32.gmra.mxu0 %v1756
    %v1824 = vpop.f32.mrf.mxu0
    %v1825 = vadd.f32 0.0, %v1824
    %v1826 = vpop.f32.mrf.mxu0
    %1827 = vdwg.mxu0
    %v1829 = vrot.slane %v1825, 4
    %v1831 = vadd.f32 %v1104, %v1829
    %v1832 = vxor.u32 %v1831, 2147483648
    %v1833 = vmul.f32 %v1832, 1.442695
    %v1834 = vpow.pop %v1833
    %v1835 = vadd.f32 %v1834, 1.0
    %v1836 = vrcp.pop %v1835
    %v1837 = vmul.f32 1.0, %v1836
    %v1838 = vtanh.pop %v1831
    %v1840 = vrot.slane %v1741, 6
    %v1842 = vmul.f32 %v1837, %v1840
    %1844 = vrot.lane.b32.xlu0 %v1838, 32
    %v1845 = vpop.permute.xlu0 %1844
    %v1847 = vmul.f32 %v1837, %v1845
    %1849 = vrot.lane.b32.xlu0 %v1847, 32
    %v1850 = vpop.permute.xlu0 %1849
    %v1852 = vadd.f32 %v1842, %v1850
    %v1853 = vtanh.pop %v1852
    %1855 = vrot.lane.b32.xlu0 %v1853, 32
    %v1856 = vpop.permute.xlu0 %1855
    %v1858 = vmul.f32 %v1837, %v1856
    %1860 = vrot.lane.b32.xlu0 %v1858, 64
    %v1861 = vpop.permute.xlu0 %1860
    %1863 = vst.msk [vmem:[#allocation2 + $0x8] sm:$0x30] %vm454, %v1861
    %v1864 = vrot.slane %v1858, 4
    %1865 = vrot.lane.b32.xlu0 %v1864, 64
    %v1866 = vpop.permute.xlu0 %1865
    %v1867 = vsel %vm130, %v1866, 0
    %1869 = vmatprep.subr.mxu0 0.0
    %1870 = vmatpush1.msra.mxu0 0.0
    %1871 = vmatprep.subr.mxu0 0.0
    %1872 = vmatpush1.msra.mxu0 0.0
    %1873 = vmatprep.subr.mxu0 0.0
    %1874 = vmatpush1.msra.mxu0 0.0
    %1875 = vmatprep.subr.mxu0 0.0
    %1876 = vmatpush1.msra.mxu0 0.0
    %1877 = vmatprep.subr.mxu0 0.0
    %1878 = vmatpush1.msra.mxu0 0.0
    %1879 = vmatprep.subr.mxu0 0.0
    %1880 = vmatpush1.msra.mxu0 0.0
    %1881 = vmatprep.subr.mxu0 0.0
    %1882 = vmatpush1.msra.mxu0 0.0
    %1883 = vmatprep.subr.mxu0 0.0
    %1884 = vmatpush1.msra.mxu0 0.0
    %1885 = vmatprep.subr.mxu0 0.0
    %1886 = vmatpush1.msra.mxu0 0.0
    %1887 = vmatprep.subr.mxu0 0.0
    %1888 = vmatpush1.msra.mxu0 0.0
    %1889 = vmatprep.subr.mxu0 0.0
    %1890 = vmatpush1.msra.mxu0 0.0
    %1891 = vmatprep.subr.mxu0 0.0
    %1892 = vmatpush1.msra.mxu0 0.0
    %1893 = vmatprep.subr.mxu0 0.0
    %1894 = vmatpush1.msra.mxu0 %v1015
    %1895 = vmatprep.subr.mxu0 0.0
    %1896 = vmatpush1.msra.mxu0 %v1014
    %1897 = vmatprep.subr.mxu0 0.0
    %1898 = vmatpush1.msra.mxu0 %v1013
    %1899 = vmatprep.subr.mxu0 0.0
    %1900 = vmatpush1.msra.mxu0 %v1012
    %1901 = vmatprep.subr.mxu0 0.0
    %1902 = vmatpush2.msra.mxu0 0.0
    %1903 = vmatprep.subr.mxu0 0.0
    %1904 = vmatpush2.msra.mxu0 0.0
    %1905 = vmatprep.subr.mxu0 0.0
    %1906 = vmatpush2.msra.mxu0 0.0
    %1907 = vmatprep.subr.mxu0 0.0
    %1908 = vmatpush2.msra.mxu0 0.0
    %1909 = vmatprep.subr.mxu0 0.0
    %1910 = vmatpush2.msra.mxu0 0.0
    %1911 = vmatprep.subr.mxu0 0.0
    %1912 = vmatpush2.msra.mxu0 0.0
    %1913 = vmatprep.subr.mxu0 0.0
    %1914 = vmatpush2.msra.mxu0 0.0
    %1915 = vmatprep.subr.mxu0 0.0
    %1916 = vmatpush2.msra.mxu0 0.0
    %1917 = vmatprep.subr.mxu0 0.0
    %1918 = vmatpush2.msra.mxu0 0.0
    %1919 = vmatprep.subr.mxu0 0.0
    %1920 = vmatpush2.msra.mxu0 0.0
    %1921 = vmatprep.subr.mxu0 0.0
    %1922 = vmatpush2.msra.mxu0 0.0
    %1923 = vmatprep.subr.mxu0 0.0
    %1924 = vmatpush2.msra.mxu0 0.0
    %1925 = vmatprep.subr.mxu0 0.0
    %1926 = vmatpush2.msra.mxu0 0.0
    %1927 = vmatprep.subr.mxu0 0.0
    %1928 = vmatpush2.msra.mxu0 0.0
    %1929 = vmatprep.subr.mxu0 0.0
    %1930 = vmatpush2.msra.mxu0 0.0
    %1931 = vmatprep.subr.mxu0 0.0
    %1932 = vmatpush2.msra.mxu0 0.0
    %1933 = vmatprep.mubr.f32.mxu0 0.0
    %1934 = vmatmul.mubr.f32.gmra.mxu0 %v1867
    %v1935 = vpop.f32.mrf.mxu0
    %v1936 = vadd.f32 0.0, %v1935
    %v1937 = vpop.f32.mrf.mxu0
    %1938 = vdwg.mxu0
    %v1940 = vrot.slane %v1936, 2
    %v1942 = vadd.f32 %v1104, %v1940
    %v1943 = vxor.u32 %v1942, 2147483648
    %v1944 = vmul.f32 %v1943, 1.442695
    %v1945 = vpow.pop %v1944
    %v1946 = vadd.f32 %v1945, 1.0
    %v1947 = vrcp.pop %v1946
    %v1948 = vmul.f32 1.0, %v1947
    %v1949 = vtanh.pop %v1942
    %v1951 = vrot.slane %v1852, 6
    %v1953 = vmul.f32 %v1948, %v1951
    %1955 = vrot.lane.b32.xlu0 %v1949, 32
    %v1956 = vpop.permute.xlu0 %1955
    %v1958 = vmul.f32 %v1948, %v1956
    %1960 = vrot.lane.b32.xlu0 %v1958, 32
    %v1961 = vpop.permute.xlu0 %1960
    %v1963 = vadd.f32 %v1953, %v1961
    %v1964 = vtanh.pop %v1963
    %1966 = vrot.lane.b32.xlu0 %v1964, 32
    %v1967 = vpop.permute.xlu0 %1966
    %v1969 = vmul.f32 %v1948, %v1967
    %1971 = vrot.lane.b32.xlu0 %v1969, 64
    %v1972 = vpop.permute.xlu0 %1971
    %1974 = vst.msk [vmem:[#allocation2 + $0x8] sm:$0xc0] %vm566, %v1972
    %s1975 = scalar_lea.vmem [#allocation3], 128
    %v1976 = vld [vmem:[%s1975] sm:$0xff]
    %v1977 = vld [vmem:[%s1975 + $0x8] sm:$0xff]
    %v1978 = vld [vmem:[%s1975 + $0x10] sm:$0xff]
    %v1979 = vld [vmem:[%s1975 + $0x18] sm:$0xff]
    %s1980 = scalar_lea.vmem [#allocation3], 160
    %v1981 = vld [vmem:[%s1980] sm:$0xff]
    %v1982 = vld [vmem:[%s1980 + $0x8] sm:$0xff]
    %s1983 = scalar_lea.vmem %s2, 2
    %v1984 = vld [vmem:[%s1983] sm:$0x1]
    %v1985 = vld [vmem:[#allocation2] sm:$0xff]
    %v1986 = vld [vmem:[#allocation2 + $0x8] sm:$0xff]
    %v1988 = vlaneseq
    %v1989 = vshrl.u32 %v1988, 7
    %v1990 = vsub.s32 0, %v1989
    %v1991 = vrot.slane %v1984, %v1990
    %v1994 = vsel %vm130, %v1985, 0
    %v1997 = vsel %vm130, %v1986, 0
    %1999 = vmatprep.subr.mxu0 0.0
    %2000 = vmatpush1.msra.mxu0 0.0
    %2001 = vmatprep.subr.mxu0 0.0
    %2002 = vmatpush1.msra.mxu0 0.0
    %2003 = vmatprep.subr.mxu0 0.0
    %2004 = vmatpush1.msra.mxu0 0.0
    %2005 = vmatprep.subr.mxu0 0.0
    %2006 = vmatpush1.msra.mxu0 0.0
    %2007 = vmatprep.subr.mxu0 0.0
    %2008 = vmatpush1.msra.mxu0 0.0
    %2009 = vmatprep.subr.mxu0 0.0
    %2010 = vmatpush1.msra.mxu0 0.0
    %2011 = vmatprep.subr.mxu0 0.0
    %2012 = vmatpush1.msra.mxu0 0.0
    %2013 = vmatprep.subr.mxu0 0.0
    %2014 = vmatpush1.msra.mxu0 0.0
    %2015 = vmatprep.subr.mxu0 0.0
    %2016 = vmatpush1.msra.mxu0 0.0
    %2017 = vmatprep.subr.mxu0 0.0
    %2018 = vmatpush1.msra.mxu0 0.0
    %2019 = vmatprep.subr.mxu0 0.0
    %2020 = vmatpush1.msra.mxu0 0.0
    %2021 = vmatprep.subr.mxu0 0.0
    %2022 = vmatpush1.msra.mxu0 0.0
    %2023 = vmatprep.subr.mxu0 0.0
    %2024 = vmatpush1.msra.mxu0 %v1979
    %2025 = vmatprep.subr.mxu0 0.0
    %2026 = vmatpush1.msra.mxu0 %v1978
    %2027 = vmatprep.subr.mxu0 0.0
    %2028 = vmatpush1.msra.mxu0 %v1977
    %2029 = vmatprep.subr.mxu0 0.0
    %2030 = vmatpush1.msra.mxu0 %v1976
    %2031 = vmatprep.subr.mxu0 0.0
    %2032 = vmatpush2.msra.mxu0 0.0
    %2033 = vmatprep.subr.mxu0 0.0
    %2034 = vmatpush2.msra.mxu0 0.0
    %2035 = vmatprep.subr.mxu0 0.0
    %2036 = vmatpush2.msra.mxu0 0.0
    %2037 = vmatprep.subr.mxu0 0.0
    %2038 = vmatpush2.msra.mxu0 0.0
    %2039 = vmatprep.subr.mxu0 0.0
    %2040 = vmatpush2.msra.mxu0 0.0
    %2041 = vmatprep.subr.mxu0 0.0
    %2042 = vmatpush2.msra.mxu0 0.0
    %2043 = vmatprep.subr.mxu0 0.0
    %2044 = vmatpush2.msra.mxu0 0.0
    %2045 = vmatprep.subr.mxu0 0.0
    %2046 = vmatpush2.msra.mxu0 0.0
    %2047 = vmatprep.subr.mxu0 0.0
    %2048 = vmatpush2.msra.mxu0 0.0
    %2049 = vmatprep.subr.mxu0 0.0
    %2050 = vmatpush2.msra.mxu0 0.0
    %2051 = vmatprep.subr.mxu0 0.0
    %2052 = vmatpush2.msra.mxu0 0.0
    %2053 = vmatprep.subr.mxu0 0.0
    %2054 = vmatpush2.msra.mxu0 0.0
    %2055 = vmatprep.subr.mxu0 0.0
    %2056 = vmatpush2.msra.mxu0 0.0
    %2057 = vmatprep.subr.mxu0 0.0
    %2058 = vmatpush2.msra.mxu0 0.0
    %2059 = vmatprep.subr.mxu0 0.0
    %2060 = vmatpush2.msra.mxu0 0.0
    %2061 = vmatprep.subr.mxu0 0.0
    %2062 = vmatpush2.msra.mxu0 0.0
    %2063 = vmatprep.mubr.f32.mxu0 0.0
    %2064 = vmatmul.mubr.f32.gmra.mxu0 %v1994
    %v2065 = vpop.f32.mrf.mxu0
    %v2066 = vadd.f32 %v1991, %v2065
    %v2067 = vpop.f32.mrf.mxu0
    %2068 = vmatprep.mubr.f32.mxu0 0.0
    %2069 = vmatmul.mubr.f32.gmra.mxu0 %v1997
    %v2070 = vpop.f32.mrf.mxu0
    %v2071 = vadd.f32 %v1991, %v2070
    %v2072 = vpop.f32.mrf.mxu0
    %2073 = vdwg.mxu0
    %vm2074 = vcmask 130048
    %v2075 = vsel %vm2074, 0.0, 0
    %2077 = vmatprep.subr.mxu0 0.0
    %2078 = vmatpush1.msra.mxu0 0.0
    %2079 = vmatprep.subr.mxu0 0.0
    %2080 = vmatpush1.msra.mxu0 0.0
    %2081 = vmatprep.subr.mxu0 0.0
    %2082 = vmatpush1.msra.mxu0 0.0
    %2083 = vmatprep.subr.mxu0 0.0
    %2084 = vmatpush1.msra.mxu0 0.0
    %2085 = vmatprep.subr.mxu0 0.0
    %2086 = vmatpush1.msra.mxu0 0.0
    %2087 = vmatprep.subr.mxu0 0.0
    %2088 = vmatpush1.msra.mxu0 0.0
    %2089 = vmatprep.subr.mxu0 0.0
    %2090 = vmatpush1.msra.mxu0 0.0
    %2091 = vmatprep.subr.mxu0 0.0
    %2092 = vmatpush1.msra.mxu0 0.0
    %2093 = vmatprep.subr.mxu0 0.0
    %2094 = vmatpush1.msra.mxu0 0.0
    %2095 = vmatprep.subr.mxu0 0.0
    %2096 = vmatpush1.msra.mxu0 0.0
    %2097 = vmatprep.subr.mxu0 0.0
    %2098 = vmatpush1.msra.mxu0 0.0
    %2099 = vmatprep.subr.mxu0 0.0
    %2100 = vmatpush1.msra.mxu0 0.0
    %2101 = vmatprep.subr.mxu0 0.0
    %2102 = vmatpush1.msra.mxu0 0.0
    %2103 = vmatprep.subr.mxu0 0.0
    %2104 = vmatpush1.msra.mxu0 0.0
    %2105 = vmatprep.subr.mxu0 0.0
    %2106 = vmatpush1.msra.mxu0 %v1982
    %2107 = vmatprep.subr.mxu0 0.0
    %2108 = vmatpush1.msra.mxu0 %v1981
    %2109 = vmatprep.subr.mxu0 0.0
    %2110 = vmatpush2.msra.mxu0 0.0
    %2111 = vmatprep.subr.mxu0 0.0
    %2112 = vmatpush2.msra.mxu0 0.0
    %2113 = vmatprep.subr.mxu0 0.0
    %2114 = vmatpush2.msra.mxu0 0.0
    %2115 = vmatprep.subr.mxu0 0.0
    %2116 = vmatpush2.msra.mxu0 0.0
    %2117 = vmatprep.subr.mxu0 0.0
    %2118 = vmatpush2.msra.mxu0 0.0
    %2119 = vmatprep.subr.mxu0 0.0
    %2120 = vmatpush2.msra.mxu0 0.0
    %2121 = vmatprep.subr.mxu0 0.0
    %2122 = vmatpush2.msra.mxu0 0.0
    %2123 = vmatprep.subr.mxu0 0.0
    %2124 = vmatpush2.msra.mxu0 0.0
    %2125 = vmatprep.subr.mxu0 0.0
    %2126 = vmatpush2.msra.mxu0 0.0
    %2127 = vmatprep.subr.mxu0 0.0
    %2128 = vmatpush2.msra.mxu0 0.0
    %2129 = vmatprep.subr.mxu0 0.0
    %2130 = vmatpush2.msra.mxu0 0.0
    %2131 = vmatprep.subr.mxu0 0.0
    %2132 = vmatpush2.msra.mxu0 0.0
    %2133 = vmatprep.subr.mxu0 0.0
    %2134 = vmatpush2.msra.mxu0 0.0
    %2135 = vmatprep.subr.mxu0 0.0
    %2136 = vmatpush2.msra.mxu0 0.0
    %2137 = vmatprep.subr.mxu0 0.0
    %2138 = vmatpush2.msra.mxu0 0.0
    %2139 = vmatprep.subr.mxu0 0.0
    %2140 = vmatpush2.msra.mxu0 0.0
    %2141 = vmatprep.mubr.f32.mxu0 0.0
    %2142 = vmatmul.mubr.f32.gmra.mxu0 %v2075
    %v2143 = vpop.f32.mrf.mxu0
    %v2144 = vadd.f32 0.0, %v2143
    %v2145 = vpop.f32.mrf.mxu0
    %2146 = vdwg.mxu0
    %v2147 = vadd.f32 %v2066, %v2144
    %v2148 = vxor.u32 %v2147, 2147483648
    %v2149 = vmul.f32 %v2148, 1.442695
    %v2150 = vpow.pop %v2149
    %v2151 = vadd.f32 %v2150, 1.0
    %v2152 = vrcp.pop %v2151
    %v2153 = vmul.f32 1.0, %v2152
    %v2154 = vtanh.pop %v2147
    %v2155 = vmul.f32 %v2153, 0.0
    %2157 = vrot.lane.b32.xlu0 %v2154, 80
    %v2158 = vpop.permute.xlu0 %2157
    %v2160 = vmul.f32 %v2153, %v2158
    %2162 = vrot.lane.b32.xlu0 %v2160, 16
    %v2163 = vpop.permute.xlu0 %2162
    %v2165 = vadd.f32 %v2155, %v2163
    %v2166 = vtanh.pop %v2165
    %2168 = vrot.lane.b32.xlu0 %v2166, 16
    %v2169 = vpop.permute.xlu0 %2168
    %v2171 = vmul.f32 %v2153, %v2169
    %2173 = vrot.lane.b32.xlu0 %v2171, 96
    %v2174 = vpop.permute.xlu0 %2173
    %v2175 = vsel %vm2074, %v2174, 0
    %2177 = vmatprep.subr.mxu0 0.0
    %2178 = vmatpush1.msra.mxu0 0.0
    %2179 = vmatprep.subr.mxu0 0.0
    %2180 = vmatpush1.msra.mxu0 0.0
    %2181 = vmatprep.subr.mxu0 0.0
    %2182 = vmatpush1.msra.mxu0 0.0
    %2183 = vmatprep.subr.mxu0 0.0
    %2184 = vmatpush1.msra.mxu0 0.0
    %2185 = vmatprep.subr.mxu0 0.0
    %2186 = vmatpush1.msra.mxu0 0.0
    %2187 = vmatprep.subr.mxu0 0.0
    %2188 = vmatpush1.msra.mxu0 0.0
    %2189 = vmatprep.subr.mxu0 0.0
    %2190 = vmatpush1.msra.mxu0 0.0
    %2191 = vmatprep.subr.mxu0 0.0
    %2192 = vmatpush1.msra.mxu0 0.0
    %2193 = vmatprep.subr.mxu0 0.0
    %2194 = vmatpush1.msra.mxu0 0.0
    %2195 = vmatprep.subr.mxu0 0.0
    %2196 = vmatpush1.msra.mxu0 0.0
    %2197 = vmatprep.subr.mxu0 0.0
    %2198 = vmatpush1.msra.mxu0 0.0
    %2199 = vmatprep.subr.mxu0 0.0
    %2200 = vmatpush1.msra.mxu0 0.0
    %2201 = vmatprep.subr.mxu0 0.0
    %2202 = vmatpush1.msra.mxu0 0.0
    %2203 = vmatprep.subr.mxu0 0.0
    %2204 = vmatpush1.msra.mxu0 0.0
    %2205 = vmatprep.subr.mxu0 0.0
    %2206 = vmatpush1.msra.mxu0 %v1982
    %2207 = vmatprep.subr.mxu0 0.0
    %2208 = vmatpush1.msra.mxu0 %v1981
    %2209 = vmatprep.subr.mxu0 0.0
    %2210 = vmatpush2.msra.mxu0 0.0
    %2211 = vmatprep.subr.mxu0 0.0
    %2212 = vmatpush2.msra.mxu0 0.0
    %2213 = vmatprep.subr.mxu0 0.0
    %2214 = vmatpush2.msra.mxu0 0.0
    %2215 = vmatprep.subr.mxu0 0.0
    %2216 = vmatpush2.msra.mxu0 0.0
    %2217 = vmatprep.subr.mxu0 0.0
    %2218 = vmatpush2.msra.mxu0 0.0
    %2219 = vmatprep.subr.mxu0 0.0
    %2220 = vmatpush2.msra.mxu0 0.0
    %2221 = vmatprep.subr.mxu0 0.0
    %2222 = vmatpush2.msra.mxu0 0.0
    %2223 = vmatprep.subr.mxu0 0.0
    %2224 = vmatpush2.msra.mxu0 0.0
    %2225 = vmatprep.subr.mxu0 0.0
    %2226 = vmatpush2.msra.mxu0 0.0
    %2227 = vmatprep.subr.mxu0 0.0
    %2228 = vmatpush2.msra.mxu0 0.0
    %2229 = vmatprep.subr.mxu0 0.0
    %2230 = vmatpush2.msra.mxu0 0.0
    %2231 = vmatprep.subr.mxu0 0.0
    %2232 = vmatpush2.msra.mxu0 0.0
    %2233 = vmatprep.subr.mxu0 0.0
    %2234 = vmatpush2.msra.mxu0 0.0
    %2235 = vmatprep.subr.mxu0 0.0
    %2236 = vmatpush2.msra.mxu0 0.0
    %2237 = vmatprep.subr.mxu0 0.0
    %2238 = vmatpush2.msra.mxu0 0.0
    %2239 = vmatprep.subr.mxu0 0.0
    %2240 = vmatpush2.msra.mxu0 0.0
    %2241 = vmatprep.mubr.f32.mxu0 0.0
    %2242 = vmatmul.mubr.f32.gmra.mxu0 %v2175
    %v2243 = vpop.f32.mrf.mxu0
    %v2244 = vadd.f32 0.0, %v2243
    %v2245 = vpop.f32.mrf.mxu0
    %2246 = vdwg.mxu0
    %v2248 = vrot.slane %v2244, 6
    %v2250 = vadd.f32 %v2066, %v2248
    %v2251 = vxor.u32 %v2250, 2147483648
    %v2252 = vmul.f32 %v2251, 1.442695
    %v2253 = vpow.pop %v2252
    %v2254 = vadd.f32 %v2253, 1.0
    %v2255 = vrcp.pop %v2254
    %v2256 = vmul.f32 1.0, %v2255
    %v2257 = vtanh.pop %v2250
    %v2259 = vrot.slane %v2165, 6
    %v2261 = vmul.f32 %v2256, %v2259
    %2263 = vrot.lane.b32.xlu0 %v2257, 80
    %v2264 = vpop.permute.xlu0 %2263
    %v2266 = vmul.f32 %v2256, %v2264
    %2268 = vrot.lane.b32.xlu0 %v2266, 16
    %v2269 = vpop.permute.xlu0 %2268
    %v2271 = vadd.f32 %v2261, %v2269
    %v2272 = vtanh.pop %v2271
    %2274 = vrot.lane.b32.xlu0 %v2272, 16
    %v2275 = vpop.permute.xlu0 %2274
    %v2277 = vmul.f32 %v2256, %v2275
    %v2279 = vrot.slane %v2277, 2
    %2280 = vrot.lane.b32.xlu0 %v2279, 96
    %v2281 = vpop.permute.xlu0 %2280
    %v2282 = vsel %vm2074, %v2281, 0
    %2284 = vmatprep.subr.mxu0 0.0
    %2285 = vmatpush1.msra.mxu0 0.0
    %2286 = vmatprep.subr.mxu0 0.0
    %2287 = vmatpush1.msra.mxu0 0.0
    %2288 = vmatprep.subr.mxu0 0.0
    %2289 = vmatpush1.msra.mxu0 0.0
    %2290 = vmatprep.subr.mxu0 0.0
    %2291 = vmatpush1.msra.mxu0 0.0
    %2292 = vmatprep.subr.mxu0 0.0
    %2293 = vmatpush1.msra.mxu0 0.0
    %2294 = vmatprep.subr.mxu0 0.0
    %2295 = vmatpush1.msra.mxu0 0.0
    %2296 = vmatprep.subr.mxu0 0.0
    %2297 = vmatpush1.msra.mxu0 0.0
    %2298 = vmatprep.subr.mxu0 0.0
    %2299 = vmatpush1.msra.mxu0 0.0
    %2300 = vmatprep.subr.mxu0 0.0
    %2301 = vmatpush1.msra.mxu0 0.0
    %2302 = vmatprep.subr.mxu0 0.0
    %2303 = vmatpush1.msra.mxu0 0.0
    %2304 = vmatprep.subr.mxu0 0.0
    %2305 = vmatpush1.msra.mxu0 0.0
    %2306 = vmatprep.subr.mxu0 0.0
    %2307 = vmatpush1.msra.mxu0 0.0
    %2308 = vmatprep.subr.mxu0 0.0
    %2309 = vmatpush1.msra.mxu0 0.0
    %2310 = vmatprep.subr.mxu0 0.0
    %2311 = vmatpush1.msra.mxu0 0.0
    %2312 = vmatprep.subr.mxu0 0.0
    %2313 = vmatpush1.msra.mxu0 %v1982
    %2314 = vmatprep.subr.mxu0 0.0
    %2315 = vmatpush1.msra.mxu0 %v1981
    %2316 = vmatprep.subr.mxu0 0.0
    %2317 = vmatpush2.msra.mxu0 0.0
    %2318 = vmatprep.subr.mxu0 0.0
    %2319 = vmatpush2.msra.mxu0 0.0
    %2320 = vmatprep.subr.mxu0 0.0
    %2321 = vmatpush2.msra.mxu0 0.0
    %2322 = vmatprep.subr.mxu0 0.0
    %2323 = vmatpush2.msra.mxu0 0.0
    %2324 = vmatprep.subr.mxu0 0.0
    %2325 = vmatpush2.msra.mxu0 0.0
    %2326 = vmatprep.subr.mxu0 0.0
    %2327 = vmatpush2.msra.mxu0 0.0
    %2328 = vmatprep.subr.mxu0 0.0
    %2329 = vmatpush2.msra.mxu0 0.0
    %2330 = vmatprep.subr.mxu0 0.0
    %2331 = vmatpush2.msra.mxu0 0.0
    %2332 = vmatprep.subr.mxu0 0.0
    %2333 = vmatpush2.msra.mxu0 0.0
    %2334 = vmatprep.subr.mxu0 0.0
    %2335 = vmatpush2.msra.mxu0 0.0
    %2336 = vmatprep.subr.mxu0 0.0
    %2337 = vmatpush2.msra.mxu0 0.0
    %2338 = vmatprep.subr.mxu0 0.0
    %2339 = vmatpush2.msra.mxu0 0.0
    %2340 = vmatprep.subr.mxu0 0.0
    %2341 = vmatpush2.msra.mxu0 0.0
    %2342 = vmatprep.subr.mxu0 0.0
    %2343 = vmatpush2.msra.mxu0 0.0
    %2344 = vmatprep.subr.mxu0 0.0
    %2345 = vmatpush2.msra.mxu0 0.0
    %2346 = vmatprep.subr.mxu0 0.0
    %2347 = vmatpush2.msra.mxu0 0.0
    %2348 = vmatprep.mubr.f32.mxu0 0.0
    %2349 = vmatmul.mubr.f32.gmra.mxu0 %v2282
    %v2350 = vpop.f32.mrf.mxu0
    %v2351 = vadd.f32 0.0, %v2350
    %v2352 = vpop.f32.mrf.mxu0
    %2353 = vdwg.mxu0
    %v2355 = vrot.slane %v2351, 4
    %v2357 = vadd.f32 %v2066, %v2355
    %v2358 = vxor.u32 %v2357, 2147483648
    %v2359 = vmul.f32 %v2358, 1.442695
    %v2360 = vpow.pop %v2359
    %v2361 = vadd.f32 %v2360, 1.0
    %v2362 = vrcp.pop %v2361
    %v2363 = vmul.f32 1.0, %v2362
    %v2364 = vtanh.pop %v2357
    %v2366 = vrot.slane %v2271, 6
    %v2368 = vmul.f32 %v2363, %v2366
    %2370 = vrot.lane.b32.xlu0 %v2364, 80
    %v2371 = vpop.permute.xlu0 %2370
    %v2373 = vmul.f32 %v2363, %v2371
    %2375 = vrot.lane.b32.xlu0 %v2373, 16
    %v2376 = vpop.permute.xlu0 %2375
    %v2378 = vadd.f32 %v2368, %v2376
    %v2379 = vtanh.pop %v2378
    %2381 = vrot.lane.b32.xlu0 %v2379, 16
    %v2382 = vpop.permute.xlu0 %2381
    %v2384 = vmul.f32 %v2363, %v2382
    %v2386 = vrot.slane %v2384, 4
    %2387 = vrot.lane.b32.xlu0 %v2386, 96
    %v2388 = vpop.permute.xlu0 %2387
    %v2389 = vsel %vm2074, %v2388, 0
    %2391 = vmatprep.subr.mxu0 0.0
    %2392 = vmatpush1.msra.mxu0 0.0
    %2393 = vmatprep.subr.mxu0 0.0
    %2394 = vmatpush1.msra.mxu0 0.0
    %2395 = vmatprep.subr.mxu0 0.0
    %2396 = vmatpush1.msra.mxu0 0.0
    %2397 = vmatprep.subr.mxu0 0.0
    %2398 = vmatpush1.msra.mxu0 0.0
    %2399 = vmatprep.subr.mxu0 0.0
    %2400 = vmatpush1.msra.mxu0 0.0
    %2401 = vmatprep.subr.mxu0 0.0
    %2402 = vmatpush1.msra.mxu0 0.0
    %2403 = vmatprep.subr.mxu0 0.0
    %2404 = vmatpush1.msra.mxu0 0.0
    %2405 = vmatprep.subr.mxu0 0.0
    %2406 = vmatpush1.msra.mxu0 0.0
    %2407 = vmatprep.subr.mxu0 0.0
    %2408 = vmatpush1.msra.mxu0 0.0
    %2409 = vmatprep.subr.mxu0 0.0
    %2410 = vmatpush1.msra.mxu0 0.0
    %2411 = vmatprep.subr.mxu0 0.0
    %2412 = vmatpush1.msra.mxu0 0.0
    %2413 = vmatprep.subr.mxu0 0.0
    %2414 = vmatpush1.msra.mxu0 0.0
    %2415 = vmatprep.subr.mxu0 0.0
    %2416 = vmatpush1.msra.mxu0 0.0
    %2417 = vmatprep.subr.mxu0 0.0
    %2418 = vmatpush1.msra.mxu0 0.0
    %2419 = vmatprep.subr.mxu0 0.0
    %2420 = vmatpush1.msra.mxu0 %v1982
    %2421 = vmatprep.subr.mxu0 0.0
    %2422 = vmatpush1.msra.mxu0 %v1981
    %2423 = vmatprep.subr.mxu0 0.0
    %2424 = vmatpush2.msra.mxu0 0.0
    %2425 = vmatprep.subr.mxu0 0.0
    %2426 = vmatpush2.msra.mxu0 0.0
    %2427 = vmatprep.subr.mxu0 0.0
    %2428 = vmatpush2.msra.mxu0 0.0
    %2429 = vmatprep.subr.mxu0 0.0
    %2430 = vmatpush2.msra.mxu0 0.0
    %2431 = vmatprep.subr.mxu0 0.0
    %2432 = vmatpush2.msra.mxu0 0.0
    %2433 = vmatprep.subr.mxu0 0.0
    %2434 = vmatpush2.msra.mxu0 0.0
    %2435 = vmatprep.subr.mxu0 0.0
    %2436 = vmatpush2.msra.mxu0 0.0
    %2437 = vmatprep.subr.mxu0 0.0
    %2438 = vmatpush2.msra.mxu0 0.0
    %2439 = vmatprep.subr.mxu0 0.0
    %2440 = vmatpush2.msra.mxu0 0.0
    %2441 = vmatprep.subr.mxu0 0.0
    %2442 = vmatpush2.msra.mxu0 0.0
    %2443 = vmatprep.subr.mxu0 0.0
    %2444 = vmatpush2.msra.mxu0 0.0
    %2445 = vmatprep.subr.mxu0 0.0
    %2446 = vmatpush2.msra.mxu0 0.0
    %2447 = vmatprep.subr.mxu0 0.0
    %2448 = vmatpush2.msra.mxu0 0.0
    %2449 = vmatprep.subr.mxu0 0.0
    %2450 = vmatpush2.msra.mxu0 0.0
    %2451 = vmatprep.subr.mxu0 0.0
    %2452 = vmatpush2.msra.mxu0 0.0
    %2453 = vmatprep.subr.mxu0 0.0
    %2454 = vmatpush2.msra.mxu0 0.0
    %2455 = vmatprep.mubr.f32.mxu0 0.0
    %2456 = vmatmul.mubr.f32.gmra.mxu0 %v2389
    %v2457 = vpop.f32.mrf.mxu0
    %v2458 = vadd.f32 0.0, %v2457
    %v2459 = vpop.f32.mrf.mxu0
    %2460 = vdwg.mxu0
    %v2462 = vrot.slane %v2458, 2
    %v2464 = vadd.f32 %v2066, %v2462
    %v2465 = vxor.u32 %v2464, 2147483648
    %v2466 = vmul.f32 %v2465, 1.442695
    %v2467 = vpow.pop %v2466
    %v2468 = vadd.f32 %v2467, 1.0
    %v2469 = vrcp.pop %v2468
    %v2470 = vmul.f32 1.0, %v2469
    %v2471 = vtanh.pop %v2464
    %v2473 = vrot.slane %v2378, 6
    %v2475 = vmul.f32 %v2470, %v2473
    %2477 = vrot.lane.b32.xlu0 %v2471, 80
    %v2478 = vpop.permute.xlu0 %2477
    %v2480 = vmul.f32 %v2470, %v2478
    %2482 = vrot.lane.b32.xlu0 %v2480, 16
    %v2483 = vpop.permute.xlu0 %2482
    %v2485 = vadd.f32 %v2475, %v2483
    %v2486 = vtanh.pop %v2485
    %2488 = vrot.lane.b32.xlu0 %v2486, 16
    %v2489 = vpop.permute.xlu0 %2488
    %v2491 = vmul.f32 %v2470, %v2489
    %v2493 = vrot.slane %v2491, 6
    %2494 = vrot.lane.b32.xlu0 %v2493, 96
    %v2495 = vpop.permute.xlu0 %2494
    %v2496 = vsel %vm2074, %v2495, 0
    %2498 = vmatprep.subr.mxu0 0.0
    %2499 = vmatpush1.msra.mxu0 0.0
    %2500 = vmatprep.subr.mxu0 0.0
    %2501 = vmatpush1.msra.mxu0 0.0
    %2502 = vmatprep.subr.mxu0 0.0
    %2503 = vmatpush1.msra.mxu0 0.0
    %2504 = vmatprep.subr.mxu0 0.0
    %2505 = vmatpush1.msra.mxu0 0.0
    %2506 = vmatprep.subr.mxu0 0.0
    %2507 = vmatpush1.msra.mxu0 0.0
    %2508 = vmatprep.subr.mxu0 0.0
    %2509 = vmatpush1.msra.mxu0 0.0
    %2510 = vmatprep.subr.mxu0 0.0
    %2511 = vmatpush1.msra.mxu0 0.0
    %2512 = vmatprep.subr.mxu0 0.0
    %2513 = vmatpush1.msra.mxu0 0.0
    %2514 = vmatprep.subr.mxu0 0.0
    %2515 = vmatpush1.msra.mxu0 0.0
    %2516 = vmatprep.subr.mxu0 0.0
    %2517 = vmatpush1.msra.mxu0 0.0
    %2518 = vmatprep.subr.mxu0 0.0
    %2519 = vmatpush1.msra.mxu0 0.0
    %2520 = vmatprep.subr.mxu0 0.0
    %2521 = vmatpush1.msra.mxu0 0.0
    %2522 = vmatprep.subr.mxu0 0.0
    %2523 = vmatpush1.msra.mxu0 0.0
    %2524 = vmatprep.subr.mxu0 0.0
    %2525 = vmatpush1.msra.mxu0 0.0
    %2526 = vmatprep.subr.mxu0 0.0
    %2527 = vmatpush1.msra.mxu0 %v1982
    %2528 = vmatprep.subr.mxu0 0.0
    %2529 = vmatpush1.msra.mxu0 %v1981
    %2530 = vmatprep.subr.mxu0 0.0
    %2531 = vmatpush2.msra.mxu0 0.0
    %2532 = vmatprep.subr.mxu0 0.0
    %2533 = vmatpush2.msra.mxu0 0.0
    %2534 = vmatprep.subr.mxu0 0.0
    %2535 = vmatpush2.msra.mxu0 0.0
    %2536 = vmatprep.subr.mxu0 0.0
    %2537 = vmatpush2.msra.mxu0 0.0
    %2538 = vmatprep.subr.mxu0 0.0
    %2539 = vmatpush2.msra.mxu0 0.0
    %2540 = vmatprep.subr.mxu0 0.0
    %2541 = vmatpush2.msra.mxu0 0.0
    %2542 = vmatprep.subr.mxu0 0.0
    %2543 = vmatpush2.msra.mxu0 0.0
    %2544 = vmatprep.subr.mxu0 0.0
    %2545 = vmatpush2.msra.mxu0 0.0
    %2546 = vmatprep.subr.mxu0 0.0
    %2547 = vmatpush2.msra.mxu0 0.0
    %2548 = vmatprep.subr.mxu0 0.0
    %2549 = vmatpush2.msra.mxu0 0.0
    %2550 = vmatprep.subr.mxu0 0.0
    %2551 = vmatpush2.msra.mxu0 0.0
    %2552 = vmatprep.subr.mxu0 0.0
    %2553 = vmatpush2.msra.mxu0 0.0
    %2554 = vmatprep.subr.mxu0 0.0
    %2555 = vmatpush2.msra.mxu0 0.0
    %2556 = vmatprep.subr.mxu0 0.0
    %2557 = vmatpush2.msra.mxu0 0.0
    %2558 = vmatprep.subr.mxu0 0.0
    %2559 = vmatpush2.msra.mxu0 0.0
    %2560 = vmatprep.subr.mxu0 0.0
    %2561 = vmatpush2.msra.mxu0 0.0
    %2562 = vmatprep.mubr.f32.mxu0 0.0
    %2563 = vmatmul.mubr.f32.gmra.mxu0 %v2496
    %v2564 = vpop.f32.mrf.mxu0
    %v2565 = vadd.f32 0.0, %v2564
    %v2566 = vpop.f32.mrf.mxu0
    %2567 = vdwg.mxu0
    %v2568 = vadd.f32 %v2071, %v2565
    %v2569 = vxor.u32 %v2568, 2147483648
    %v2570 = vmul.f32 %v2569, 1.442695
    %v2571 = vpow.pop %v2570
    %v2572 = vadd.f32 %v2571, 1.0
    %v2573 = vrcp.pop %v2572
    %v2574 = vmul.f32 1.0, %v2573
    %v2575 = vtanh.pop %v2568
    %v2577 = vrot.slane %v2485, 6
    %v2579 = vmul.f32 %v2574, %v2577
    %2581 = vrot.lane.b32.xlu0 %v2575, 80
    %v2582 = vpop.permute.xlu0 %2581
    %v2584 = vmul.f32 %v2574, %v2582
    %2586 = vrot.lane.b32.xlu0 %v2584, 16
    %v2587 = vpop.permute.xlu0 %2586
    %v2589 = vadd.f32 %v2579, %v2587
    %v2590 = vtanh.pop %v2589
    %2592 = vrot.lane.b32.xlu0 %v2590, 16
    %v2593 = vpop.permute.xlu0 %2592
    %v2595 = vmul.f32 %v2574, %v2593
    %2597 = vrot.lane.b32.xlu0 %v2595, 96
    %v2598 = vpop.permute.xlu0 %2597
    %v2599 = vsel %vm2074, %v2598, 0
    %2601 = vmatprep.subr.mxu0 0.0
    %2602 = vmatpush1.msra.mxu0 0.0
    %2603 = vmatprep.subr.mxu0 0.0
    %2604 = vmatpush1.msra.mxu0 0.0
    %2605 = vmatprep.subr.mxu0 0.0
    %2606 = vmatpush1.msra.mxu0 0.0
    %2607 = vmatprep.subr.mxu0 0.0
    %2608 = vmatpush1.msra.mxu0 0.0
    %2609 = vmatprep.subr.mxu0 0.0
    %2610 = vmatpush1.msra.mxu0 0.0
    %2611 = vmatprep.subr.mxu0 0.0
    %2612 = vmatpush1.msra.mxu0 0.0
    %2613 = vmatprep.subr.mxu0 0.0
    %2614 = vmatpush1.msra.mxu0 0.0
    %2615 = vmatprep.subr.mxu0 0.0
    %2616 = vmatpush1.msra.mxu0 0.0
    %2617 = vmatprep.subr.mxu0 0.0
    %2618 = vmatpush1.msra.mxu0 0.0
    %2619 = vmatprep.subr.mxu0 0.0
    %2620 = vmatpush1.msra.mxu0 0.0
    %2621 = vmatprep.subr.mxu0 0.0
    %2622 = vmatpush1.msra.mxu0 0.0
    %2623 = vmatprep.subr.mxu0 0.0
    %2624 = vmatpush1.msra.mxu0 0.0
    %2625 = vmatprep.subr.mxu0 0.0
    %2626 = vmatpush1.msra.mxu0 0.0
    %2627 = vmatprep.subr.mxu0 0.0
    %2628 = vmatpush1.msra.mxu0 0.0
    %2629 = vmatprep.subr.mxu0 0.0
    %2630 = vmatpush1.msra.mxu0 %v1982
    %2631 = vmatprep.subr.mxu0 0.0
    %2632 = vmatpush1.msra.mxu0 %v1981
    %2633 = vmatprep.subr.mxu0 0.0
    %2634 = vmatpush2.msra.mxu0 0.0
    %2635 = vmatprep.subr.mxu0 0.0
    %2636 = vmatpush2.msra.mxu0 0.0
    %2637 = vmatprep.subr.mxu0 0.0
    %2638 = vmatpush2.msra.mxu0 0.0
    %2639 = vmatprep.subr.mxu0 0.0
    %2640 = vmatpush2.msra.mxu0 0.0
    %2641 = vmatprep.subr.mxu0 0.0
    %2642 = vmatpush2.msra.mxu0 0.0
    %2643 = vmatprep.subr.mxu0 0.0
    %2644 = vmatpush2.msra.mxu0 0.0
    %2645 = vmatprep.subr.mxu0 0.0
    %2646 = vmatpush2.msra.mxu0 0.0
    %2647 = vmatprep.subr.mxu0 0.0
    %2648 = vmatpush2.msra.mxu0 0.0
    %2649 = vmatprep.subr.mxu0 0.0
    %2650 = vmatpush2.msra.mxu0 0.0
    %2651 = vmatprep.subr.mxu0 0.0
    %2652 = vmatpush2.msra.mxu0 0.0
    %2653 = vmatprep.subr.mxu0 0.0
    %2654 = vmatpush2.msra.mxu0 0.0
    %2655 = vmatprep.subr.mxu0 0.0
    %2656 = vmatpush2.msra.mxu0 0.0
    %2657 = vmatprep.subr.mxu0 0.0
    %2658 = vmatpush2.msra.mxu0 0.0
    %2659 = vmatprep.subr.mxu0 0.0
    %2660 = vmatpush2.msra.mxu0 0.0
    %2661 = vmatprep.subr.mxu0 0.0
    %2662 = vmatpush2.msra.mxu0 0.0
    %2663 = vmatprep.subr.mxu0 0.0
    %2664 = vmatpush2.msra.mxu0 0.0
    %2665 = vmatprep.mubr.f32.mxu0 0.0
    %2666 = vmatmul.mubr.f32.gmra.mxu0 %v2599
    %v2667 = vpop.f32.mrf.mxu0
    %v2668 = vadd.f32 0.0, %v2667
    %v2669 = vpop.f32.mrf.mxu0
    %2670 = vdwg.mxu0
    %v2672 = vrot.slane %v2668, 6
    %v2674 = vadd.f32 %v2071, %v2672
    %v2675 = vxor.u32 %v2674, 2147483648
    %v2676 = vmul.f32 %v2675, 1.442695
    %v2677 = vpow.pop %v2676
    %v2678 = vadd.f32 %v2677, 1.0
    %v2679 = vrcp.pop %v2678
    %v2680 = vmul.f32 1.0, %v2679
    %v2681 = vtanh.pop %v2674
    %v2683 = vrot.slane %v2589, 6
    %v2685 = vmul.f32 %v2680, %v2683
    %2687 = vrot.lane.b32.xlu0 %v2681, 80
    %v2688 = vpop.permute.xlu0 %2687
    %v2690 = vmul.f32 %v2680, %v2688
    %2692 = vrot.lane.b32.xlu0 %v2690, 16
    %v2693 = vpop.permute.xlu0 %2692
    %v2695 = vadd.f32 %v2685, %v2693
    %v2696 = vtanh.pop %v2695
    %2698 = vrot.lane.b32.xlu0 %v2696, 16
    %v2699 = vpop.permute.xlu0 %2698
    %v2701 = vmul.f32 %v2680, %v2699
    %v2703 = vrot.slane %v2701, 2
    %2704 = vrot.lane.b32.xlu0 %v2703, 96
    %v2705 = vpop.permute.xlu0 %2704
    %v2706 = vsel %vm2074, %v2705, 0
    %2708 = vmatprep.subr.mxu0 0.0
    %2709 = vmatpush1.msra.mxu0 0.0
    %2710 = vmatprep.subr.mxu0 0.0
    %2711 = vmatpush1.msra.mxu0 0.0
    %2712 = vmatprep.subr.mxu0 0.0
    %2713 = vmatpush1.msra.mxu0 0.0
    %2714 = vmatprep.subr.mxu0 0.0
    %2715 = vmatpush1.msra.mxu0 0.0
    %2716 = vmatprep.subr.mxu0 0.0
    %2717 = vmatpush1.msra.mxu0 0.0
    %2718 = vmatprep.subr.mxu0 0.0
    %2719 = vmatpush1.msra.mxu0 0.0
    %2720 = vmatprep.subr.mxu0 0.0
    %2721 = vmatpush1.msra.mxu0 0.0
    %2722 = vmatprep.subr.mxu0 0.0
    %2723 = vmatpush1.msra.mxu0 0.0
    %2724 = vmatprep.subr.mxu0 0.0
    %2725 = vmatpush1.msra.mxu0 0.0
    %2726 = vmatprep.subr.mxu0 0.0
    %2727 = vmatpush1.msra.mxu0 0.0
    %2728 = vmatprep.subr.mxu0 0.0
    %2729 = vmatpush1.msra.mxu0 0.0
    %2730 = vmatprep.subr.mxu0 0.0
    %2731 = vmatpush1.msra.mxu0 0.0
    %2732 = vmatprep.subr.mxu0 0.0
    %2733 = vmatpush1.msra.mxu0 0.0
    %2734 = vmatprep.subr.mxu0 0.0
    %2735 = vmatpush1.msra.mxu0 0.0
    %2736 = vmatprep.subr.mxu0 0.0
    %2737 = vmatpush1.msra.mxu0 %v1982
    %2738 = vmatprep.subr.mxu0 0.0
    %2739 = vmatpush1.msra.mxu0 %v1981
    %2740 = vmatprep.subr.mxu0 0.0
    %2741 = vmatpush2.msra.mxu0 0.0
    %2742 = vmatprep.subr.mxu0 0.0
    %2743 = vmatpush2.msra.mxu0 0.0
    %2744 = vmatprep.subr.mxu0 0.0
    %2745 = vmatpush2.msra.mxu0 0.0
    %2746 = vmatprep.subr.mxu0 0.0
    %2747 = vmatpush2.msra.mxu0 0.0
    %2748 = vmatprep.subr.mxu0 0.0
    %2749 = vmatpush2.msra.mxu0 0.0
    %2750 = vmatprep.subr.mxu0 0.0
    %2751 = vmatpush2.msra.mxu0 0.0
    %2752 = vmatprep.subr.mxu0 0.0
    %2753 = vmatpush2.msra.mxu0 0.0
    %2754 = vmatprep.subr.mxu0 0.0
    %2755 = vmatpush2.msra.mxu0 0.0
    %2756 = vmatprep.subr.mxu0 0.0
    %2757 = vmatpush2.msra.mxu0 0.0
    %2758 = vmatprep.subr.mxu0 0.0
    %2759 = vmatpush2.msra.mxu0 0.0
    %2760 = vmatprep.subr.mxu0 0.0
    %2761 = vmatpush2.msra.mxu0 0.0
    %2762 = vmatprep.subr.mxu0 0.0
    %2763 = vmatpush2.msra.mxu0 0.0
    %2764 = vmatprep.subr.mxu0 0.0
    %2765 = vmatpush2.msra.mxu0 0.0
    %2766 = vmatprep.subr.mxu0 0.0
    %2767 = vmatpush2.msra.mxu0 0.0
    %2768 = vmatprep.subr.mxu0 0.0
    %2769 = vmatpush2.msra.mxu0 0.0
    %2770 = vmatprep.subr.mxu0 0.0
    %2771 = vmatpush2.msra.mxu0 0.0
    %2772 = vmatprep.mubr.f32.mxu0 0.0
    %2773 = vmatmul.mubr.f32.gmra.mxu0 %v2706
    %v2774 = vpop.f32.mrf.mxu0
    %v2775 = vadd.f32 0.0, %v2774
    %v2776 = vpop.f32.mrf.mxu0
    %2777 = vdwg.mxu0
    %v2779 = vrot.slane %v2775, 4
    %v2781 = vadd.f32 %v2071, %v2779
    %v2782 = vxor.u32 %v2781, 2147483648
    %v2783 = vmul.f32 %v2782, 1.442695
    %v2784 = vpow.pop %v2783
    %v2785 = vadd.f32 %v2784, 1.0
    %v2786 = vrcp.pop %v2785
    %v2787 = vmul.f32 1.0, %v2786
    %v2788 = vtanh.pop %v2781
    %v2790 = vrot.slane %v2695, 6
    %v2792 = vmul.f32 %v2787, %v2790
    %2794 = vrot.lane.b32.xlu0 %v2788, 80
    %v2795 = vpop.permute.xlu0 %2794
    %v2797 = vmul.f32 %v2787, %v2795
    %2799 = vrot.lane.b32.xlu0 %v2797, 16
    %v2800 = vpop.permute.xlu0 %2799
    %v2802 = vadd.f32 %v2792, %v2800
    %v2803 = vtanh.pop %v2802
    %2805 = vrot.lane.b32.xlu0 %v2803, 16
    %v2806 = vpop.permute.xlu0 %2805
    %v2808 = vmul.f32 %v2787, %v2806
    %v2810 = vrot.slane %v2808, 4
    %2811 = vrot.lane.b32.xlu0 %v2810, 96
    %v2812 = vpop.permute.xlu0 %2811
    %v2813 = vsel %vm2074, %v2812, 0
    %2815 = vmatprep.subr.mxu0 0.0
    %2816 = vmatpush1.msra.mxu0 0.0
    %2817 = vmatprep.subr.mxu0 0.0
    %2818 = vmatpush1.msra.mxu0 0.0
    %2819 = vmatprep.subr.mxu0 0.0
    %2820 = vmatpush1.msra.mxu0 0.0
    %2821 = vmatprep.subr.mxu0 0.0
    %2822 = vmatpush1.msra.mxu0 0.0
    %2823 = vmatprep.subr.mxu0 0.0
    %2824 = vmatpush1.msra.mxu0 0.0
    %2825 = vmatprep.subr.mxu0 0.0
    %2826 = vmatpush1.msra.mxu0 0.0
    %2827 = vmatprep.subr.mxu0 0.0
    %2828 = vmatpush1.msra.mxu0 0.0
    %2829 = vmatprep.subr.mxu0 0.0
    %2830 = vmatpush1.msra.mxu0 0.0
    %2831 = vmatprep.subr.mxu0 0.0
    %2832 = vmatpush1.msra.mxu0 0.0
    %2833 = vmatprep.subr.mxu0 0.0
    %2834 = vmatpush1.msra.mxu0 0.0
    %2835 = vmatprep.subr.mxu0 0.0
    %2836 = vmatpush1.msra.mxu0 0.0
    %2837 = vmatprep.subr.mxu0 0.0
    %2838 = vmatpush1.msra.mxu0 0.0
    %2839 = vmatprep.subr.mxu0 0.0
    %2840 = vmatpush1.msra.mxu0 0.0
    %2841 = vmatprep.subr.mxu0 0.0
    %2842 = vmatpush1.msra.mxu0 0.0
    %2843 = vmatprep.subr.mxu0 0.0
    %2844 = vmatpush1.msra.mxu0 %v1982
    %2845 = vmatprep.subr.mxu0 0.0
    %2846 = vmatpush1.msra.mxu0 %v1981
    %2847 = vmatprep.subr.mxu0 0.0
    %2848 = vmatpush2.msra.mxu0 0.0
    %2849 = vmatprep.subr.mxu0 0.0
    %2850 = vmatpush2.msra.mxu0 0.0
    %2851 = vmatprep.subr.mxu0 0.0
    %2852 = vmatpush2.msra.mxu0 0.0
    %2853 = vmatprep.subr.mxu0 0.0
    %2854 = vmatpush2.msra.mxu0 0.0
    %2855 = vmatprep.subr.mxu0 0.0
    %2856 = vmatpush2.msra.mxu0 0.0
    %2857 = vmatprep.subr.mxu0 0.0
    %2858 = vmatpush2.msra.mxu0 0.0
    %2859 = vmatprep.subr.mxu0 0.0
    %2860 = vmatpush2.msra.mxu0 0.0
    %2861 = vmatprep.subr.mxu0 0.0
    %2862 = vmatpush2.msra.mxu0 0.0
    %2863 = vmatprep.subr.mxu0 0.0
    %2864 = vmatpush2.msra.mxu0 0.0
    %2865 = vmatprep.subr.mxu0 0.0
    %2866 = vmatpush2.msra.mxu0 0.0
    %2867 = vmatprep.subr.mxu0 0.0
    %2868 = vmatpush2.msra.mxu0 0.0
    %2869 = vmatprep.subr.mxu0 0.0
    %2870 = vmatpush2.msra.mxu0 0.0
    %2871 = vmatprep.subr.mxu0 0.0
    %2872 = vmatpush2.msra.mxu0 0.0
    %2873 = vmatprep.subr.mxu0 0.0
    %2874 = vmatpush2.msra.mxu0 0.0
    %2875 = vmatprep.subr.mxu0 0.0
    %2876 = vmatpush2.msra.mxu0 0.0
    %2877 = vmatprep.subr.mxu0 0.0
    %2878 = vmatpush2.msra.mxu0 0.0
    %2879 = vmatprep.mubr.f32.mxu0 0.0
    %2880 = vmatmul.mubr.f32.gmra.mxu0 %v2813
    %v2881 = vpop.f32.mrf.mxu0
    %v2882 = vadd.f32 0.0, %v2881
    %v2883 = vpop.f32.mrf.mxu0
    %2884 = vdwg.mxu0
    %v2886 = vrot.slane %v2882, 2
    %v2888 = vadd.f32 %v2071, %v2886
    %v2889 = vxor.u32 %v2888, 2147483648
    %v2890 = vmul.f32 %v2889, 1.442695
    %v2891 = vpow.pop %v2890
    %v2892 = vadd.f32 %v2891, 1.0
    %v2893 = vrcp.pop %v2892
    %v2894 = vmul.f32 1.0, %v2893
    %v2895 = vtanh.pop %v2888
    %v2897 = vrot.slane %v2802, 6
    %v2899 = vmul.f32 %v2894, %v2897
    %2901 = vrot.lane.b32.xlu0 %v2895, 80
    %v2902 = vpop.permute.xlu0 %2901
    %v2904 = vmul.f32 %v2894, %v2902
    %2906 = vrot.lane.b32.xlu0 %v2904, 16
    %v2907 = vpop.permute.xlu0 %2906
    %v2909 = vadd.f32 %v2899, %v2907
    %v2910 = vtanh.pop %v2909
    %2912 = vrot.lane.b32.xlu0 %v2910, 16
    %v2913 = vpop.permute.xlu0 %2912
    %v2915 = vmul.f32 %v2894, %v2913
    %2917 = vrot.lane.b32.xlu0 %v2915, 96
    %v2918 = vpop.permute.xlu0 %2917
    %vm2920 = vcmask 130054
    %2921 = vst.msk [vmem:[#allocation6 - $0x6] sm:$0xc0] %vm2920, %v2918
    // Predicated region
    $region18: #{encoder_lstm_forward.1} parent=1 // pred_check
      _
    $region19: #{encoder_lstm_forward.1} parent=1 // pred_check_branch
      %2923 = sbr.rel (0) target = $region21
    $region20: #{encoder_lstm_forward.1} parent=1 // pred_region
      %s2925 = ssub.s32 32, 32
      %2926 = vsyncadd [#allocation5], %s2925
      %s2928 = sshll.u32 [#allocation6], 4
      %s2929 = int_to_ptr.vmem [resolvable:$true] %s2928
      %2931 = dma.vmem_to_hbm [thread:$0]  %s2929, 32, %s3, [#allocation5]
    $region21: #{encoder_lstm_forward.1} parent=1 // pred_fallthru
      _
    // Predicated region
    $region22: #{encoder_lstm_forward.1} parent=1 // pred_check
      _
    $region23: #{encoder_lstm_forward.1} parent=1 // pred_check_branch
      %2933 = sbr.rel (0) target = $region25
    $region24: #{encoder_lstm_forward.1} parent=1 // pred_region
      %2934 = dma.done [#allocation5], 32
    $region25: #{encoder_lstm_forward.1} parent=1 // pred_fallthru
      _
    %2935 = vsyncpa [#allocation4], 1
    %2936 = vsyncpa [#allocation5], 1

</llo_original>
